<compile_context>
chip_gen: v7x
topology: tpu7x:2x2x1
jax: 0.10.0
libtpu: 0.0.40
codegen_flags: <defaults>
</compile_context>

<pallas_src>
import math
import functools

import numpy as np
import jax
import jax.numpy as jnp
from jax.experimental import pallas as pl
from jax.experimental.pallas import tpu as pltpu

EPS = 1e-5  # nn.LayerNorm default

# Row layout of the packed (11, 1, D) bias / LayerNorm operand.
_B_OUT = (0, 1, 2)   # out-proj biases: cross_attn_1 / self_attn / cross_attn_2
_B_LIN1 = 3          # linear1 bias
_B_LIN3 = 4          # linear3 bias
_LN_G = (5, 7, 9)    # norm1 / norm2 / norm3 weight
_LN_B = (6, 8, 10)   # norm1 / norm2 / norm3 bias


# ------------------------------ fused kernel --------------------------------

def _fused_layer_kernel(src1_ref, src2_ref, pos1_ref, pos2_ref,
                        w_in_ref, b_in_ref, w_out_ref, w2_ref, w3_ref,
                        b2_ref, bias_ref, sel_ref,
                        o_ref, *, H, Dh, scale):
    f32, bf16 = jnp.float32, jnp.bfloat16
    D = src1_ref.shape[-1]

    # Lane index (1, D) -- used to build per-head lane masks (VPU-only head split).
    lane = jax.lax.broadcasted_iota(jnp.int32, (1, D), 1)

    def layernorm(x, i):
        mu = jnp.mean(x, axis=-1, keepdims=True)
        xc = x - mu
        var = jnp.mean(xc * xc, axis=-1, keepdims=True)
        return xc * jax.lax.rsqrt(var + EPS) * bias_ref[_LN_G[i]] + bias_ref[_LN_B[i]]

    def mha(xq, xkv, idx):
        # Full-width projections: 3x (L,D)@(D,D) bf16 matmuls, f32 accumulation.
        xq_b, xkv_b = xq.astype(bf16), xkv.astype(bf16)
        q = (jnp.dot(xq_b, w_in_ref[idx, 0], preferred_element_type=f32)
             + b_in_ref[idx, 0]).astype(bf16)
        k = (jnp.dot(xkv_b, w_in_ref[idx, 1], preferred_element_type=f32)
             + b_in_ref[idx, 1]).astype(bf16)
        v = (jnp.dot(xkv_b, w_in_ref[idx, 2], preferred_element_type=f32)
             + b_in_ref[idx, 2]).astype(bf16)

        # Per-head attention via lane masks: zeroing the non-head lanes of q makes the
        # full-K score matmul equal the head score; zeroing the non-head lanes of v makes
        # the full-N PV matmul land each head's output in its own lanes, so the running
        # sum IS the lane-concatenated multi-head output (single out-proj matmul after).
        o_acc = jnp.zeros((q.shape[0], D), f32)
        for h in range(H):                      # small static H; s/p die every iteration
            lo, hi = h * Dh, (h + 1) * Dh
            head_mask = (lane >= lo) & (lane < hi)          # (1, D) bool, broadcasts
            qh = jnp.where(head_mask, q, 0)
            s = jax.lax.dot_general(qh, k, (((1,), (1,)), ((), ())),
                                    preferred_element_type=f32) * scale
            s = s - jnp.max(s, axis=-1, keepdims=True)
            p = jnp.exp(s)
            p = p * pl.reciprocal(jnp.sum(p, axis=-1, keepdims=True), approx=True)
            vh = jnp.where(head_mask, v, 0)
            o_acc = o_acc + jnp.dot(p.astype(bf16), vh, preferred_element_type=f32)

        # Output projection of the (implicitly concatenated) heads: one (L,D)@(D,D).
        return (jnp.dot(o_acc.astype(bf16), w_out_ref[idx], preferred_element_type=f32)
                + bias_ref[_B_OUT[idx]])

    x1 = src1_ref[0].astype(f32)                    # (L1, D) query of cross_attn_1
    kv2 = (src2_ref[0] + pos2_ref[0]).astype(f32)   # (L2, D) key/value of cross_attn_1
    kv1 = (src1_ref[0] + pos1_ref[0]).astype(f32)   # (L1, D) key/value of cross_attn_2

    # cross_attn_1 -> linear1 -> norm1            (dropout1 identity)
    a1 = mha(x1, kv2, 0)
    out1 = layernorm(jnp.dot(a1.astype(bf16), w_out_ref[3],
                             preferred_element_type=f32) + bias_ref[_B_LIN1], 0)

    # self-attention on out1                      (dropout2 identity)
    out2 = mha(out1, out1, 1)

    # MaxPool1d(3, stride=2, padding=1) over cat([out1, out2], feature axis):
    #   pooled[:, j] = max(cat[:, 2j-1], cat[:, 2j], cat[:, 2j+1]),  cat[:, -1] = -inf.
    # Exact 0/1 selection matmuls (bf16) per window position and source, then max; norm2.
    out1_b, out2_b = out1.astype(bf16), out2.astype(bf16)

    def gathered(t):
        return (jnp.dot(out1_b, sel_ref[t, 0], preferred_element_type=f32)
                + jnp.dot(out2_b, sel_ref[t, 1], preferred_element_type=f32))

    pooled = jnp.maximum(jnp.maximum(gathered(0), gathered(1)), gathered(2))
    out3 = layernorm(pooled, 1)

    # cross_attn_2 against (src1 + pos1)
    out = mha(out3, kv1, 2)

    # FFN (linear2 -> relu -> linear3) + residual + norm3    (dropout3/4 identity)
    hdn = jnp.maximum(jnp.dot(out.astype(bf16), w2_ref[...],
                              preferred_element_type=f32) + b2_ref[...], 0.0)
    ff = (jnp.dot(hdn.astype(bf16), w3_ref[...], preferred_element_type=f32)
          + bias_ref[_B_LIN3])
    o_ref[0] = layernorm(out + ff, 2).astype(o_ref.dtype)


# ------------------------------- module glue --------------------------------

def init_params(key, d_model, nhead, dim_feedforward):
    D, F = d_model, dim_feedforward
    assert D % nhead == 0
    keys = iter(jax.random.split(key, 10))
    bf16 = jnp.bfloat16

    def w(shape, scl=0.05):
        return jax.random.normal(next(keys), shape, jnp.float32) * scl

    # norm1/2/3 weight=1, bias=0 (PyTorch default init), interleaved g,b,g,b,g,b
    ln = jnp.concatenate([jnp.ones((1, 1, D), jnp.float32),
                          jnp.zeros((1, 1, D), jnp.float32)] * 3, axis=0)
    bias_pack = jnp.concatenate([w((3, 1, D)),      # out-proj biases (cross1/self/cross2)
                                 w((1, 1, D)),      # linear1 bias
                                 w((1, 1, D)),      # linear3 bias
                                 ln], axis=0)       # (11, 1, D) f32

    return dict(
        w_in=w((3, 3, D, D)).astype(bf16),   # [attn][q,k,v] in-projection weights
        b_in=w((3, 3, 1, D)),                # in-projection biases (f32)
        w_out=w((4, D, D)).astype(bf16),     # out-proj cross1/self/cross2 + linear1
        w2=w((D, F)).astype(bf16),           # linear2
        b2=w((1, F)),                        # linear2 bias (f32)
        w3=w((F, D)).astype(bf16),           # linear3
        bias=bias_pack,                      # packed (11,1,D) biases + LayerNorm params
    )


def _build_pool_selection(D):
    # MaxPool1d(kernel=3, stride=2, padding=1) over a length-2D feature axis:
    #   out[:, j] = max(cat[:, 2j-1], cat[:, 2j], cat[:, 2j+1]),  cat = [out1 | out2]
    # sel[t, s] is a (D, D) 0/1 matrix selecting window element t from source s.
    sel = np.zeros((3, 2, D, D), np.float32)
    for j in range(D):
        for t, idx in enumerate((2 * j, 2 * j + 1, 2 * j - 1)):
            if idx < 0:
                idx = 2 * j   # -inf pad at index -1: reuse window centre (max unchanged)
            if idx < D:
                sel[t, 0, idx, j] = 1.0
            else:
                sel[t, 1, idx - D, j] = 1.0
    return jnp.asarray(sel, dtype=jnp.bfloat16)


def make_forward(nhead):
    H = nhead

    def _forward_batch_major(params, s1, s2, p1, p2):
        # Batch-major core: (B, L, D) in / out; one grid step per batch element,
        # marked "parallel" so megacore/dual-TC parts can split the batch (B>=2).
        B, L1, D = s1.shape
        L2 = s2.shape[1]
        assert D % H == 0
        Dh = D // H
        scale = 1.0 / math.sqrt(Dh)
        sel = _build_pool_selection(D)

        weights = (params['w_in'], params['b_in'], params['w_out'],
                   params['w2'], params['w3'], params['b2'],
                   params['bias'], sel)

        def act_spec(L):
            return pl.BlockSpec((1, L, D), lambda b: (b, 0, 0))

        def full_spec(a):
            # Whole-array block, constant index map across the grid (weights).
            return pl.BlockSpec(a.shape, lambda b, _nd=a.ndim: (0,) * _nd)

        in_specs = ([act_spec(L1), act_spec(L2), act_spec(L1), act_spec(L2)]
                    + [full_spec(a) for a in weights])

        kern = functools.partial(_fused_layer_kernel, H=H, Dh=Dh, scale=scale)

        return pl.pallas_call(
            kern,
            out_shape=jax.ShapeDtypeStruct((B, L1, D), jnp.float32),
            grid=(B,),
            in_specs=in_specs,
            out_specs=pl.BlockSpec((1, L1, D), lambda b: (b, 0, 0)),
            compiler_params=pltpu.CompilerParams(
                dimension_semantics=("parallel",),
                vmem_limit_bytes=32 * 1024 * 1024),
        )(s1, s2, p1, p2, *weights)

    @jax.jit
    def forward(params, src1, src2, pos1, pos2):
        # PyTorch-parity entry: sequence-first (L, B, D).  In a full model keep the
        # activations batch-major and call the core directly to hoist these transposes.
        out = _forward_batch_major(params,
                                   jnp.transpose(src1, (1, 0, 2)),
                                   jnp.transpose(src2, (1, 0, 2)),
                                   jnp.transpose(pos1, (1, 0, 2)),
                                   jnp.transpose(pos2, (1, 0, 2)))
        return jnp.transpose(out, (1, 0, 2))   # back to (L1, B, D)

    return forward


# ---------------------------------- main ------------------------------------

if __name__ == "__main__":
    d_model, nhead, dim_ff = 32, 4, 64
    L1, L2, B = 8, 12, 2

    key = jax.random.PRNGKey(0)
    pkey, k1, k2, k3, k4 = jax.random.split(key, 5)
    params = init_params(pkey, d_model, nhead, dim_ff)

    src1 = jax.random.normal(k1, (L1, B, d_model), jnp.float32)
    src2 = jax.random.normal(k2, (L2, B, d_model), jnp.float32)
    pos1 = 0.1 * jax.random.normal(k3, (L1, B, d_model), jnp.float32)
    pos2 = 0.1 * jax.random.normal(k4, (L2, B, d_model), jnp.float32)

    fwd = make_forward(nhead)
    out = jax.block_until_ready(fwd(params, src1, src2, pos1, pos2))

    assert out.shape == (L1, B, d_model), out.shape
    assert bool(jnp.all(jnp.isfinite(out)))
    print("KERNEL_OK")
</pallas_src>

<mosaic_0001>
module attributes {stable_mosaic.version = 11 : i64} {
  func.func @_fused_layer_kernel(%arg0: i32, %arg1: memref<1x8x32xf32, #tpu.memory_space<vmem>>, %arg2: memref<1x12x32xf32, #tpu.memory_space<vmem>>, %arg3: memref<1x8x32xf32, #tpu.memory_space<vmem>>, %arg4: memref<1x12x32xf32, #tpu.memory_space<vmem>>, %arg5: memref<3x3x32x32xbf16, #tpu.memory_space<vmem>>, %arg6: memref<3x3x1x32xf32, #tpu.memory_space<vmem>>, %arg7: memref<4x32x32xbf16, #tpu.memory_space<vmem>>, %arg8: memref<32x64xbf16, #tpu.memory_space<vmem>>, %arg9: memref<64x32xbf16, #tpu.memory_space<vmem>>, %arg10: memref<1x64xf32, #tpu.memory_space<vmem>>, %arg11: memref<11x1x32xf32, #tpu.memory_space<vmem>>, %arg12: memref<3x2x32x32xbf16, #tpu.memory_space<vmem>>, %arg13: memref<1x8x32xf32, #tpu.memory_space<vmem>>) attributes {dimension_semantics = [#tpu.dimension_semantics<parallel>], iteration_bounds = array<i64: 2>, scalar_prefetch = 0 : i64, scratch_operands = 0 : i64, tpu.core_type = #tpu.core_type<tc>, window_params = [{transform_indices = @transform_0, window_bounds = array<i64: 1, 8, 32>}, {transform_indices = @transform_1, window_bounds = array<i64: 1, 12, 32>}, {transform_indices = @transform_2, window_bounds = array<i64: 1, 8, 32>}, {transform_indices = @transform_3, window_bounds = array<i64: 1, 12, 32>}, {pipeline_mode = #tpu.pipeline_mode<synchronous>, transform_indices = @transform_4, window_bounds = array<i64: 3, 3, 32, 32>}, {pipeline_mode = #tpu.pipeline_mode<synchronous>, transform_indices = @transform_5, window_bounds = array<i64: 3, 3, 1, 32>}, {pipeline_mode = #tpu.pipeline_mode<synchronous>, transform_indices = @transform_6, window_bounds = array<i64: 4, 32, 32>}, {pipeline_mode = #tpu.pipeline_mode<synchronous>, transform_indices = @transform_7, window_bounds = array<i64: 32, 64>}, {pipeline_mode = #tpu.pipeline_mode<synchronous>, transform_indices = @transform_8, window_bounds = array<i64: 64, 32>}, {pipeline_mode = #tpu.pipeline_mode<synchronous>, transform_indices = @transform_9, window_bounds = array<i64: 1, 64>}, {pipeline_mode = #tpu.pipeline_mode<synchronous>, transform_indices = @transform_10, window_bounds = array<i64: 11, 1, 32>}, {pipeline_mode = #tpu.pipeline_mode<synchronous>, transform_indices = @transform_11, window_bounds = array<i64: 3, 2, 32, 32>}, {transform_indices = @transform_12, window_bounds = array<i64: 1, 8, 32>}]} {
    %0 = tpu.iota {dimensions = array<i32: 1>} : vector<1x32xi32>
    %c0 = arith.constant 0 : index
    %c0_0 = arith.constant 0 : index
    %c0_1 = arith.constant 0 : index
    %1 = vector.load %arg1[%c0, %c0_0, %c0_1] : memref<1x8x32xf32, #tpu.memory_space<vmem>>, vector<1x8x32xf32>
    %2 = vector.shape_cast %1 : vector<1x8x32xf32> to vector<8x32xf32>
    %c0_2 = arith.constant 0 : index
    %c0_3 = arith.constant 0 : index
    %c0_4 = arith.constant 0 : index
    %3 = vector.load %arg2[%c0_2, %c0_3, %c0_4] : memref<1x12x32xf32, #tpu.memory_space<vmem>>, vector<1x12x32xf32>
    %4 = vector.shape_cast %3 : vector<1x12x32xf32> to vector<12x32xf32>
    %c0_5 = arith.constant 0 : index
    %c0_6 = arith.constant 0 : index
    %c0_7 = arith.constant 0 : index
    %5 = vector.load %arg4[%c0_5, %c0_6, %c0_7] : memref<1x12x32xf32, #tpu.memory_space<vmem>>, vector<1x12x32xf32>
    %6 = vector.shape_cast %5 : vector<1x12x32xf32> to vector<12x32xf32>
    %7 = arith.addf %4, %6 : vector<12x32xf32>
    %c0_8 = arith.constant 0 : index
    %c0_9 = arith.constant 0 : index
    %c0_10 = arith.constant 0 : index
    %8 = vector.load %arg1[%c0_8, %c0_9, %c0_10] : memref<1x8x32xf32, #tpu.memory_space<vmem>>, vector<1x8x32xf32>
    %9 = vector.shape_cast %8 : vector<1x8x32xf32> to vector<8x32xf32>
    %c0_11 = arith.constant 0 : index
    %c0_12 = arith.constant 0 : index
    %c0_13 = arith.constant 0 : index
    %10 = vector.load %arg3[%c0_11, %c0_12, %c0_13] : memref<1x8x32xf32, #tpu.memory_space<vmem>>, vector<1x8x32xf32>
    %11 = vector.shape_cast %10 : vector<1x8x32xf32> to vector<8x32xf32>
    %12 = arith.addf %9, %11 : vector<8x32xf32>
    %13 = arith.truncf %2 : vector<8x32xf32> to vector<8x32xbf16>
    %14 = arith.truncf %7 : vector<12x32xf32> to vector<12x32xbf16>
    %c0_14 = arith.constant 0 : index
    %c0_15 = arith.constant 0 : index
    %c0_16 = arith.constant 0 : index
    %c0_17 = arith.constant 0 : index
    %15 = vector.load %arg5[%c0_14, %c0_15, %c0_16, %c0_17] : memref<3x3x32x32xbf16, #tpu.memory_space<vmem>>, vector<1x1x32x32xbf16>
    %16 = vector.shape_cast %15 : vector<1x1x32x32xbf16> to vector<32x32xbf16>
    %cst = arith.constant dense<0.000000e+00> : vector<8x32xf32>
    %17 = tpu.matmul %13, %16, %cst {dimension_numbers = #tpu.dot_dimension_numbers<[1], [0], [0], [1], [0, 0, 1, 1], [], []>} : vector<8x32xbf16>, vector<32x32xbf16>, vector<8x32xf32> -> vector<8x32xf32>
    %c0_18 = arith.constant 0 : index
    %c0_19 = arith.constant 0 : index
    %c0_20 = arith.constant 0 : index
    %c0_21 = arith.constant 0 : index
    %18 = vector.load %arg6[%c0_18, %c0_19, %c0_20, %c0_21] : memref<3x3x1x32xf32, #tpu.memory_space<vmem>>, vector<1x1x1x32xf32>
    %19 = vector.shape_cast %18 : vector<1x1x1x32xf32> to vector<1x32xf32>
    %20 = vector.broadcast %19 : vector<1x32xf32> to vector<8x32xf32>
    %21 = arith.addf %17, %20 : vector<8x32xf32>
    %22 = arith.truncf %21 : vector<8x32xf32> to vector<8x32xbf16>
    %c0_22 = arith.constant 0 : index
    %c1 = arith.constant 1 : index
    %c0_23 = arith.constant 0 : index
    %c0_24 = arith.constant 0 : index
    %23 = vector.load %arg5[%c0_22, %c1, %c0_23, %c0_24] : memref<3x3x32x32xbf16, #tpu.memory_space<vmem>>, vector<1x1x32x32xbf16>
    %24 = vector.shape_cast %23 : vector<1x1x32x32xbf16> to vector<32x32xbf16>
    %cst_25 = arith.constant dense<0.000000e+00> : vector<12x32xf32>
    %25 = tpu.matmul %14, %24, %cst_25 {dimension_numbers = #tpu.dot_dimension_numbers<[1], [0], [0], [1], [0, 0, 1, 1], [], []>} : vector<12x32xbf16>, vector<32x32xbf16>, vector<12x32xf32> -> vector<12x32xf32>
    %c0_26 = arith.constant 0 : index
    %c1_27 = arith.constant 1 : index
    %c0_28 = arith.constant 0 : index
    %c0_29 = arith.constant 0 : index
    %26 = vector.load %arg6[%c0_26, %c1_27, %c0_28, %c0_29] : memref<3x3x1x32xf32, #tpu.memory_space<vmem>>, vector<1x1x1x32xf32>
    %27 = vector.shape_cast %26 : vector<1x1x1x32xf32> to vector<1x32xf32>
    %28 = vector.broadcast %27 : vector<1x32xf32> to vector<12x32xf32>
    %29 = arith.addf %25, %28 : vector<12x32xf32>
    %30 = arith.truncf %29 : vector<12x32xf32> to vector<12x32xbf16>
    %c0_30 = arith.constant 0 : index
    %c2 = arith.constant 2 : index
    %c0_31 = arith.constant 0 : index
    %c0_32 = arith.constant 0 : index
    %31 = vector.load %arg5[%c0_30, %c2, %c0_31, %c0_32] : memref<3x3x32x32xbf16, #tpu.memory_space<vmem>>, vector<1x1x32x32xbf16>
    %32 = vector.shape_cast %31 : vector<1x1x32x32xbf16> to vector<32x32xbf16>
    %cst_33 = arith.constant dense<0.000000e+00> : vector<12x32xf32>
    %33 = tpu.matmul %14, %32, %cst_33 {dimension_numbers = #tpu.dot_dimension_numbers<[1], [0], [0], [1], [0, 0, 1, 1], [], []>} : vector<12x32xbf16>, vector<32x32xbf16>, vector<12x32xf32> -> vector<12x32xf32>
    %c0_34 = arith.constant 0 : index
    %c2_35 = arith.constant 2 : index
    %c0_36 = arith.constant 0 : index
    %c0_37 = arith.constant 0 : index
    %34 = vector.load %arg6[%c0_34, %c2_35, %c0_36, %c0_37] : memref<3x3x1x32xf32, #tpu.memory_space<vmem>>, vector<1x1x1x32xf32>
    %35 = vector.shape_cast %34 : vector<1x1x1x32xf32> to vector<1x32xf32>
    %36 = vector.broadcast %35 : vector<1x32xf32> to vector<12x32xf32>
    %37 = arith.addf %33, %36 : vector<12x32xf32>
    %38 = arith.truncf %37 : vector<12x32xf32> to vector<12x32xbf16>
    %cst_38 = arith.constant 0.000000e+00 : f32
    %39 = vector.broadcast %cst_38 : f32 to vector<8x32xf32>
    %c0_i32 = arith.constant 0 : i32
    %40 = vector.broadcast %c0_i32 : i32 to vector<1x32xi32>
    %41 = arith.cmpi sge, %0, %40 : vector<1x32xi32>
    %c8_i32 = arith.constant 8 : i32
    %42 = vector.broadcast %c8_i32 : i32 to vector<1x32xi32>
    %43 = arith.cmpi slt, %0, %42 : vector<1x32xi32>
    %44 = arith.andi %41, %43 : vector<1x32xi1>
    %c0_i32_39 = arith.constant 0 : i32
    %45 = arith.sitofp %c0_i32_39 : i32 to bf16
    %46 = vector.shape_cast %44 : vector<1x32xi1> to vector<1x32xi1>
    %47 = vector.broadcast %46 : vector<1x32xi1> to vector<8x32xi1>
    %48 = vector.broadcast %45 : bf16 to vector<8x32xbf16>
    %49 = arith.select %47, %22, %48 : vector<8x32xi1>, vector<8x32xbf16>
    %cst_40 = arith.constant dense<0.000000e+00> : vector<8x12xf32>
    %50 = tpu.matmul %49, %30, %cst_40 {dimension_numbers = #tpu.dot_dimension_numbers<[1], [1], [0], [0], [0, 0, 1, 0], [], []>} : vector<8x32xbf16>, vector<12x32xbf16>, vector<8x12xf32> -> vector<8x12xf32>
    %cst_41 = arith.constant 0.353553385 : f32
    %51 = vector.broadcast %cst_41 : f32 to vector<8x12xf32>
    %52 = arith.mulf %50, %51 : vector<8x12xf32>
    %cst_42 = arith.constant dense<0xFF800000> : vector<8xf32>
    %53 = vector.multi_reduction <maximumf>, %52, %cst_42 [1] : vector<8x12xf32> to vector<8xf32>
    %54 = vector.shape_cast %53 : vector<8xf32> to vector<8x1xf32>
    %55 = vector.broadcast %54 : vector<8x1xf32> to vector<8x12xf32>
    %56 = arith.subf %52, %55 : vector<8x12xf32>
    %57 = math.exp %56 : vector<8x12xf32>
    %cst_43 = arith.constant dense<0.000000e+00> : vector<8xf32>
    %58 = vector.multi_reduction <add>, %57, %cst_43 [1] : vector<8x12xf32> to vector<8xf32>
    %59 = vector.shape_cast %58 : vector<8xf32> to vector<8x1xf32>
    %60 = tpu.reciprocal %59 {approx = true} : vector<8x1xf32> -> vector<8x1xf32>
    %61 = vector.broadcast %60 : vector<8x1xf32> to vector<8x12xf32>
    %62 = arith.mulf %57, %61 : vector<8x12xf32>
    %c0_i32_44 = arith.constant 0 : i32
    %63 = arith.sitofp %c0_i32_44 : i32 to bf16
    %64 = vector.shape_cast %44 : vector<1x32xi1> to vector<1x32xi1>
    %65 = vector.broadcast %64 : vector<1x32xi1> to vector<12x32xi1>
    %66 = vector.broadcast %63 : bf16 to vector<12x32xbf16>
    %67 = arith.select %65, %38, %66 : vector<12x32xi1>, vector<12x32xbf16>
    %68 = arith.truncf %62 : vector<8x12xf32> to vector<8x12xbf16>
    %cst_45 = arith.constant dense<0.000000e+00> : vector<8x32xf32>
    %69 = tpu.matmul %68, %67, %cst_45 {dimension_numbers = #tpu.dot_dimension_numbers<[1], [0], [0], [1], [0, 0, 1, 1], [], []>} : vector<8x12xbf16>, vector<12x32xbf16>, vector<8x32xf32> -> vector<8x32xf32>
    %70 = arith.addf %39, %69 : vector<8x32xf32>
    %c8_i32_46 = arith.constant 8 : i32
    %71 = vector.broadcast %c8_i32_46 : i32 to vector<1x32xi32>
    %72 = arith.cmpi sge, %0, %71 : vector<1x32xi32>
    %c16_i32 = arith.constant 16 : i32
    %73 = vector.broadcast %c16_i32 : i32 to vector<1x32xi32>
    %74 = arith.cmpi slt, %0, %73 : vector<1x32xi32>
    %75 = arith.andi %72, %74 : vector<1x32xi1>
    %c0_i32_47 = arith.constant 0 : i32
    %76 = arith.sitofp %c0_i32_47 : i32 to bf16
    %77 = vector.shape_cast %75 : vector<1x32xi1> to vector<1x32xi1>
    %78 = vector.broadcast %77 : vector<1x32xi1> to vector<8x32xi1>
    %79 = vector.broadcast %76 : bf16 to vector<8x32xbf16>
    %80 = arith.select %78, %22, %79 : vector<8x32xi1>, vector<8x32xbf16>
    %cst_48 = arith.constant dense<0.000000e+00> : vector<8x12xf32>
    %81 = tpu.matmul %80, %30, %cst_48 {dimension_numbers = #tpu.dot_dimension_numbers<[1], [1], [0], [0], [0, 0, 1, 0], [], []>} : vector<8x32xbf16>, vector<12x32xbf16>, vector<8x12xf32> -> vector<8x12xf32>
    %cst_49 = arith.constant 0.353553385 : f32
    %82 = vector.broadcast %cst_49 : f32 to vector<8x12xf32>
    %83 = arith.mulf %81, %82 : vector<8x12xf32>
    %cst_50 = arith.constant dense<0xFF800000> : vector<8xf32>
    %84 = vector.multi_reduction <maximumf>, %83, %cst_50 [1] : vector<8x12xf32> to vector<8xf32>
    %85 = vector.shape_cast %84 : vector<8xf32> to vector<8x1xf32>
    %86 = vector.broadcast %85 : vector<8x1xf32> to vector<8x12xf32>
    %87 = arith.subf %83, %86 : vector<8x12xf32>
    %88 = math.exp %87 : vector<8x12xf32>
    %cst_51 = arith.constant dense<0.000000e+00> : vector<8xf32>
    %89 = vector.multi_reduction <add>, %88, %cst_51 [1] : vector<8x12xf32> to vector<8xf32>
    %90 = vector.shape_cast %89 : vector<8xf32> to vector<8x1xf32>
    %91 = tpu.reciprocal %90 {approx = true} : vector<8x1xf32> -> vector<8x1xf32>
    %92 = vector.broadcast %91 : vector<8x1xf32> to vector<8x12xf32>
    %93 = arith.mulf %88, %92 : vector<8x12xf32>
    %c0_i32_52 = arith.constant 0 : i32
    %94 = arith.sitofp %c0_i32_52 : i32 to bf16
    %95 = vector.shape_cast %75 : vector<1x32xi1> to vector<1x32xi1>
    %96 = vector.broadcast %95 : vector<1x32xi1> to vector<12x32xi1>
    %97 = vector.broadcast %94 : bf16 to vector<12x32xbf16>
    %98 = arith.select %96, %38, %97 : vector<12x32xi1>, vector<12x32xbf16>
    %99 = arith.truncf %93 : vector<8x12xf32> to vector<8x12xbf16>
    %cst_53 = arith.constant dense<0.000000e+00> : vector<8x32xf32>
    %100 = tpu.matmul %99, %98, %cst_53 {dimension_numbers = #tpu.dot_dimension_numbers<[1], [0], [0], [1], [0, 0, 1, 1], [], []>} : vector<8x12xbf16>, vector<12x32xbf16>, vector<8x32xf32> -> vector<8x32xf32>
    %101 = arith.addf %70, %100 : vector<8x32xf32>
    %c16_i32_54 = arith.constant 16 : i32
    %102 = vector.broadcast %c16_i32_54 : i32 to vector<1x32xi32>
    %103 = arith.cmpi sge, %0, %102 : vector<1x32xi32>
    %c24_i32 = arith.constant 24 : i32
    %104 = vector.broadcast %c24_i32 : i32 to vector<1x32xi32>
    %105 = arith.cmpi slt, %0, %104 : vector<1x32xi32>
    %106 = arith.andi %103, %105 : vector<1x32xi1>
    %c0_i32_55 = arith.constant 0 : i32
    %107 = arith.sitofp %c0_i32_55 : i32 to bf16
    %108 = vector.shape_cast %106 : vector<1x32xi1> to vector<1x32xi1>
    %109 = vector.broadcast %108 : vector<1x32xi1> to vector<8x32xi1>
    %110 = vector.broadcast %107 : bf16 to vector<8x32xbf16>
    %111 = arith.select %109, %22, %110 : vector<8x32xi1>, vector<8x32xbf16>
    %cst_56 = arith.constant dense<0.000000e+00> : vector<8x12xf32>
    %112 = tpu.matmul %111, %30, %cst_56 {dimension_numbers = #tpu.dot_dimension_numbers<[1], [1], [0], [0], [0, 0, 1, 0], [], []>} : vector<8x32xbf16>, vector<12x32xbf16>, vector<8x12xf32> -> vector<8x12xf32>
    %cst_57 = arith.constant 0.353553385 : f32
    %113 = vector.broadcast %cst_57 : f32 to vector<8x12xf32>
    %114 = arith.mulf %112, %113 : vector<8x12xf32>
    %cst_58 = arith.constant dense<0xFF800000> : vector<8xf32>
    %115 = vector.multi_reduction <maximumf>, %114, %cst_58 [1] : vector<8x12xf32> to vector<8xf32>
    %116 = vector.shape_cast %115 : vector<8xf32> to vector<8x1xf32>
    %117 = vector.broadcast %116 : vector<8x1xf32> to vector<8x12xf32>
    %118 = arith.subf %114, %117 : vector<8x12xf32>
    %119 = math.exp %118 : vector<8x12xf32>
    %cst_59 = arith.constant dense<0.000000e+00> : vector<8xf32>
    %120 = vector.multi_reduction <add>, %119, %cst_59 [1] : vector<8x12xf32> to vector<8xf32>
    %121 = vector.shape_cast %120 : vector<8xf32> to vector<8x1xf32>
    %122 = tpu.reciprocal %121 {approx = true} : vector<8x1xf32> -> vector<8x1xf32>
    %123 = vector.broadcast %122 : vector<8x1xf32> to vector<8x12xf32>
    %124 = arith.mulf %119, %123 : vector<8x12xf32>
    %c0_i32_60 = arith.constant 0 : i32
    %125 = arith.sitofp %c0_i32_60 : i32 to bf16
    %126 = vector.shape_cast %106 : vector<1x32xi1> to vector<1x32xi1>
    %127 = vector.broadcast %126 : vector<1x32xi1> to vector<12x32xi1>
    %128 = vector.broadcast %125 : bf16 to vector<12x32xbf16>
    %129 = arith.select %127, %38, %128 : vector<12x32xi1>, vector<12x32xbf16>
    %130 = arith.truncf %124 : vector<8x12xf32> to vector<8x12xbf16>
    %cst_61 = arith.constant dense<0.000000e+00> : vector<8x32xf32>
    %131 = tpu.matmul %130, %129, %cst_61 {dimension_numbers = #tpu.dot_dimension_numbers<[1], [0], [0], [1], [0, 0, 1, 1], [], []>} : vector<8x12xbf16>, vector<12x32xbf16>, vector<8x32xf32> -> vector<8x32xf32>
    %132 = arith.addf %101, %131 : vector<8x32xf32>
    %c24_i32_62 = arith.constant 24 : i32
    %133 = vector.broadcast %c24_i32_62 : i32 to vector<1x32xi32>
    %134 = arith.cmpi sge, %0, %133 : vector<1x32xi32>
    %c32_i32 = arith.constant 32 : i32
    %135 = vector.broadcast %c32_i32 : i32 to vector<1x32xi32>
    %136 = arith.cmpi slt, %0, %135 : vector<1x32xi32>
    %137 = arith.andi %134, %136 : vector<1x32xi1>
    %c0_i32_63 = arith.constant 0 : i32
    %138 = arith.sitofp %c0_i32_63 : i32 to bf16
    %139 = vector.shape_cast %137 : vector<1x32xi1> to vector<1x32xi1>
    %140 = vector.broadcast %139 : vector<1x32xi1> to vector<8x32xi1>
    %141 = vector.broadcast %138 : bf16 to vector<8x32xbf16>
    %142 = arith.select %140, %22, %141 : vector<8x32xi1>, vector<8x32xbf16>
    %cst_64 = arith.constant dense<0.000000e+00> : vector<8x12xf32>
    %143 = tpu.matmul %142, %30, %cst_64 {dimension_numbers = #tpu.dot_dimension_numbers<[1], [1], [0], [0], [0, 0, 1, 0], [], []>} : vector<8x32xbf16>, vector<12x32xbf16>, vector<8x12xf32> -> vector<8x12xf32>
    %cst_65 = arith.constant 0.353553385 : f32
    %144 = vector.broadcast %cst_65 : f32 to vector<8x12xf32>
    %145 = arith.mulf %143, %144 : vector<8x12xf32>
    %cst_66 = arith.constant dense<0xFF800000> : vector<8xf32>
    %146 = vector.multi_reduction <maximumf>, %145, %cst_66 [1] : vector<8x12xf32> to vector<8xf32>
    %147 = vector.shape_cast %146 : vector<8xf32> to vector<8x1xf32>
    %148 = vector.broadcast %147 : vector<8x1xf32> to vector<8x12xf32>
    %149 = arith.subf %145, %148 : vector<8x12xf32>
    %150 = math.exp %149 : vector<8x12xf32>
    %cst_67 = arith.constant dense<0.000000e+00> : vector<8xf32>
    %151 = vector.multi_reduction <add>, %150, %cst_67 [1] : vector<8x12xf32> to vector<8xf32>
    %152 = vector.shape_cast %151 : vector<8xf32> to vector<8x1xf32>
    %153 = tpu.reciprocal %152 {approx = true} : vector<8x1xf32> -> vector<8x1xf32>
    %154 = vector.broadcast %153 : vector<8x1xf32> to vector<8x12xf32>
    %155 = arith.mulf %150, %154 : vector<8x12xf32>
    %c0_i32_68 = arith.constant 0 : i32
    %156 = arith.sitofp %c0_i32_68 : i32 to bf16
    %157 = vector.shape_cast %137 : vector<1x32xi1> to vector<1x32xi1>
    %158 = vector.broadcast %157 : vector<1x32xi1> to vector<12x32xi1>
    %159 = vector.broadcast %156 : bf16 to vector<12x32xbf16>
    %160 = arith.select %158, %38, %159 : vector<12x32xi1>, vector<12x32xbf16>
    %161 = arith.truncf %155 : vector<8x12xf32> to vector<8x12xbf16>
    %cst_69 = arith.constant dense<0.000000e+00> : vector<8x32xf32>
    %162 = tpu.matmul %161, %160, %cst_69 {dimension_numbers = #tpu.dot_dimension_numbers<[1], [0], [0], [1], [0, 0, 1, 1], [], []>} : vector<8x12xbf16>, vector<12x32xbf16>, vector<8x32xf32> -> vector<8x32xf32>
    %163 = arith.addf %132, %162 : vector<8x32xf32>
    %164 = arith.truncf %163 : vector<8x32xf32> to vector<8x32xbf16>
    %c0_70 = arith.constant 0 : index
    %c0_71 = arith.constant 0 : index
    %c0_72 = arith.constant 0 : index
    %165 = vector.load %arg7[%c0_70, %c0_71, %c0_72] : memref<4x32x32xbf16, #tpu.memory_space<vmem>>, vector<1x32x32xbf16>
    %166 = vector.shape_cast %165 : vector<1x32x32xbf16> to vector<32x32xbf16>
    %cst_73 = arith.constant dense<0.000000e+00> : vector<8x32xf32>
    %167 = tpu.matmul %164, %166, %cst_73 {dimension_numbers = #tpu.dot_dimension_numbers<[1], [0], [0], [1], [0, 0, 1, 1], [], []>} : vector<8x32xbf16>, vector<32x32xbf16>, vector<8x32xf32> -> vector<8x32xf32>
    %c0_74 = arith.constant 0 : index
    %c0_75 = arith.constant 0 : index
    %c0_76 = arith.constant 0 : index
    %168 = vector.load %arg11[%c0_74, %c0_75, %c0_76] : memref<11x1x32xf32, #tpu.memory_space<vmem>>, vector<1x1x32xf32>
    %169 = vector.shape_cast %168 : vector<1x1x32xf32> to vector<1x32xf32>
    %170 = vector.broadcast %169 : vector<1x32xf32> to vector<8x32xf32>
    %171 = arith.addf %167, %170 : vector<8x32xf32>
    %172 = arith.truncf %171 : vector<8x32xf32> to vector<8x32xbf16>
    %c3 = arith.constant 3 : index
    %c0_77 = arith.constant 0 : index
    %c0_78 = arith.constant 0 : index
    %173 = vector.load %arg7[%c3, %c0_77, %c0_78] : memref<4x32x32xbf16, #tpu.memory_space<vmem>>, vector<1x32x32xbf16>
    %174 = vector.shape_cast %173 : vector<1x32x32xbf16> to vector<32x32xbf16>
    %cst_79 = arith.constant dense<0.000000e+00> : vector<8x32xf32>
    %175 = tpu.matmul %172, %174, %cst_79 {dimension_numbers = #tpu.dot_dimension_numbers<[1], [0], [0], [1], [0, 0, 1, 1], [], []>} : vector<8x32xbf16>, vector<32x32xbf16>, vector<8x32xf32> -> vector<8x32xf32>
    %c3_80 = arith.constant 3 : index
    %c0_81 = arith.constant 0 : index
    %c0_82 = arith.constant 0 : index
    %176 = vector.load %arg11[%c3_80, %c0_81, %c0_82] : memref<11x1x32xf32, #tpu.memory_space<vmem>>, vector<1x1x32xf32>
    %177 = vector.shape_cast %176 : vector<1x1x32xf32> to vector<1x32xf32>
    %178 = vector.broadcast %177 : vector<1x32xf32> to vector<8x32xf32>
    %179 = arith.addf %175, %178 : vector<8x32xf32>
    %cst_83 = arith.constant dense<0.000000e+00> : vector<8xf32>
    %180 = vector.multi_reduction <add>, %179, %cst_83 [1] : vector<8x32xf32> to vector<8xf32>
    %181 = vector.shape_cast %180 : vector<8xf32> to vector<8x1xf32>
    %cst_84 = arith.constant 3.200000e+01 : f32
    %182 = vector.broadcast %cst_84 : f32 to vector<8x1xf32>
    %183 = arith.divf %181, %182 : vector<8x1xf32>
    %184 = vector.broadcast %183 : vector<8x1xf32> to vector<8x32xf32>
    %185 = arith.subf %179, %184 : vector<8x32xf32>
    %186 = arith.mulf %185, %185 : vector<8x32xf32>
    %cst_85 = arith.constant dense<0.000000e+00> : vector<8xf32>
    %187 = vector.multi_reduction <add>, %186, %cst_85 [1] : vector<8x32xf32> to vector<8xf32>
    %188 = vector.shape_cast %187 : vector<8xf32> to vector<8x1xf32>
    %cst_86 = arith.constant 3.200000e+01 : f32
    %189 = vector.broadcast %cst_86 : f32 to vector<8x1xf32>
    %190 = arith.divf %188, %189 : vector<8x1xf32>
    %cst_87 = arith.constant 9.99999974E-6 : f32
    %191 = vector.broadcast %cst_87 : f32 to vector<8x1xf32>
    %192 = arith.addf %190, %191 : vector<8x1xf32>
    %193 = math.rsqrt %192 : vector<8x1xf32>
    %194 = vector.broadcast %193 : vector<8x1xf32> to vector<8x32xf32>
    %195 = arith.mulf %185, %194 : vector<8x32xf32>
    %c5 = arith.constant 5 : index
    %c0_88 = arith.constant 0 : index
    %c0_89 = arith.constant 0 : index
    %196 = vector.load %arg11[%c5, %c0_88, %c0_89] : memref<11x1x32xf32, #tpu.memory_space<vmem>>, vector<1x1x32xf32>
    %197 = vector.shape_cast %196 : vector<1x1x32xf32> to vector<1x32xf32>
    %198 = vector.broadcast %197 : vector<1x32xf32> to vector<8x32xf32>
    %199 = arith.mulf %195, %198 : vector<8x32xf32>
    %c6 = arith.constant 6 : index
    %c0_90 = arith.constant 0 : index
    %c0_91 = arith.constant 0 : index
    %200 = vector.load %arg11[%c6, %c0_90, %c0_91] : memref<11x1x32xf32, #tpu.memory_space<vmem>>, vector<1x1x32xf32>
    %201 = vector.shape_cast %200 : vector<1x1x32xf32> to vector<1x32xf32>
    %202 = vector.broadcast %201 : vector<1x32xf32> to vector<8x32xf32>
    %203 = arith.addf %199, %202 : vector<8x32xf32>
    %204 = arith.truncf %203 : vector<8x32xf32> to vector<8x32xbf16>
    %205 = arith.truncf %203 : vector<8x32xf32> to vector<8x32xbf16>
    %c1_92 = arith.constant 1 : index
    %c0_93 = arith.constant 0 : index
    %c0_94 = arith.constant 0 : index
    %c0_95 = arith.constant 0 : index
    %206 = vector.load %arg5[%c1_92, %c0_93, %c0_94, %c0_95] : memref<3x3x32x32xbf16, #tpu.memory_space<vmem>>, vector<1x1x32x32xbf16>
    %207 = vector.shape_cast %206 : vector<1x1x32x32xbf16> to vector<32x32xbf16>
    %cst_96 = arith.constant dense<0.000000e+00> : vector<8x32xf32>
    %208 = tpu.matmul %204, %207, %cst_96 {dimension_numbers = #tpu.dot_dimension_numbers<[1], [0], [0], [1], [0, 0, 1, 1], [], []>} : vector<8x32xbf16>, vector<32x32xbf16>, vector<8x32xf32> -> vector<8x32xf32>
    %c1_97 = arith.constant 1 : index
    %c0_98 = arith.constant 0 : index
    %c0_99 = arith.constant 0 : index
    %c0_100 = arith.constant 0 : index
    %209 = vector.load %arg6[%c1_97, %c0_98, %c0_99, %c0_100] : memref<3x3x1x32xf32, #tpu.memory_space<vmem>>, vector<1x1x1x32xf32>
    %210 = vector.shape_cast %209 : vector<1x1x1x32xf32> to vector<1x32xf32>
    %211 = vector.broadcast %210 : vector<1x32xf32> to vector<8x32xf32>
    %212 = arith.addf %208, %211 : vector<8x32xf32>
    %213 = arith.truncf %212 : vector<8x32xf32> to vector<8x32xbf16>
    %c1_101 = arith.constant 1 : index
    %c1_102 = arith.constant 1 : index
    %c0_103 = arith.constant 0 : index
    %c0_104 = arith.constant 0 : index
    %214 = vector.load %arg5[%c1_101, %c1_102, %c0_103, %c0_104] : memref<3x3x32x32xbf16, #tpu.memory_space<vmem>>, vector<1x1x32x32xbf16>
    %215 = vector.shape_cast %214 : vector<1x1x32x32xbf16> to vector<32x32xbf16>
    %cst_105 = arith.constant dense<0.000000e+00> : vector<8x32xf32>
    %216 = tpu.matmul %205, %215, %cst_105 {dimension_numbers = #tpu.dot_dimension_numbers<[1], [0], [0], [1], [0, 0, 1, 1], [], []>} : vector<8x32xbf16>, vector<32x32xbf16>, vector<8x32xf32> -> vector<8x32xf32>
    %c1_106 = arith.constant 1 : index
    %c1_107 = arith.constant 1 : index
    %c0_108 = arith.constant 0 : index
    %c0_109 = arith.constant 0 : index
    %217 = vector.load %arg6[%c1_106, %c1_107, %c0_108, %c0_109] : memref<3x3x1x32xf32, #tpu.memory_space<vmem>>, vector<1x1x1x32xf32>
    %218 = vector.shape_cast %217 : vector<1x1x1x32xf32> to vector<1x32xf32>
    %219 = vector.broadcast %218 : vector<1x32xf32> to vector<8x32xf32>
    %220 = arith.addf %216, %219 : vector<8x32xf32>
    %221 = arith.truncf %220 : vector<8x32xf32> to vector<8x32xbf16>
    %c1_110 = arith.constant 1 : index
    %c2_111 = arith.constant 2 : index
    %c0_112 = arith.constant 0 : index
    %c0_113 = arith.constant 0 : index
    %222 = vector.load %arg5[%c1_110, %c2_111, %c0_112, %c0_113] : memref<3x3x32x32xbf16, #tpu.memory_space<vmem>>, vector<1x1x32x32xbf16>
    %223 = vector.shape_cast %222 : vector<1x1x32x32xbf16> to vector<32x32xbf16>
    %cst_114 = arith.constant dense<0.000000e+00> : vector<8x32xf32>
    %224 = tpu.matmul %205, %223, %cst_114 {dimension_numbers = #tpu.dot_dimension_numbers<[1], [0], [0], [1], [0, 0, 1, 1], [], []>} : vector<8x32xbf16>, vector<32x32xbf16>, vector<8x32xf32> -> vector<8x32xf32>
    %c1_115 = arith.constant 1 : index
    %c2_116 = arith.constant 2 : index
    %c0_117 = arith.constant 0 : index
    %c0_118 = arith.constant 0 : index
    %225 = vector.load %arg6[%c1_115, %c2_116, %c0_117, %c0_118] : memref<3x3x1x32xf32, #tpu.memory_space<vmem>>, vector<1x1x1x32xf32>
    %226 = vector.shape_cast %225 : vector<1x1x1x32xf32> to vector<1x32xf32>
    %227 = vector.broadcast %226 : vector<1x32xf32> to vector<8x32xf32>
    %228 = arith.addf %224, %227 : vector<8x32xf32>
    %229 = arith.truncf %228 : vector<8x32xf32> to vector<8x32xbf16>
    %cst_119 = arith.constant 0.000000e+00 : f32
    %230 = vector.broadcast %cst_119 : f32 to vector<8x32xf32>
    %c0_i32_120 = arith.constant 0 : i32
    %231 = vector.broadcast %c0_i32_120 : i32 to vector<1x32xi32>
    %232 = arith.cmpi sge, %0, %231 : vector<1x32xi32>
    %c8_i32_121 = arith.constant 8 : i32
    %233 = vector.broadcast %c8_i32_121 : i32 to vector<1x32xi32>
    %234 = arith.cmpi slt, %0, %233 : vector<1x32xi32>
    %235 = arith.andi %232, %234 : vector<1x32xi1>
    %c0_i32_122 = arith.constant 0 : i32
    %236 = arith.sitofp %c0_i32_122 : i32 to bf16
    %237 = vector.shape_cast %235 : vector<1x32xi1> to vector<1x32xi1>
    %238 = vector.broadcast %237 : vector<1x32xi1> to vector<8x32xi1>
    %239 = vector.broadcast %236 : bf16 to vector<8x32xbf16>
    %240 = arith.select %238, %213, %239 : vector<8x32xi1>, vector<8x32xbf16>
    %cst_123 = arith.constant dense<0.000000e+00> : vector<8x8xf32>
    %241 = tpu.matmul %240, %221, %cst_123 {dimension_numbers = #tpu.dot_dimension_numbers<[1], [1], [0], [0], [0, 0, 1, 0], [], []>} : vector<8x32xbf16>, vector<8x32xbf16>, vector<8x8xf32> -> vector<8x8xf32>
    %cst_124 = arith.constant 0.353553385 : f32
    %242 = vector.broadcast %cst_124 : f32 to vector<8x8xf32>
    %243 = arith.mulf %241, %242 : vector<8x8xf32>
    %cst_125 = arith.constant dense<0xFF800000> : vector<8xf32>
    %244 = vector.multi_reduction <maximumf>, %243, %cst_125 [1] : vector<8x8xf32> to vector<8xf32>
    %245 = vector.shape_cast %244 : vector<8xf32> to vector<8x1xf32>
    %246 = vector.broadcast %245 : vector<8x1xf32> to vector<8x8xf32>
    %247 = arith.subf %243, %246 : vector<8x8xf32>
    %248 = math.exp %247 : vector<8x8xf32>
    %cst_126 = arith.constant dense<0.000000e+00> : vector<8xf32>
    %249 = vector.multi_reduction <add>, %248, %cst_126 [1] : vector<8x8xf32> to vector<8xf32>
    %250 = vector.shape_cast %249 : vector<8xf32> to vector<8x1xf32>
    %251 = tpu.reciprocal %250 {approx = true} : vector<8x1xf32> -> vector<8x1xf32>
    %252 = vector.broadcast %251 : vector<8x1xf32> to vector<8x8xf32>
    %253 = arith.mulf %248, %252 : vector<8x8xf32>
    %c0_i32_127 = arith.constant 0 : i32
    %254 = arith.sitofp %c0_i32_127 : i32 to bf16
    %255 = vector.shape_cast %235 : vector<1x32xi1> to vector<1x32xi1>
    %256 = vector.broadcast %255 : vector<1x32xi1> to vector<8x32xi1>
    %257 = vector.broadcast %254 : bf16 to vector<8x32xbf16>
    %258 = arith.select %256, %229, %257 : vector<8x32xi1>, vector<8x32xbf16>
    %259 = arith.truncf %253 : vector<8x8xf32> to vector<8x8xbf16>
    %cst_128 = arith.constant dense<0.000000e+00> : vector<8x32xf32>
    %260 = tpu.matmul %259, %258, %cst_128 {dimension_numbers = #tpu.dot_dimension_numbers<[1], [0], [0], [1], [0, 0, 1, 1], [], []>} : vector<8x8xbf16>, vector<8x32xbf16>, vector<8x32xf32> -> vector<8x32xf32>
    %261 = arith.addf %230, %260 : vector<8x32xf32>
    %c8_i32_129 = arith.constant 8 : i32
    %262 = vector.broadcast %c8_i32_129 : i32 to vector<1x32xi32>
    %263 = arith.cmpi sge, %0, %262 : vector<1x32xi32>
    %c16_i32_130 = arith.constant 16 : i32
    %264 = vector.broadcast %c16_i32_130 : i32 to vector<1x32xi32>
    %265 = arith.cmpi slt, %0, %264 : vector<1x32xi32>
    %266 = arith.andi %263, %265 : vector<1x32xi1>
    %c0_i32_131 = arith.constant 0 : i32
    %267 = arith.sitofp %c0_i32_131 : i32 to bf16
    %268 = vector.shape_cast %266 : vector<1x32xi1> to vector<1x32xi1>
    %269 = vector.broadcast %268 : vector<1x32xi1> to vector<8x32xi1>
    %270 = vector.broadcast %267 : bf16 to vector<8x32xbf16>
    %271 = arith.select %269, %213, %270 : vector<8x32xi1>, vector<8x32xbf16>
    %cst_132 = arith.constant dense<0.000000e+00> : vector<8x8xf32>
    %272 = tpu.matmul %271, %221, %cst_132 {dimension_numbers = #tpu.dot_dimension_numbers<[1], [1], [0], [0], [0, 0, 1, 0], [], []>} : vector<8x32xbf16>, vector<8x32xbf16>, vector<8x8xf32> -> vector<8x8xf32>
    %cst_133 = arith.constant 0.353553385 : f32
    %273 = vector.broadcast %cst_133 : f32 to vector<8x8xf32>
    %274 = arith.mulf %272, %273 : vector<8x8xf32>
    %cst_134 = arith.constant dense<0xFF800000> : vector<8xf32>
    %275 = vector.multi_reduction <maximumf>, %274, %cst_134 [1] : vector<8x8xf32> to vector<8xf32>
    %276 = vector.shape_cast %275 : vector<8xf32> to vector<8x1xf32>
    %277 = vector.broadcast %276 : vector<8x1xf32> to vector<8x8xf32>
    %278 = arith.subf %274, %277 : vector<8x8xf32>
    %279 = math.exp %278 : vector<8x8xf32>
    %cst_135 = arith.constant dense<0.000000e+00> : vector<8xf32>
    %280 = vector.multi_reduction <add>, %279, %cst_135 [1] : vector<8x8xf32> to vector<8xf32>
    %281 = vector.shape_cast %280 : vector<8xf32> to vector<8x1xf32>
    %282 = tpu.reciprocal %281 {approx = true} : vector<8x1xf32> -> vector<8x1xf32>
    %283 = vector.broadcast %282 : vector<8x1xf32> to vector<8x8xf32>
    %284 = arith.mulf %279, %283 : vector<8x8xf32>
    %c0_i32_136 = arith.constant 0 : i32
    %285 = arith.sitofp %c0_i32_136 : i32 to bf16
    %286 = vector.shape_cast %266 : vector<1x32xi1> to vector<1x32xi1>
    %287 = vector.broadcast %286 : vector<1x32xi1> to vector<8x32xi1>
    %288 = vector.broadcast %285 : bf16 to vector<8x32xbf16>
    %289 = arith.select %287, %229, %288 : vector<8x32xi1>, vector<8x32xbf16>
    %290 = arith.truncf %284 : vector<8x8xf32> to vector<8x8xbf16>
    %cst_137 = arith.constant dense<0.000000e+00> : vector<8x32xf32>
    %291 = tpu.matmul %290, %289, %cst_137 {dimension_numbers = #tpu.dot_dimension_numbers<[1], [0], [0], [1], [0, 0, 1, 1], [], []>} : vector<8x8xbf16>, vector<8x32xbf16>, vector<8x32xf32> -> vector<8x32xf32>
    %292 = arith.addf %261, %291 : vector<8x32xf32>
    %c16_i32_138 = arith.constant 16 : i32
    %293 = vector.broadcast %c16_i32_138 : i32 to vector<1x32xi32>
    %294 = arith.cmpi sge, %0, %293 : vector<1x32xi32>
    %c24_i32_139 = arith.constant 24 : i32
    %295 = vector.broadcast %c24_i32_139 : i32 to vector<1x32xi32>
    %296 = arith.cmpi slt, %0, %295 : vector<1x32xi32>
    %297 = arith.andi %294, %296 : vector<1x32xi1>
    %c0_i32_140 = arith.constant 0 : i32
    %298 = arith.sitofp %c0_i32_140 : i32 to bf16
    %299 = vector.shape_cast %297 : vector<1x32xi1> to vector<1x32xi1>
    %300 = vector.broadcast %299 : vector<1x32xi1> to vector<8x32xi1>
    %301 = vector.broadcast %298 : bf16 to vector<8x32xbf16>
    %302 = arith.select %300, %213, %301 : vector<8x32xi1>, vector<8x32xbf16>
    %cst_141 = arith.constant dense<0.000000e+00> : vector<8x8xf32>
    %303 = tpu.matmul %302, %221, %cst_141 {dimension_numbers = #tpu.dot_dimension_numbers<[1], [1], [0], [0], [0, 0, 1, 0], [], []>} : vector<8x32xbf16>, vector<8x32xbf16>, vector<8x8xf32> -> vector<8x8xf32>
    %cst_142 = arith.constant 0.353553385 : f32
    %304 = vector.broadcast %cst_142 : f32 to vector<8x8xf32>
    %305 = arith.mulf %303, %304 : vector<8x8xf32>
    %cst_143 = arith.constant dense<0xFF800000> : vector<8xf32>
    %306 = vector.multi_reduction <maximumf>, %305, %cst_143 [1] : vector<8x8xf32> to vector<8xf32>
    %307 = vector.shape_cast %306 : vector<8xf32> to vector<8x1xf32>
    %308 = vector.broadcast %307 : vector<8x1xf32> to vector<8x8xf32>
    %309 = arith.subf %305, %308 : vector<8x8xf32>
    %310 = math.exp %309 : vector<8x8xf32>
    %cst_144 = arith.constant dense<0.000000e+00> : vector<8xf32>
    %311 = vector.multi_reduction <add>, %310, %cst_144 [1] : vector<8x8xf32> to vector<8xf32>
    %312 = vector.shape_cast %311 : vector<8xf32> to vector<8x1xf32>
    %313 = tpu.reciprocal %312 {approx = true} : vector<8x1xf32> -> vector<8x1xf32>
    %314 = vector.broadcast %313 : vector<8x1xf32> to vector<8x8xf32>
    %315 = arith.mulf %310, %314 : vector<8x8xf32>
    %c0_i32_145 = arith.constant 0 : i32
    %316 = arith.sitofp %c0_i32_145 : i32 to bf16
    %317 = vector.shape_cast %297 : vector<1x32xi1> to vector<1x32xi1>
    %318 = vector.broadcast %317 : vector<1x32xi1> to vector<8x32xi1>
    %319 = vector.broadcast %316 : bf16 to vector<8x32xbf16>
    %320 = arith.select %318, %229, %319 : vector<8x32xi1>, vector<8x32xbf16>
    %321 = arith.truncf %315 : vector<8x8xf32> to vector<8x8xbf16>
    %cst_146 = arith.constant dense<0.000000e+00> : vector<8x32xf32>
    %322 = tpu.matmul %321, %320, %cst_146 {dimension_numbers = #tpu.dot_dimension_numbers<[1], [0], [0], [1], [0, 0, 1, 1], [], []>} : vector<8x8xbf16>, vector<8x32xbf16>, vector<8x32xf32> -> vector<8x32xf32>
    %323 = arith.addf %292, %322 : vector<8x32xf32>
    %c24_i32_147 = arith.constant 24 : i32
    %324 = vector.broadcast %c24_i32_147 : i32 to vector<1x32xi32>
    %325 = arith.cmpi sge, %0, %324 : vector<1x32xi32>
    %c32_i32_148 = arith.constant 32 : i32
    %326 = vector.broadcast %c32_i32_148 : i32 to vector<1x32xi32>
    %327 = arith.cmpi slt, %0, %326 : vector<1x32xi32>
    %328 = arith.andi %325, %327 : vector<1x32xi1>
    %c0_i32_149 = arith.constant 0 : i32
    %329 = arith.sitofp %c0_i32_149 : i32 to bf16
    %330 = vector.shape_cast %328 : vector<1x32xi1> to vector<1x32xi1>
    %331 = vector.broadcast %330 : vector<1x32xi1> to vector<8x32xi1>
    %332 = vector.broadcast %329 : bf16 to vector<8x32xbf16>
    %333 = arith.select %331, %213, %332 : vector<8x32xi1>, vector<8x32xbf16>
    %cst_150 = arith.constant dense<0.000000e+00> : vector<8x8xf32>
    %334 = tpu.matmul %333, %221, %cst_150 {dimension_numbers = #tpu.dot_dimension_numbers<[1], [1], [0], [0], [0, 0, 1, 0], [], []>} : vector<8x32xbf16>, vector<8x32xbf16>, vector<8x8xf32> -> vector<8x8xf32>
    %cst_151 = arith.constant 0.353553385 : f32
    %335 = vector.broadcast %cst_151 : f32 to vector<8x8xf32>
    %336 = arith.mulf %334, %335 : vector<8x8xf32>
    %cst_152 = arith.constant dense<0xFF800000> : vector<8xf32>
    %337 = vector.multi_reduction <maximumf>, %336, %cst_152 [1] : vector<8x8xf32> to vector<8xf32>
    %338 = vector.shape_cast %337 : vector<8xf32> to vector<8x1xf32>
    %339 = vector.broadcast %338 : vector<8x1xf32> to vector<8x8xf32>
    %340 = arith.subf %336, %339 : vector<8x8xf32>
    %341 = math.exp %340 : vector<8x8xf32>
    %cst_153 = arith.constant dense<0.000000e+00> : vector<8xf32>
    %342 = vector.multi_reduction <add>, %341, %cst_153 [1] : vector<8x8xf32> to vector<8xf32>
    %343 = vector.shape_cast %342 : vector<8xf32> to vector<8x1xf32>
    %344 = tpu.reciprocal %343 {approx = true} : vector<8x1xf32> -> vector<8x1xf32>
    %345 = vector.broadcast %344 : vector<8x1xf32> to vector<8x8xf32>
    %346 = arith.mulf %341, %345 : vector<8x8xf32>
    %c0_i32_154 = arith.constant 0 : i32
    %347 = arith.sitofp %c0_i32_154 : i32 to bf16
    %348 = vector.shape_cast %328 : vector<1x32xi1> to vector<1x32xi1>
    %349 = vector.broadcast %348 : vector<1x32xi1> to vector<8x32xi1>
    %350 = vector.broadcast %347 : bf16 to vector<8x32xbf16>
    %351 = arith.select %349, %229, %350 : vector<8x32xi1>, vector<8x32xbf16>
    %352 = arith.truncf %346 : vector<8x8xf32> to vector<8x8xbf16>
    %cst_155 = arith.constant dense<0.000000e+00> : vector<8x32xf32>
    %353 = tpu.matmul %352, %351, %cst_155 {dimension_numbers = #tpu.dot_dimension_numbers<[1], [0], [0], [1], [0, 0, 1, 1], [], []>} : vector<8x8xbf16>, vector<8x32xbf16>, vector<8x32xf32> -> vector<8x32xf32>
    %354 = arith.addf %323, %353 : vector<8x32xf32>
    %355 = arith.truncf %354 : vector<8x32xf32> to vector<8x32xbf16>
    %c1_156 = arith.constant 1 : index
    %c0_157 = arith.constant 0 : index
    %c0_158 = arith.constant 0 : index
    %356 = vector.load %arg7[%c1_156, %c0_157, %c0_158] : memref<4x32x32xbf16, #tpu.memory_space<vmem>>, vector<1x32x32xbf16>
    %357 = vector.shape_cast %356 : vector<1x32x32xbf16> to vector<32x32xbf16>
    %cst_159 = arith.constant dense<0.000000e+00> : vector<8x32xf32>
    %358 = tpu.matmul %355, %357, %cst_159 {dimension_numbers = #tpu.dot_dimension_numbers<[1], [0], [0], [1], [0, 0, 1, 1], [], []>} : vector<8x32xbf16>, vector<32x32xbf16>, vector<8x32xf32> -> vector<8x32xf32>
    %c1_160 = arith.constant 1 : index
    %c0_161 = arith.constant 0 : index
    %c0_162 = arith.constant 0 : index
    %359 = vector.load %arg11[%c1_160, %c0_161, %c0_162] : memref<11x1x32xf32, #tpu.memory_space<vmem>>, vector<1x1x32xf32>
    %360 = vector.shape_cast %359 : vector<1x1x32xf32> to vector<1x32xf32>
    %361 = vector.broadcast %360 : vector<1x32xf32> to vector<8x32xf32>
    %362 = arith.addf %358, %361 : vector<8x32xf32>
    %363 = arith.truncf %203 : vector<8x32xf32> to vector<8x32xbf16>
    %364 = arith.truncf %362 : vector<8x32xf32> to vector<8x32xbf16>
    %c0_163 = arith.constant 0 : index
    %c0_164 = arith.constant 0 : index
    %c0_165 = arith.constant 0 : index
    %c0_166 = arith.constant 0 : index
    %365 = vector.load %arg12[%c0_163, %c0_164, %c0_165, %c0_166] : memref<3x2x32x32xbf16, #tpu.memory_space<vmem>>, vector<1x1x32x32xbf16>
    %366 = vector.shape_cast %365 : vector<1x1x32x32xbf16> to vector<32x32xbf16>
    %cst_167 = arith.constant dense<0.000000e+00> : vector<8x32xf32>
    %367 = tpu.matmul %363, %366, %cst_167 {dimension_numbers = #tpu.dot_dimension_numbers<[1], [0], [0], [1], [0, 0, 1, 1], [], []>} : vector<8x32xbf16>, vector<32x32xbf16>, vector<8x32xf32> -> vector<8x32xf32>
    %c0_168 = arith.constant 0 : index
    %c1_169 = arith.constant 1 : index
    %c0_170 = arith.constant 0 : index
    %c0_171 = arith.constant 0 : index
    %368 = vector.load %arg12[%c0_168, %c1_169, %c0_170, %c0_171] : memref<3x2x32x32xbf16, #tpu.memory_space<vmem>>, vector<1x1x32x32xbf16>
    %369 = vector.shape_cast %368 : vector<1x1x32x32xbf16> to vector<32x32xbf16>
    %cst_172 = arith.constant dense<0.000000e+00> : vector<8x32xf32>
    %370 = tpu.matmul %364, %369, %cst_172 {dimension_numbers = #tpu.dot_dimension_numbers<[1], [0], [0], [1], [0, 0, 1, 1], [], []>} : vector<8x32xbf16>, vector<32x32xbf16>, vector<8x32xf32> -> vector<8x32xf32>
    %371 = arith.addf %367, %370 : vector<8x32xf32>
    %c1_173 = arith.constant 1 : index
    %c0_174 = arith.constant 0 : index
    %c0_175 = arith.constant 0 : index
    %c0_176 = arith.constant 0 : index
    %372 = vector.load %arg12[%c1_173, %c0_174, %c0_175, %c0_176] : memref<3x2x32x32xbf16, #tpu.memory_space<vmem>>, vector<1x1x32x32xbf16>
    %373 = vector.shape_cast %372 : vector<1x1x32x32xbf16> to vector<32x32xbf16>
    %cst_177 = arith.constant dense<0.000000e+00> : vector<8x32xf32>
    %374 = tpu.matmul %363, %373, %cst_177 {dimension_numbers = #tpu.dot_dimension_numbers<[1], [0], [0], [1], [0, 0, 1, 1], [], []>} : vector<8x32xbf16>, vector<32x32xbf16>, vector<8x32xf32> -> vector<8x32xf32>
    %c1_178 = arith.constant 1 : index
    %c1_179 = arith.constant 1 : index
    %c0_180 = arith.constant 0 : index
    %c0_181 = arith.constant 0 : index
    %375 = vector.load %arg12[%c1_178, %c1_179, %c0_180, %c0_181] : memref<3x2x32x32xbf16, #tpu.memory_space<vmem>>, vector<1x1x32x32xbf16>
    %376 = vector.shape_cast %375 : vector<1x1x32x32xbf16> to vector<32x32xbf16>
    %cst_182 = arith.constant dense<0.000000e+00> : vector<8x32xf32>
    %377 = tpu.matmul %364, %376, %cst_182 {dimension_numbers = #tpu.dot_dimension_numbers<[1], [0], [0], [1], [0, 0, 1, 1], [], []>} : vector<8x32xbf16>, vector<32x32xbf16>, vector<8x32xf32> -> vector<8x32xf32>
    %378 = arith.addf %374, %377 : vector<8x32xf32>
    %379 = arith.maximumf %371, %378 : vector<8x32xf32>
    %c2_183 = arith.constant 2 : index
    %c0_184 = arith.constant 0 : index
    %c0_185 = arith.constant 0 : index
    %c0_186 = arith.constant 0 : index
    %380 = vector.load %arg12[%c2_183, %c0_184, %c0_185, %c0_186] : memref<3x2x32x32xbf16, #tpu.memory_space<vmem>>, vector<1x1x32x32xbf16>
    %381 = vector.shape_cast %380 : vector<1x1x32x32xbf16> to vector<32x32xbf16>
    %cst_187 = arith.constant dense<0.000000e+00> : vector<8x32xf32>
    %382 = tpu.matmul %363, %381, %cst_187 {dimension_numbers = #tpu.dot_dimension_numbers<[1], [0], [0], [1], [0, 0, 1, 1], [], []>} : vector<8x32xbf16>, vector<32x32xbf16>, vector<8x32xf32> -> vector<8x32xf32>
    %c2_188 = arith.constant 2 : index
    %c1_189 = arith.constant 1 : index
    %c0_190 = arith.constant 0 : index
    %c0_191 = arith.constant 0 : index
    %383 = vector.load %arg12[%c2_188, %c1_189, %c0_190, %c0_191] : memref<3x2x32x32xbf16, #tpu.memory_space<vmem>>, vector<1x1x32x32xbf16>
    %384 = vector.shape_cast %383 : vector<1x1x32x32xbf16> to vector<32x32xbf16>
    %cst_192 = arith.constant dense<0.000000e+00> : vector<8x32xf32>
    %385 = tpu.matmul %364, %384, %cst_192 {dimension_numbers = #tpu.dot_dimension_numbers<[1], [0], [0], [1], [0, 0, 1, 1], [], []>} : vector<8x32xbf16>, vector<32x32xbf16>, vector<8x32xf32> -> vector<8x32xf32>
    %386 = arith.addf %382, %385 : vector<8x32xf32>
    %387 = arith.maximumf %379, %386 : vector<8x32xf32>
    %cst_193 = arith.constant dense<0.000000e+00> : vector<8xf32>
    %388 = vector.multi_reduction <add>, %387, %cst_193 [1] : vector<8x32xf32> to vector<8xf32>
    %389 = vector.shape_cast %388 : vector<8xf32> to vector<8x1xf32>
    %cst_194 = arith.constant 3.200000e+01 : f32
    %390 = vector.broadcast %cst_194 : f32 to vector<8x1xf32>
    %391 = arith.divf %389, %390 : vector<8x1xf32>
    %392 = vector.broadcast %391 : vector<8x1xf32> to vector<8x32xf32>
    %393 = arith.subf %387, %392 : vector<8x32xf32>
    %394 = arith.mulf %393, %393 : vector<8x32xf32>
    %cst_195 = arith.constant dense<0.000000e+00> : vector<8xf32>
    %395 = vector.multi_reduction <add>, %394, %cst_195 [1] : vector<8x32xf32> to vector<8xf32>
    %396 = vector.shape_cast %395 : vector<8xf32> to vector<8x1xf32>
    %cst_196 = arith.constant 3.200000e+01 : f32
    %397 = vector.broadcast %cst_196 : f32 to vector<8x1xf32>
    %398 = arith.divf %396, %397 : vector<8x1xf32>
    %cst_197 = arith.constant 9.99999974E-6 : f32
    %399 = vector.broadcast %cst_197 : f32 to vector<8x1xf32>
    %400 = arith.addf %398, %399 : vector<8x1xf32>
    %401 = math.rsqrt %400 : vector<8x1xf32>
    %402 = vector.broadcast %401 : vector<8x1xf32> to vector<8x32xf32>
    %403 = arith.mulf %393, %402 : vector<8x32xf32>
    %c7 = arith.constant 7 : index
    %c0_198 = arith.constant 0 : index
    %c0_199 = arith.constant 0 : index
    %404 = vector.load %arg11[%c7, %c0_198, %c0_199] : memref<11x1x32xf32, #tpu.memory_space<vmem>>, vector<1x1x32xf32>
    %405 = vector.shape_cast %404 : vector<1x1x32xf32> to vector<1x32xf32>
    %406 = vector.broadcast %405 : vector<1x32xf32> to vector<8x32xf32>
    %407 = arith.mulf %403, %406 : vector<8x32xf32>
    %c8 = arith.constant 8 : index
    %c0_200 = arith.constant 0 : index
    %c0_201 = arith.constant 0 : index
    %408 = vector.load %arg11[%c8, %c0_200, %c0_201] : memref<11x1x32xf32, #tpu.memory_space<vmem>>, vector<1x1x32xf32>
    %409 = vector.shape_cast %408 : vector<1x1x32xf32> to vector<1x32xf32>
    %410 = vector.broadcast %409 : vector<1x32xf32> to vector<8x32xf32>
    %411 = arith.addf %407, %410 : vector<8x32xf32>
    %412 = arith.truncf %411 : vector<8x32xf32> to vector<8x32xbf16>
    %413 = arith.truncf %12 : vector<8x32xf32> to vector<8x32xbf16>
    %c2_202 = arith.constant 2 : index
    %c0_203 = arith.constant 0 : index
    %c0_204 = arith.constant 0 : index
    %c0_205 = arith.constant 0 : index
    %414 = vector.load %arg5[%c2_202, %c0_203, %c0_204, %c0_205] : memref<3x3x32x32xbf16, #tpu.memory_space<vmem>>, vector<1x1x32x32xbf16>
    %415 = vector.shape_cast %414 : vector<1x1x32x32xbf16> to vector<32x32xbf16>
    %cst_206 = arith.constant dense<0.000000e+00> : vector<8x32xf32>
    %416 = tpu.matmul %412, %415, %cst_206 {dimension_numbers = #tpu.dot_dimension_numbers<[1], [0], [0], [1], [0, 0, 1, 1], [], []>} : vector<8x32xbf16>, vector<32x32xbf16>, vector<8x32xf32> -> vector<8x32xf32>
    %c2_207 = arith.constant 2 : index
    %c0_208 = arith.constant 0 : index
    %c0_209 = arith.constant 0 : index
    %c0_210 = arith.constant 0 : index
    %417 = vector.load %arg6[%c2_207, %c0_208, %c0_209, %c0_210] : memref<3x3x1x32xf32, #tpu.memory_space<vmem>>, vector<1x1x1x32xf32>
    %418 = vector.shape_cast %417 : vector<1x1x1x32xf32> to vector<1x32xf32>
    %419 = vector.broadcast %418 : vector<1x32xf32> to vector<8x32xf32>
    %420 = arith.addf %416, %419 : vector<8x32xf32>
    %421 = arith.truncf %420 : vector<8x32xf32> to vector<8x32xbf16>
    %c2_211 = arith.constant 2 : index
    %c1_212 = arith.constant 1 : index
    %c0_213 = arith.constant 0 : index
    %c0_214 = arith.constant 0 : index
    %422 = vector.load %arg5[%c2_211, %c1_212, %c0_213, %c0_214] : memref<3x3x32x32xbf16, #tpu.memory_space<vmem>>, vector<1x1x32x32xbf16>
    %423 = vector.shape_cast %422 : vector<1x1x32x32xbf16> to vector<32x32xbf16>
    %cst_215 = arith.constant dense<0.000000e+00> : vector<8x32xf32>
    %424 = tpu.matmul %413, %423, %cst_215 {dimension_numbers = #tpu.dot_dimension_numbers<[1], [0], [0], [1], [0, 0, 1, 1], [], []>} : vector<8x32xbf16>, vector<32x32xbf16>, vector<8x32xf32> -> vector<8x32xf32>
    %c2_216 = arith.constant 2 : index
    %c1_217 = arith.constant 1 : index
    %c0_218 = arith.constant 0 : index
    %c0_219 = arith.constant 0 : index
    %425 = vector.load %arg6[%c2_216, %c1_217, %c0_218, %c0_219] : memref<3x3x1x32xf32, #tpu.memory_space<vmem>>, vector<1x1x1x32xf32>
    %426 = vector.shape_cast %425 : vector<1x1x1x32xf32> to vector<1x32xf32>
    %427 = vector.broadcast %426 : vector<1x32xf32> to vector<8x32xf32>
    %428 = arith.addf %424, %427 : vector<8x32xf32>
    %429 = arith.truncf %428 : vector<8x32xf32> to vector<8x32xbf16>
    %c2_220 = arith.constant 2 : index
    %c2_221 = arith.constant 2 : index
    %c0_222 = arith.constant 0 : index
    %c0_223 = arith.constant 0 : index
    %430 = vector.load %arg5[%c2_220, %c2_221, %c0_222, %c0_223] : memref<3x3x32x32xbf16, #tpu.memory_space<vmem>>, vector<1x1x32x32xbf16>
    %431 = vector.shape_cast %430 : vector<1x1x32x32xbf16> to vector<32x32xbf16>
    %cst_224 = arith.constant dense<0.000000e+00> : vector<8x32xf32>
    %432 = tpu.matmul %413, %431, %cst_224 {dimension_numbers = #tpu.dot_dimension_numbers<[1], [0], [0], [1], [0, 0, 1, 1], [], []>} : vector<8x32xbf16>, vector<32x32xbf16>, vector<8x32xf32> -> vector<8x32xf32>
    %c2_225 = arith.constant 2 : index
    %c2_226 = arith.constant 2 : index
    %c0_227 = arith.constant 0 : index
    %c0_228 = arith.constant 0 : index
    %433 = vector.load %arg6[%c2_225, %c2_226, %c0_227, %c0_228] : memref<3x3x1x32xf32, #tpu.memory_space<vmem>>, vector<1x1x1x32xf32>
    %434 = vector.shape_cast %433 : vector<1x1x1x32xf32> to vector<1x32xf32>
    %435 = vector.broadcast %434 : vector<1x32xf32> to vector<8x32xf32>
    %436 = arith.addf %432, %435 : vector<8x32xf32>
    %437 = arith.truncf %436 : vector<8x32xf32> to vector<8x32xbf16>
    %cst_229 = arith.constant 0.000000e+00 : f32
    %438 = vector.broadcast %cst_229 : f32 to vector<8x32xf32>
    %c0_i32_230 = arith.constant 0 : i32
    %439 = vector.broadcast %c0_i32_230 : i32 to vector<1x32xi32>
    %440 = arith.cmpi sge, %0, %439 : vector<1x32xi32>
    %c8_i32_231 = arith.constant 8 : i32
    %441 = vector.broadcast %c8_i32_231 : i32 to vector<1x32xi32>
    %442 = arith.cmpi slt, %0, %441 : vector<1x32xi32>
    %443 = arith.andi %440, %442 : vector<1x32xi1>
    %c0_i32_232 = arith.constant 0 : i32
    %444 = arith.sitofp %c0_i32_232 : i32 to bf16
    %445 = vector.shape_cast %443 : vector<1x32xi1> to vector<1x32xi1>
    %446 = vector.broadcast %445 : vector<1x32xi1> to vector<8x32xi1>
    %447 = vector.broadcast %444 : bf16 to vector<8x32xbf16>
    %448 = arith.select %446, %421, %447 : vector<8x32xi1>, vector<8x32xbf16>
    %cst_233 = arith.constant dense<0.000000e+00> : vector<8x8xf32>
    %449 = tpu.matmul %448, %429, %cst_233 {dimension_numbers = #tpu.dot_dimension_numbers<[1], [1], [0], [0], [0, 0, 1, 0], [], []>} : vector<8x32xbf16>, vector<8x32xbf16>, vector<8x8xf32> -> vector<8x8xf32>
    %cst_234 = arith.constant 0.353553385 : f32
    %450 = vector.broadcast %cst_234 : f32 to vector<8x8xf32>
    %451 = arith.mulf %449, %450 : vector<8x8xf32>
    %cst_235 = arith.constant dense<0xFF800000> : vector<8xf32>
    %452 = vector.multi_reduction <maximumf>, %451, %cst_235 [1] : vector<8x8xf32> to vector<8xf32>
    %453 = vector.shape_cast %452 : vector<8xf32> to vector<8x1xf32>
    %454 = vector.broadcast %453 : vector<8x1xf32> to vector<8x8xf32>
    %455 = arith.subf %451, %454 : vector<8x8xf32>
    %456 = math.exp %455 : vector<8x8xf32>
    %cst_236 = arith.constant dense<0.000000e+00> : vector<8xf32>
    %457 = vector.multi_reduction <add>, %456, %cst_236 [1] : vector<8x8xf32> to vector<8xf32>
    %458 = vector.shape_cast %457 : vector<8xf32> to vector<8x1xf32>
    %459 = tpu.reciprocal %458 {approx = true} : vector<8x1xf32> -> vector<8x1xf32>
    %460 = vector.broadcast %459 : vector<8x1xf32> to vector<8x8xf32>
    %461 = arith.mulf %456, %460 : vector<8x8xf32>
    %c0_i32_237 = arith.constant 0 : i32
    %462 = arith.sitofp %c0_i32_237 : i32 to bf16
    %463 = vector.shape_cast %443 : vector<1x32xi1> to vector<1x32xi1>
    %464 = vector.broadcast %463 : vector<1x32xi1> to vector<8x32xi1>
    %465 = vector.broadcast %462 : bf16 to vector<8x32xbf16>
    %466 = arith.select %464, %437, %465 : vector<8x32xi1>, vector<8x32xbf16>
    %467 = arith.truncf %461 : vector<8x8xf32> to vector<8x8xbf16>
    %cst_238 = arith.constant dense<0.000000e+00> : vector<8x32xf32>
    %468 = tpu.matmul %467, %466, %cst_238 {dimension_numbers = #tpu.dot_dimension_numbers<[1], [0], [0], [1], [0, 0, 1, 1], [], []>} : vector<8x8xbf16>, vector<8x32xbf16>, vector<8x32xf32> -> vector<8x32xf32>
    %469 = arith.addf %438, %468 : vector<8x32xf32>
    %c8_i32_239 = arith.constant 8 : i32
    %470 = vector.broadcast %c8_i32_239 : i32 to vector<1x32xi32>
    %471 = arith.cmpi sge, %0, %470 : vector<1x32xi32>
    %c16_i32_240 = arith.constant 16 : i32
    %472 = vector.broadcast %c16_i32_240 : i32 to vector<1x32xi32>
    %473 = arith.cmpi slt, %0, %472 : vector<1x32xi32>
    %474 = arith.andi %471, %473 : vector<1x32xi1>
    %c0_i32_241 = arith.constant 0 : i32
    %475 = arith.sitofp %c0_i32_241 : i32 to bf16
    %476 = vector.shape_cast %474 : vector<1x32xi1> to vector<1x32xi1>
    %477 = vector.broadcast %476 : vector<1x32xi1> to vector<8x32xi1>
    %478 = vector.broadcast %475 : bf16 to vector<8x32xbf16>
    %479 = arith.select %477, %421, %478 : vector<8x32xi1>, vector<8x32xbf16>
    %cst_242 = arith.constant dense<0.000000e+00> : vector<8x8xf32>
    %480 = tpu.matmul %479, %429, %cst_242 {dimension_numbers = #tpu.dot_dimension_numbers<[1], [1], [0], [0], [0, 0, 1, 0], [], []>} : vector<8x32xbf16>, vector<8x32xbf16>, vector<8x8xf32> -> vector<8x8xf32>
    %cst_243 = arith.constant 0.353553385 : f32
    %481 = vector.broadcast %cst_243 : f32 to vector<8x8xf32>
    %482 = arith.mulf %480, %481 : vector<8x8xf32>
    %cst_244 = arith.constant dense<0xFF800000> : vector<8xf32>
    %483 = vector.multi_reduction <maximumf>, %482, %cst_244 [1] : vector<8x8xf32> to vector<8xf32>
    %484 = vector.shape_cast %483 : vector<8xf32> to vector<8x1xf32>
    %485 = vector.broadcast %484 : vector<8x1xf32> to vector<8x8xf32>
    %486 = arith.subf %482, %485 : vector<8x8xf32>
    %487 = math.exp %486 : vector<8x8xf32>
    %cst_245 = arith.constant dense<0.000000e+00> : vector<8xf32>
    %488 = vector.multi_reduction <add>, %487, %cst_245 [1] : vector<8x8xf32> to vector<8xf32>
    %489 = vector.shape_cast %488 : vector<8xf32> to vector<8x1xf32>
    %490 = tpu.reciprocal %489 {approx = true} : vector<8x1xf32> -> vector<8x1xf32>
    %491 = vector.broadcast %490 : vector<8x1xf32> to vector<8x8xf32>
    %492 = arith.mulf %487, %491 : vector<8x8xf32>
    %c0_i32_246 = arith.constant 0 : i32
    %493 = arith.sitofp %c0_i32_246 : i32 to bf16
    %494 = vector.shape_cast %474 : vector<1x32xi1> to vector<1x32xi1>
    %495 = vector.broadcast %494 : vector<1x32xi1> to vector<8x32xi1>
    %496 = vector.broadcast %493 : bf16 to vector<8x32xbf16>
    %497 = arith.select %495, %437, %496 : vector<8x32xi1>, vector<8x32xbf16>
    %498 = arith.truncf %492 : vector<8x8xf32> to vector<8x8xbf16>
    %cst_247 = arith.constant dense<0.000000e+00> : vector<8x32xf32>
    %499 = tpu.matmul %498, %497, %cst_247 {dimension_numbers = #tpu.dot_dimension_numbers<[1], [0], [0], [1], [0, 0, 1, 1], [], []>} : vector<8x8xbf16>, vector<8x32xbf16>, vector<8x32xf32> -> vector<8x32xf32>
    %500 = arith.addf %469, %499 : vector<8x32xf32>
    %c16_i32_248 = arith.constant 16 : i32
    %501 = vector.broadcast %c16_i32_248 : i32 to vector<1x32xi32>
    %502 = arith.cmpi sge, %0, %501 : vector<1x32xi32>
    %c24_i32_249 = arith.constant 24 : i32
    %503 = vector.broadcast %c24_i32_249 : i32 to vector<1x32xi32>
    %504 = arith.cmpi slt, %0, %503 : vector<1x32xi32>
    %505 = arith.andi %502, %504 : vector<1x32xi1>
    %c0_i32_250 = arith.constant 0 : i32
    %506 = arith.sitofp %c0_i32_250 : i32 to bf16
    %507 = vector.shape_cast %505 : vector<1x32xi1> to vector<1x32xi1>
    %508 = vector.broadcast %507 : vector<1x32xi1> to vector<8x32xi1>
    %509 = vector.broadcast %506 : bf16 to vector<8x32xbf16>
    %510 = arith.select %508, %421, %509 : vector<8x32xi1>, vector<8x32xbf16>
    %cst_251 = arith.constant dense<0.000000e+00> : vector<8x8xf32>
    %511 = tpu.matmul %510, %429, %cst_251 {dimension_numbers = #tpu.dot_dimension_numbers<[1], [1], [0], [0], [0, 0, 1, 0], [], []>} : vector<8x32xbf16>, vector<8x32xbf16>, vector<8x8xf32> -> vector<8x8xf32>
    %cst_252 = arith.constant 0.353553385 : f32
    %512 = vector.broadcast %cst_252 : f32 to vector<8x8xf32>
    %513 = arith.mulf %511, %512 : vector<8x8xf32>
    %cst_253 = arith.constant dense<0xFF800000> : vector<8xf32>
    %514 = vector.multi_reduction <maximumf>, %513, %cst_253 [1] : vector<8x8xf32> to vector<8xf32>
    %515 = vector.shape_cast %514 : vector<8xf32> to vector<8x1xf32>
    %516 = vector.broadcast %515 : vector<8x1xf32> to vector<8x8xf32>
    %517 = arith.subf %513, %516 : vector<8x8xf32>
    %518 = math.exp %517 : vector<8x8xf32>
    %cst_254 = arith.constant dense<0.000000e+00> : vector<8xf32>
    %519 = vector.multi_reduction <add>, %518, %cst_254 [1] : vector<8x8xf32> to vector<8xf32>
    %520 = vector.shape_cast %519 : vector<8xf32> to vector<8x1xf32>
    %521 = tpu.reciprocal %520 {approx = true} : vector<8x1xf32> -> vector<8x1xf32>
    %522 = vector.broadcast %521 : vector<8x1xf32> to vector<8x8xf32>
    %523 = arith.mulf %518, %522 : vector<8x8xf32>
    %c0_i32_255 = arith.constant 0 : i32
    %524 = arith.sitofp %c0_i32_255 : i32 to bf16
    %525 = vector.shape_cast %505 : vector<1x32xi1> to vector<1x32xi1>
    %526 = vector.broadcast %525 : vector<1x32xi1> to vector<8x32xi1>
    %527 = vector.broadcast %524 : bf16 to vector<8x32xbf16>
    %528 = arith.select %526, %437, %527 : vector<8x32xi1>, vector<8x32xbf16>
    %529 = arith.truncf %523 : vector<8x8xf32> to vector<8x8xbf16>
    %cst_256 = arith.constant dense<0.000000e+00> : vector<8x32xf32>
    %530 = tpu.matmul %529, %528, %cst_256 {dimension_numbers = #tpu.dot_dimension_numbers<[1], [0], [0], [1], [0, 0, 1, 1], [], []>} : vector<8x8xbf16>, vector<8x32xbf16>, vector<8x32xf32> -> vector<8x32xf32>
    %531 = arith.addf %500, %530 : vector<8x32xf32>
    %c24_i32_257 = arith.constant 24 : i32
    %532 = vector.broadcast %c24_i32_257 : i32 to vector<1x32xi32>
    %533 = arith.cmpi sge, %0, %532 : vector<1x32xi32>
    %c32_i32_258 = arith.constant 32 : i32
    %534 = vector.broadcast %c32_i32_258 : i32 to vector<1x32xi32>
    %535 = arith.cmpi slt, %0, %534 : vector<1x32xi32>
    %536 = arith.andi %533, %535 : vector<1x32xi1>
    %c0_i32_259 = arith.constant 0 : i32
    %537 = arith.sitofp %c0_i32_259 : i32 to bf16
    %538 = vector.shape_cast %536 : vector<1x32xi1> to vector<1x32xi1>
    %539 = vector.broadcast %538 : vector<1x32xi1> to vector<8x32xi1>
    %540 = vector.broadcast %537 : bf16 to vector<8x32xbf16>
    %541 = arith.select %539, %421, %540 : vector<8x32xi1>, vector<8x32xbf16>
    %cst_260 = arith.constant dense<0.000000e+00> : vector<8x8xf32>
    %542 = tpu.matmul %541, %429, %cst_260 {dimension_numbers = #tpu.dot_dimension_numbers<[1], [1], [0], [0], [0, 0, 1, 0], [], []>} : vector<8x32xbf16>, vector<8x32xbf16>, vector<8x8xf32> -> vector<8x8xf32>
    %cst_261 = arith.constant 0.353553385 : f32
    %543 = vector.broadcast %cst_261 : f32 to vector<8x8xf32>
    %544 = arith.mulf %542, %543 : vector<8x8xf32>
    %cst_262 = arith.constant dense<0xFF800000> : vector<8xf32>
    %545 = vector.multi_reduction <maximumf>, %544, %cst_262 [1] : vector<8x8xf32> to vector<8xf32>
    %546 = vector.shape_cast %545 : vector<8xf32> to vector<8x1xf32>
    %547 = vector.broadcast %546 : vector<8x1xf32> to vector<8x8xf32>
    %548 = arith.subf %544, %547 : vector<8x8xf32>
    %549 = math.exp %548 : vector<8x8xf32>
    %cst_263 = arith.constant dense<0.000000e+00> : vector<8xf32>
    %550 = vector.multi_reduction <add>, %549, %cst_263 [1] : vector<8x8xf32> to vector<8xf32>
    %551 = vector.shape_cast %550 : vector<8xf32> to vector<8x1xf32>
    %552 = tpu.reciprocal %551 {approx = true} : vector<8x1xf32> -> vector<8x1xf32>
    %553 = vector.broadcast %552 : vector<8x1xf32> to vector<8x8xf32>
    %554 = arith.mulf %549, %553 : vector<8x8xf32>
    %c0_i32_264 = arith.constant 0 : i32
    %555 = arith.sitofp %c0_i32_264 : i32 to bf16
    %556 = vector.shape_cast %536 : vector<1x32xi1> to vector<1x32xi1>
    %557 = vector.broadcast %556 : vector<1x32xi1> to vector<8x32xi1>
    %558 = vector.broadcast %555 : bf16 to vector<8x32xbf16>
    %559 = arith.select %557, %437, %558 : vector<8x32xi1>, vector<8x32xbf16>
    %560 = arith.truncf %554 : vector<8x8xf32> to vector<8x8xbf16>
    %cst_265 = arith.constant dense<0.000000e+00> : vector<8x32xf32>
    %561 = tpu.matmul %560, %559, %cst_265 {dimension_numbers = #tpu.dot_dimension_numbers<[1], [0], [0], [1], [0, 0, 1, 1], [], []>} : vector<8x8xbf16>, vector<8x32xbf16>, vector<8x32xf32> -> vector<8x32xf32>
    %562 = arith.addf %531, %561 : vector<8x32xf32>
    %563 = arith.truncf %562 : vector<8x32xf32> to vector<8x32xbf16>
    %c2_266 = arith.constant 2 : index
    %c0_267 = arith.constant 0 : index
    %c0_268 = arith.constant 0 : index
    %564 = vector.load %arg7[%c2_266, %c0_267, %c0_268] : memref<4x32x32xbf16, #tpu.memory_space<vmem>>, vector<1x32x32xbf16>
    %565 = vector.shape_cast %564 : vector<1x32x32xbf16> to vector<32x32xbf16>
    %cst_269 = arith.constant dense<0.000000e+00> : vector<8x32xf32>
    %566 = tpu.matmul %563, %565, %cst_269 {dimension_numbers = #tpu.dot_dimension_numbers<[1], [0], [0], [1], [0, 0, 1, 1], [], []>} : vector<8x32xbf16>, vector<32x32xbf16>, vector<8x32xf32> -> vector<8x32xf32>
    %c2_270 = arith.constant 2 : index
    %c0_271 = arith.constant 0 : index
    %c0_272 = arith.constant 0 : index
    %567 = vector.load %arg11[%c2_270, %c0_271, %c0_272] : memref<11x1x32xf32, #tpu.memory_space<vmem>>, vector<1x1x32xf32>
    %568 = vector.shape_cast %567 : vector<1x1x32xf32> to vector<1x32xf32>
    %569 = vector.broadcast %568 : vector<1x32xf32> to vector<8x32xf32>
    %570 = arith.addf %566, %569 : vector<8x32xf32>
    %571 = arith.truncf %570 : vector<8x32xf32> to vector<8x32xbf16>
    %c0_273 = arith.constant 0 : index
    %c0_274 = arith.constant 0 : index
    %572 = vector.load %arg8[%c0_273, %c0_274] : memref<32x64xbf16, #tpu.memory_space<vmem>>, vector<32x64xbf16>
    %cst_275 = arith.constant dense<0.000000e+00> : vector<8x64xf32>
    %573 = tpu.matmul %571, %572, %cst_275 {dimension_numbers = #tpu.dot_dimension_numbers<[1], [0], [0], [1], [0, 0, 1, 1], [], []>} : vector<8x32xbf16>, vector<32x64xbf16>, vector<8x64xf32> -> vector<8x64xf32>
    %c0_276 = arith.constant 0 : index
    %c0_277 = arith.constant 0 : index
    %574 = vector.load %arg10[%c0_276, %c0_277] : memref<1x64xf32, #tpu.memory_space<vmem>>, vector<1x64xf32>
    %575 = vector.broadcast %574 : vector<1x64xf32> to vector<8x64xf32>
    %576 = arith.addf %573, %575 : vector<8x64xf32>
    %cst_278 = arith.constant 0.000000e+00 : f32
    %577 = vector.broadcast %cst_278 : f32 to vector<8x64xf32>
    %578 = arith.maximumf %576, %577 : vector<8x64xf32>
    %579 = arith.truncf %578 : vector<8x64xf32> to vector<8x64xbf16>
    %c0_279 = arith.constant 0 : index
    %c0_280 = arith.constant 0 : index
    %580 = vector.load %arg9[%c0_279, %c0_280] : memref<64x32xbf16, #tpu.memory_space<vmem>>, vector<64x32xbf16>
    %cst_281 = arith.constant dense<0.000000e+00> : vector<8x32xf32>
    %581 = tpu.matmul %579, %580, %cst_281 {dimension_numbers = #tpu.dot_dimension_numbers<[1], [0], [0], [1], [0, 0, 1, 1], [], []>} : vector<8x64xbf16>, vector<64x32xbf16>, vector<8x32xf32> -> vector<8x32xf32>
    %c4 = arith.constant 4 : index
    %c0_282 = arith.constant 0 : index
    %c0_283 = arith.constant 0 : index
    %582 = vector.load %arg11[%c4, %c0_282, %c0_283] : memref<11x1x32xf32, #tpu.memory_space<vmem>>, vector<1x1x32xf32>
    %583 = vector.shape_cast %582 : vector<1x1x32xf32> to vector<1x32xf32>
    %584 = vector.broadcast %583 : vector<1x32xf32> to vector<8x32xf32>
    %585 = arith.addf %581, %584 : vector<8x32xf32>
    %586 = arith.addf %570, %585 : vector<8x32xf32>
    %cst_284 = arith.constant dense<0.000000e+00> : vector<8xf32>
    %587 = vector.multi_reduction <add>, %586, %cst_284 [1] : vector<8x32xf32> to vector<8xf32>
    %588 = vector.shape_cast %587 : vector<8xf32> to vector<8x1xf32>
    %cst_285 = arith.constant 3.200000e+01 : f32
    %589 = vector.broadcast %cst_285 : f32 to vector<8x1xf32>
    %590 = arith.divf %588, %589 : vector<8x1xf32>
    %591 = vector.broadcast %590 : vector<8x1xf32> to vector<8x32xf32>
    %592 = arith.subf %586, %591 : vector<8x32xf32>
    %593 = arith.mulf %592, %592 : vector<8x32xf32>
    %cst_286 = arith.constant dense<0.000000e+00> : vector<8xf32>
    %594 = vector.multi_reduction <add>, %593, %cst_286 [1] : vector<8x32xf32> to vector<8xf32>
    %595 = vector.shape_cast %594 : vector<8xf32> to vector<8x1xf32>
    %cst_287 = arith.constant 3.200000e+01 : f32
    %596 = vector.broadcast %cst_287 : f32 to vector<8x1xf32>
    %597 = arith.divf %595, %596 : vector<8x1xf32>
    %cst_288 = arith.constant 9.99999974E-6 : f32
    %598 = vector.broadcast %cst_288 : f32 to vector<8x1xf32>
    %599 = arith.addf %597, %598 : vector<8x1xf32>
    %600 = math.rsqrt %599 : vector<8x1xf32>
    %601 = vector.broadcast %600 : vector<8x1xf32> to vector<8x32xf32>
    %602 = arith.mulf %592, %601 : vector<8x32xf32>
    %c9 = arith.constant 9 : index
    %c0_289 = arith.constant 0 : index
    %c0_290 = arith.constant 0 : index
    %603 = vector.load %arg11[%c9, %c0_289, %c0_290] : memref<11x1x32xf32, #tpu.memory_space<vmem>>, vector<1x1x32xf32>
    %604 = vector.shape_cast %603 : vector<1x1x32xf32> to vector<1x32xf32>
    %605 = vector.broadcast %604 : vector<1x32xf32> to vector<8x32xf32>
    %606 = arith.mulf %602, %605 : vector<8x32xf32>
    %c10 = arith.constant 10 : index
    %c0_291 = arith.constant 0 : index
    %c0_292 = arith.constant 0 : index
    %607 = vector.load %arg11[%c10, %c0_291, %c0_292] : memref<11x1x32xf32, #tpu.memory_space<vmem>>, vector<1x1x32xf32>
    %608 = vector.shape_cast %607 : vector<1x1x32xf32> to vector<1x32xf32>
    %609 = vector.broadcast %608 : vector<1x32xf32> to vector<8x32xf32>
    %610 = arith.addf %606, %609 : vector<8x32xf32>
    %c0_293 = arith.constant 0 : index
    %c0_294 = arith.constant 0 : index
    %c0_295 = arith.constant 0 : index
    %611 = vector.load %arg13[%c0_293, %c0_294, %c0_295] : memref<1x8x32xf32, #tpu.memory_space<vmem>>, vector<1x8x32xf32>
    %612 = vector.shape_cast %611 : vector<1x8x32xf32> to vector<8x32xf32>
    %613 = vector.shape_cast %610 : vector<8x32xf32> to vector<1x8x32xf32>
    tpu.vector_store %arg13[%c0_293, %c0_294, %c0_295], %613 {strides = array<i32>} : memref<1x8x32xf32, #tpu.memory_space<vmem>>, vector<1x8x32xf32>,
    return
  }
  func.func @transform_0(%arg0: i32) -> (i32, i32, i32) {
    %c0_i32 = arith.constant 0 : i32
    %c0_i32_0 = arith.constant 0 : i32
    %c0_i32_1 = arith.constant 0 : i32
    return %arg0, %c0_i32, %c0_i32_0 : i32, i32, i32
  }
  func.func @transform_1(%arg0: i32) -> (i32, i32, i32) {
    %c0_i32 = arith.constant 0 : i32
    %c0_i32_0 = arith.constant 0 : i32
    %c0_i32_1 = arith.constant 0 : i32
    return %arg0, %c0_i32, %c0_i32_0 : i32, i32, i32
  }
  func.func @transform_2(%arg0: i32) -> (i32, i32, i32) {
    %c0_i32 = arith.constant 0 : i32
    %c0_i32_0 = arith.constant 0 : i32
    %c0_i32_1 = arith.constant 0 : i32
    return %arg0, %c0_i32, %c0_i32_0 : i32, i32, i32
  }
  func.func @transform_3(%arg0: i32) -> (i32, i32, i32) {
    %c0_i32 = arith.constant 0 : i32
    %c0_i32_0 = arith.constant 0 : i32
    %c0_i32_1 = arith.constant 0 : i32
    return %arg0, %c0_i32, %c0_i32_0 : i32, i32, i32
  }
  func.func @transform_4(%arg0: i32) -> (i32, i32, i32, i32) {
    %c0_i32 = arith.constant 0 : i32
    %c0_i32_0 = arith.constant 0 : i32
    %c0_i32_1 = arith.constant 0 : i32
    %c0_i32_2 = arith.constant 0 : i32
    %c0_i32_3 = arith.constant 0 : i32
    return %c0_i32, %c0_i32_0, %c0_i32_1, %c0_i32_2 : i32, i32, i32, i32
  }
  func.func @transform_5(%arg0: i32) -> (i32, i32, i32, i32) {
    %c0_i32 = arith.constant 0 : i32
    %c0_i32_0 = arith.constant 0 : i32
    %c0_i32_1 = arith.constant 0 : i32
    %c0_i32_2 = arith.constant 0 : i32
    %c0_i32_3 = arith.constant 0 : i32
    return %c0_i32, %c0_i32_0, %c0_i32_1, %c0_i32_2 : i32, i32, i32, i32
  }
  func.func @transform_6(%arg0: i32) -> (i32, i32, i32) {
    %c0_i32 = arith.constant 0 : i32
    %c0_i32_0 = arith.constant 0 : i32
    %c0_i32_1 = arith.constant 0 : i32
    %c0_i32_2 = arith.constant 0 : i32
    return %c0_i32, %c0_i32_0, %c0_i32_1 : i32, i32, i32
  }
  func.func @transform_7(%arg0: i32) -> (i32, i32) {
    %c0_i32 = arith.constant 0 : i32
    %c0_i32_0 = arith.constant 0 : i32
    %c0_i32_1 = arith.constant 0 : i32
    return %c0_i32, %c0_i32_0 : i32, i32
  }
  func.func @transform_8(%arg0: i32) -> (i32, i32) {
    %c0_i32 = arith.constant 0 : i32
    %c0_i32_0 = arith.constant 0 : i32
    %c0_i32_1 = arith.constant 0 : i32
    return %c0_i32, %c0_i32_0 : i32, i32
  }
  func.func @transform_9(%arg0: i32) -> (i32, i32) {
    %c0_i32 = arith.constant 0 : i32
    %c0_i32_0 = arith.constant 0 : i32
    %c0_i32_1 = arith.constant 0 : i32
    return %c0_i32, %c0_i32_0 : i32, i32
  }
  func.func @transform_10(%arg0: i32) -> (i32, i32, i32) {
    %c0_i32 = arith.constant 0 : i32
    %c0_i32_0 = arith.constant 0 : i32
    %c0_i32_1 = arith.constant 0 : i32
    %c0_i32_2 = arith.constant 0 : i32
    return %c0_i32, %c0_i32_0, %c0_i32_1 : i32, i32, i32
  }
  func.func @transform_11(%arg0: i32) -> (i32, i32, i32, i32) {
    %c0_i32 = arith.constant 0 : i32
    %c0_i32_0 = arith.constant 0 : i32
    %c0_i32_1 = arith.constant 0 : i32
    %c0_i32_2 = arith.constant 0 : i32
    %c0_i32_3 = arith.constant 0 : i32
    return %c0_i32, %c0_i32_0, %c0_i32_1, %c0_i32_2 : i32, i32, i32, i32
  }
  func.func @transform_12(%arg0: i32) -> (i32, i32, i32) {
    %c0_i32 = arith.constant 0 : i32
    %c0_i32_0 = arith.constant 0 : i32
    %c0_i32_1 = arith.constant 0 : i32
    return %arg0, %c0_i32, %c0_i32_0 : i32, i32, i32
  }
}

</mosaic_0001>

<llo_original>
// kernel: forward.1
$region0: #{forward.1}
  #allocation0 [shape = 'u32[]', space=smem, size = 0x4, offset = 0x4, fixed_abs, tag = 'smem constant byte address 0x4 - core index']
  #allocation1 [shape = 'u32[144,128]{1,0:T(1,128)}', space=vmem, size = 0x12000, scoped, tag = 'internal scratch']
  %s0 = inlined_call_operand.vmem [shape: f32[2,8,32], index: 0, kind: input, shape index: {}]
  %s1 = inlined_call_operand.vmem [shape: f32[2,12,32], index: 1, kind: input, shape index: {}]
  %s2 = inlined_call_operand.vmem [shape: f32[2,8,32], index: 2, kind: input, shape index: {}]
  %s3 = inlined_call_operand.vmem [shape: f32[2,12,32], index: 3, kind: input, shape index: {}]
  %s4 = inlined_call_operand.vmem [shape: bf16[3,3,32,32], index: 4, kind: input, shape index: {}]
  %s5 = inlined_call_operand.hbm [shape: f32[3,3,1,32], index: 5, kind: input, shape index: {}]
  %s6 = inlined_call_operand.hbm [shape: bf16[4,32,32], index: 6, kind: input, shape index: {}]
  %s7 = inlined_call_operand.hbm [shape: bf16[32,64], index: 7, kind: input, shape index: {}]
  %s8 = inlined_call_operand.vmem [shape: bf16[64,32], index: 8, kind: input, shape index: {}]
  %s9 = inlined_call_operand.vmem [shape: f32[1,64], index: 9, kind: input, shape index: {}]
  %s10 = inlined_call_operand.hbm [shape: f32[11,1,32], index: 10, kind: input, shape index: {}]
  %s11 = inlined_call_operand.vmem [shape: bf16[3,2,32,32], index: 11, kind: input, shape index: {}]
  %s12 = inlined_call_operand.vmem [shape: f32[2,8,32], index: 12, kind: output, shape index: {}]
  %s13 = sld [smem:[#allocation0]]
  $region97: #{forward.1} parent=0
    _
  %s15 = ssub.s32 1, %s13
  %s16 = scalar_select 0, %s15, %s13
  $region1: #{forward.1} parent=0
    #allocation2 [shape = 'u8[4608]{0}', space=vmem, size = 0x1400, scoped, tag = 'input window, operand 5, single buffered']
    #allocation3 [shape = 's32[2]{0}', space=sflag, size = 0x8, scoped, tag = 'scoped memory for forward.1']
    #allocation4 [shape = 'u8[32768]{0}', space=vmem, size = 0x8000, scoped, tag = 'input window, operand 6, single buffered']
    #allocation5 [shape = 's32[1]{0}', space=sflag, size = 0x4, scoped, tag = 'scoped memory for forward.1']
    #allocation6 [shape = 'u8[8192]{0}', space=vmem, size = 0x2000, scoped, tag = 'input window, operand 7, single buffered']
    #allocation7 [shape = 'u8[5632]{0}', space=vmem, size = 0x1800, scoped, tag = 'input window, operand 10, single buffered']
    #allocation8 [shape = 's32[1]{0}', space=sflag, size = 0x4, scoped, tag = 'scoped memory for forward.1']
    %17 = vsyncpa [#allocation3], 0
    %18 = vsyncpa [#allocation5], 0
    %19 = vsyncpa [#allocation8], 0
    loop: start=0, step=1, limit=4
    $region2: #{forward.1} parent=1 // loop_pre_header
      _
    $region3: #{forward.1} parent=1 // loop_header
      %s21 = sphi 0, %s25
      %p22 = scmp.ge.s32.totalorder %s21, 4
      %s31 = sphi 0, %s33
      %s34 = sphi 0, %s31
      %s35 = sphi 0, %s34
      %s51 = sphi 0, %s35
      %s57 = sphi 0, %s59
      %s60 = sphi 0, %s57
      %s61 = sphi 0, %s60
      %s77 = sphi 0, %s61
      %s83 = sphi 0, %s85
      %s86 = sphi 0, %s83
      %s87 = sphi 0, %s86
      %s103 = sphi 0, %s87
      %s109 = sphi 0, %s111
      %s112 = sphi 0, %s109
      %s113 = sphi 0, %s112
      %s129 = sphi 0, %s113
      %s133 = sphi 0, %s133
      %s135 = sphi 0, %s133
      %s136 = sphi 0, %s135
      %s150 = sphi 0, %s136
      %s154 = sphi 0, %s154
      %s156 = sphi 0, %s154
      %s157 = sphi 0, %s156
      %s171 = sphi 0, %s157
      %s175 = sphi 0, %s175
      %s177 = sphi 0, %s175
      %s178 = sphi 0, %s177
      %s192 = sphi 0, %s178
      %s196 = sphi 0, %s196
      %s198 = sphi 0, %s196
      %s199 = sphi 0, %s198
      %s213 = sphi 0, %s199
      %s217 = sphi 0, %s217
      %s219 = sphi 0, %s217
      %s220 = sphi 0, %s219
      %s234 = sphi 0, %s220
      %s238 = sphi 0, %s238
      %s240 = sphi 0, %s238
      %s241 = sphi 0, %s240
      %s255 = sphi 0, %s241
      %s259 = sphi 0, %s259
      %s261 = sphi 0, %s259
      %s262 = sphi 0, %s261
      %s276 = sphi 0, %s262
      %s280 = sphi 0, %s280
      %s282 = sphi 0, %s280
      %s283 = sphi 0, %s282
      %s297 = sphi 0, %s283
      %s303 = sphi 0, %s305
      %s306 = sphi 0, %s303
      %s307 = sphi 0, %s306
      %s323 = sphi 0, %s307
    $region4: #{forward.1} parent=1 // loop_header_branch
      %24 = sbr.rel (%p22) target = $region8
    $region5: #{forward.1} parent=1 // loop_body
      %s26 = ssub.s32 %s21, 1
      %s27 = ssub.s32 %s21, 2
      %s28 = sadd.s32 %s21, 1
      %s29 = ssub.s32 %s21, %s28
      %p30 = scmp.eq.s32.totalorder %s29, 0
      %s32 = sadd.s32 %s31, 1
      %s33 = scalar_select %p30, %s31, %s32
      %p36 = pneg %p30
      %p37 = scmp.eq.s32.totalorder %s21, 1
      %p38 = por %p36, %p37
      %p39 = scmp.ne.s32.totalorder %s31, %s34
      %p40 = scmp.eq.s32.totalorder %s21, 0
      %p41 = por %p39, %p40
      %p42 = scmp.ne.s32.totalorder %s31, %s34
      %p43 = scmp.eq.s32.totalorder %s26, 1
      %p44 = por %p42, %p43
      %p45 = scmp.ne.s32.totalorder %s34, %s35
      %p46 = scmp.eq.s32.totalorder %s26, 0
      %p47 = por %p45, %p46
      %p48 = scmp.ne.s32.totalorder %s34, %s35
      %p49 = scmp.eq.s32.totalorder %s27, 1
      %p50 = por %p48, %p49
      %p52 = scmp.ne.s32.totalorder %s35, %s51
      %p53 = scmp.eq.s32.totalorder %s27, 0
      %p54 = por %p52, %p53
      %s55 = ssub.s32 %s21, %s28
      %p56 = scmp.eq.s32.totalorder %s55, 0
      %s58 = sadd.s32 %s57, 1
      %s59 = scalar_select %p56, %s57, %s58
      %p62 = pneg %p56
      %p63 = scmp.eq.s32.totalorder %s21, 1
      %p64 = por %p62, %p63
      %p65 = scmp.ne.s32.totalorder %s57, %s60
      %p66 = scmp.eq.s32.totalorder %s21, 0
      %p67 = por %p65, %p66
      %p68 = scmp.ne.s32.totalorder %s57, %s60
      %p69 = scmp.eq.s32.totalorder %s26, 1
      %p70 = por %p68, %p69
      %p71 = scmp.ne.s32.totalorder %s60, %s61
      %p72 = scmp.eq.s32.totalorder %s26, 0
      %p73 = por %p71, %p72
      %p74 = scmp.ne.s32.totalorder %s60, %s61
      %p75 = scmp.eq.s32.totalorder %s27, 1
      %p76 = por %p74, %p75
      %p78 = scmp.ne.s32.totalorder %s61, %s77
      %p79 = scmp.eq.s32.totalorder %s27, 0
      %p80 = por %p78, %p79
      %s81 = ssub.s32 %s21, %s28
      %p82 = scmp.eq.s32.totalorder %s81, 0
      %s84 = sadd.s32 %s83, 1
      %s85 = scalar_select %p82, %s83, %s84
      %p88 = pneg %p82
      %p89 = scmp.eq.s32.totalorder %s21, 1
      %p90 = por %p88, %p89
      %p91 = scmp.ne.s32.totalorder %s83, %s86
      %p92 = scmp.eq.s32.totalorder %s21, 0
      %p93 = por %p91, %p92
      %p94 = scmp.ne.s32.totalorder %s83, %s86
      %p95 = scmp.eq.s32.totalorder %s26, 1
      %p96 = por %p94, %p95
      %p97 = scmp.ne.s32.totalorder %s86, %s87
      %p98 = scmp.eq.s32.totalorder %s26, 0
      %p99 = por %p97, %p98
      %p100 = scmp.ne.s32.totalorder %s86, %s87
      %p101 = scmp.eq.s32.totalorder %s27, 1
      %p102 = por %p100, %p101
      %p104 = scmp.ne.s32.totalorder %s87, %s103
      %p105 = scmp.eq.s32.totalorder %s27, 0
      %p106 = por %p104, %p105
      %s107 = ssub.s32 %s21, %s28
      %p108 = scmp.eq.s32.totalorder %s107, 0
      %s110 = sadd.s32 %s109, 1
      %s111 = scalar_select %p108, %s109, %s110
      %p114 = pneg %p108
      %p115 = scmp.eq.s32.totalorder %s21, 1
      %p116 = por %p114, %p115
      %p117 = scmp.ne.s32.totalorder %s109, %s112
      %p118 = scmp.eq.s32.totalorder %s21, 0
      %p119 = por %p117, %p118
      %p120 = scmp.ne.s32.totalorder %s109, %s112
      %p121 = scmp.eq.s32.totalorder %s26, 1
      %p122 = por %p120, %p121
      %p123 = scmp.ne.s32.totalorder %s112, %s113
      %p124 = scmp.eq.s32.totalorder %s26, 0
      %p125 = por %p123, %p124
      %p126 = scmp.ne.s32.totalorder %s112, %s113
      %p127 = scmp.eq.s32.totalorder %s27, 1
      %p128 = por %p126, %p127
      %p130 = scmp.ne.s32.totalorder %s113, %s129
      %p131 = scmp.eq.s32.totalorder %s27, 0
      %p132 = por %p130, %p131
      %s134 = sadd.s32 %s133, 1
      %p137 = scmp.eq.s32.totalorder %s21, 1
      %p138 = scmp.ne.s32.totalorder %s133, %s135
      %p139 = scmp.eq.s32.totalorder %s21, 0
      %p140 = por %p138, %p139
      %p141 = scmp.ne.s32.totalorder %s133, %s135
      %p142 = scmp.eq.s32.totalorder %s26, 1
      %p143 = por %p141, %p142
      %p144 = scmp.ne.s32.totalorder %s135, %s136
      %p145 = scmp.eq.s32.totalorder %s26, 0
      %p146 = por %p144, %p145
      %p147 = scmp.ne.s32.totalorder %s135, %s136
      %p148 = scmp.eq.s32.totalorder %s27, 1
      %p149 = por %p147, %p148
      %p151 = scmp.ne.s32.totalorder %s136, %s150
      %p152 = scmp.eq.s32.totalorder %s27, 0
      %p153 = por %p151, %p152
      %s155 = sadd.s32 %s154, 1
      %p158 = scmp.eq.s32.totalorder %s21, 1
      %p159 = scmp.ne.s32.totalorder %s154, %s156
      %p160 = scmp.eq.s32.totalorder %s21, 0
      %p161 = por %p159, %p160
      %p162 = scmp.ne.s32.totalorder %s154, %s156
      %p163 = scmp.eq.s32.totalorder %s26, 1
      %p164 = por %p162, %p163
      %p165 = scmp.ne.s32.totalorder %s156, %s157
      %p166 = scmp.eq.s32.totalorder %s26, 0
      %p167 = por %p165, %p166
      %p168 = scmp.ne.s32.totalorder %s156, %s157
      %p169 = scmp.eq.s32.totalorder %s27, 1
      %p170 = por %p168, %p169
      %p172 = scmp.ne.s32.totalorder %s157, %s171
      %p173 = scmp.eq.s32.totalorder %s27, 0
      %p174 = por %p172, %p173
      %s176 = sadd.s32 %s175, 1
      %p179 = scmp.eq.s32.totalorder %s21, 1
      %p180 = scmp.ne.s32.totalorder %s175, %s177
      %p181 = scmp.eq.s32.totalorder %s21, 0
      %p182 = por %p180, %p181
      %p183 = scmp.ne.s32.totalorder %s175, %s177
      %p184 = scmp.eq.s32.totalorder %s26, 1
      %p185 = por %p183, %p184
      %p186 = scmp.ne.s32.totalorder %s177, %s178
      %p187 = scmp.eq.s32.totalorder %s26, 0
      %p188 = por %p186, %p187
      %p189 = scmp.ne.s32.totalorder %s177, %s178
      %p190 = scmp.eq.s32.totalorder %s27, 1
      %p191 = por %p189, %p190
      %p193 = scmp.ne.s32.totalorder %s178, %s192
      %p194 = scmp.eq.s32.totalorder %s27, 0
      %p195 = por %p193, %p194
      %s197 = sadd.s32 %s196, 1
      %p200 = scmp.eq.s32.totalorder %s21, 1
      %p201 = scmp.ne.s32.totalorder %s196, %s198
      %p202 = scmp.eq.s32.totalorder %s21, 0
      %p203 = por %p201, %p202
      %p204 = scmp.ne.s32.totalorder %s196, %s198
      %p205 = scmp.eq.s32.totalorder %s26, 1
      %p206 = por %p204, %p205
      %p207 = scmp.ne.s32.totalorder %s198, %s199
      %p208 = scmp.eq.s32.totalorder %s26, 0
      %p209 = por %p207, %p208
      %p210 = scmp.ne.s32.totalorder %s198, %s199
      %p211 = scmp.eq.s32.totalorder %s27, 1
      %p212 = por %p210, %p211
      %p214 = scmp.ne.s32.totalorder %s199, %s213
      %p215 = scmp.eq.s32.totalorder %s27, 0
      %p216 = por %p214, %p215
      %s218 = sadd.s32 %s217, 1
      %p221 = scmp.eq.s32.totalorder %s21, 1
      %p222 = scmp.ne.s32.totalorder %s217, %s219
      %p223 = scmp.eq.s32.totalorder %s21, 0
      %p224 = por %p222, %p223
      %p225 = scmp.ne.s32.totalorder %s217, %s219
      %p226 = scmp.eq.s32.totalorder %s26, 1
      %p227 = por %p225, %p226
      %p228 = scmp.ne.s32.totalorder %s219, %s220
      %p229 = scmp.eq.s32.totalorder %s26, 0
      %p230 = por %p228, %p229
      %p231 = scmp.ne.s32.totalorder %s219, %s220
      %p232 = scmp.eq.s32.totalorder %s27, 1
      %p233 = por %p231, %p232
      %p235 = scmp.ne.s32.totalorder %s220, %s234
      %p236 = scmp.eq.s32.totalorder %s27, 0
      %p237 = por %p235, %p236
      %s239 = sadd.s32 %s238, 1
      %p242 = scmp.eq.s32.totalorder %s21, 1
      %p243 = scmp.ne.s32.totalorder %s238, %s240
      %p244 = scmp.eq.s32.totalorder %s21, 0
      %p245 = por %p243, %p244
      %p246 = scmp.ne.s32.totalorder %s238, %s240
      %p247 = scmp.eq.s32.totalorder %s26, 1
      %p248 = por %p246, %p247
      %p249 = scmp.ne.s32.totalorder %s240, %s241
      %p250 = scmp.eq.s32.totalorder %s26, 0
      %p251 = por %p249, %p250
      %p252 = scmp.ne.s32.totalorder %s240, %s241
      %p253 = scmp.eq.s32.totalorder %s27, 1
      %p254 = por %p252, %p253
      %p256 = scmp.ne.s32.totalorder %s241, %s255
      %p257 = scmp.eq.s32.totalorder %s27, 0
      %p258 = por %p256, %p257
      %s260 = sadd.s32 %s259, 1
      %p263 = scmp.eq.s32.totalorder %s21, 1
      %p264 = scmp.ne.s32.totalorder %s259, %s261
      %p265 = scmp.eq.s32.totalorder %s21, 0
      %p266 = por %p264, %p265
      %p267 = scmp.ne.s32.totalorder %s259, %s261
      %p268 = scmp.eq.s32.totalorder %s26, 1
      %p269 = por %p267, %p268
      %p270 = scmp.ne.s32.totalorder %s261, %s262
      %p271 = scmp.eq.s32.totalorder %s26, 0
      %p272 = por %p270, %p271
      %p273 = scmp.ne.s32.totalorder %s261, %s262
      %p274 = scmp.eq.s32.totalorder %s27, 1
      %p275 = por %p273, %p274
      %p277 = scmp.ne.s32.totalorder %s262, %s276
      %p278 = scmp.eq.s32.totalorder %s27, 0
      %p279 = por %p277, %p278
      %s281 = sadd.s32 %s280, 1
      %p284 = scmp.eq.s32.totalorder %s21, 1
      %p285 = scmp.ne.s32.totalorder %s280, %s282
      %p286 = scmp.eq.s32.totalorder %s21, 0
      %p287 = por %p285, %p286
      %p288 = scmp.ne.s32.totalorder %s280, %s282
      %p289 = scmp.eq.s32.totalorder %s26, 1
      %p290 = por %p288, %p289
      %p291 = scmp.ne.s32.totalorder %s282, %s283
      %p292 = scmp.eq.s32.totalorder %s26, 0
      %p293 = por %p291, %p292
      %p294 = scmp.ne.s32.totalorder %s282, %s283
      %p295 = scmp.eq.s32.totalorder %s27, 1
      %p296 = por %p294, %p295
      %p298 = scmp.ne.s32.totalorder %s283, %s297
      %p299 = scmp.eq.s32.totalorder %s27, 0
      %p300 = por %p298, %p299
      %s301 = ssub.s32 %s21, %s28
      %p302 = scmp.eq.s32.totalorder %s301, 0
      %s304 = sadd.s32 %s303, 1
      %s305 = scalar_select %p302, %s303, %s304
      %p308 = pneg %p302
      %p309 = scmp.eq.s32.totalorder %s21, 1
      %p310 = por %p308, %p309
      %p311 = scmp.ne.s32.totalorder %s303, %s306
      %p312 = scmp.eq.s32.totalorder %s21, 0
      %p313 = por %p311, %p312
      %p314 = scmp.ne.s32.totalorder %s303, %s306
      %p315 = scmp.eq.s32.totalorder %s26, 1
      %p316 = por %p314, %p315
      %p317 = scmp.ne.s32.totalorder %s306, %s307
      %p318 = scmp.eq.s32.totalorder %s26, 0
      %p319 = por %p317, %p318
      %p320 = scmp.ne.s32.totalorder %s306, %s307
      %p321 = scmp.eq.s32.totalorder %s27, 1
      %p322 = por %p320, %p321
      %p324 = scmp.ne.s32.totalorder %s307, %s323
      %p325 = scmp.eq.s32.totalorder %s27, 0
      %p326 = por %p324, %p325
      %p327 = scmp.le.s32.totalorder 1, %s21
      %p328 = scmp.lt.s32.totalorder %s21, 3
      %p329 = pnand %p327, %p328
      %p330 = pneg %p329
      // Predicated region
      $region9: #{forward.1} parent=5 // pred_check
        _
      $region10: #{forward.1} parent=5 // pred_check_branch
        %332 = sbr.rel (%p329) target = $region12
      $region11: #{forward.1} parent=5 // pred_region
        %s333 = ssub.s32 %s21, 1
        // Predicated region
        $region13: #{forward.1} parent=11 // pred_check
          %p334 = pneg %p146
        $region14: #{forward.1} parent=11 // pred_check_branch
          %336 = sbr.rel (%p334) target = $region16
        $region15: #{forward.1} parent=11 // pred_region
          _
        $region16: #{forward.1} parent=11 // pred_fallthru
          _
        // Predicated region
        $region17: #{forward.1} parent=11 // pred_check
          %p337 = pneg %p167
        $region18: #{forward.1} parent=11 // pred_check_branch
          %339 = sbr.rel (%p337) target = $region20
        $region19: #{forward.1} parent=11 // pred_region
          %s341 = ssub.s32 144, 144
          %342 = vsyncadd [#allocation3], %s341
          %s343 = sshll.u32 [#allocation2], 4
          %s344 = int_to_ptr.vmem [resolvable:$true] %s343
          %349 = dma.hbm_to_vmem [thread:$0]  %s5, 144, %s344, [#allocation3], 16, 16, 1
        $region20: #{forward.1} parent=11 // pred_fallthru
          _
        // Predicated region
        $region21: #{forward.1} parent=11 // pred_check
          %p350 = pneg %p188
        $region22: #{forward.1} parent=11 // pred_check_branch
          %352 = sbr.rel (%p350) target = $region24
        $region23: #{forward.1} parent=11 // pred_region
          %s354 = ssub.s32 1024, 1024
          %355 = vsyncadd [#allocation5], %s354
          %s356 = sshll.u32 [#allocation4], 4
          %s357 = int_to_ptr.vmem [resolvable:$true] %s356
          %362 = dma.hbm_to_vmem [thread:$0]  %s6, 1024, %s357, [#allocation5], 64, 64, 4
        $region24: #{forward.1} parent=11 // pred_fallthru
          _
        // Predicated region
        $region25: #{forward.1} parent=11 // pred_check
          %p363 = pneg %p209
        $region26: #{forward.1} parent=11 // pred_check_branch
          %365 = sbr.rel (%p363) target = $region28
        $region27: #{forward.1} parent=11 // pred_region
          %s367 = ssub.s32 256, 256
          %368 = vsyncadd [#allocation5], %s367
          %s369 = sshll.u32 [#allocation6], 4
          %s370 = int_to_ptr.vmem [resolvable:$true] %s369
          %375 = dma.hbm_to_vmem [thread:$0]  %s7, 256, %s370, [#allocation5], 64, 64, 4
        $region28: #{forward.1} parent=11 // pred_fallthru
          _
        // Predicated region
        $region29: #{forward.1} parent=11 // pred_check
          %p376 = pneg %p230
        $region30: #{forward.1} parent=11 // pred_check_branch
          %378 = sbr.rel (%p376) target = $region32
        $region31: #{forward.1} parent=11 // pred_region
          _
        $region32: #{forward.1} parent=11 // pred_fallthru
          _
        // Predicated region
        $region33: #{forward.1} parent=11 // pred_check
          %p379 = pneg %p251
        $region34: #{forward.1} parent=11 // pred_check_branch
          %381 = sbr.rel (%p379) target = $region36
        $region35: #{forward.1} parent=11 // pred_region
          _
        $region36: #{forward.1} parent=11 // pred_fallthru
          _
        // Predicated region
        $region37: #{forward.1} parent=11 // pred_check
          %p382 = pneg %p272
        $region38: #{forward.1} parent=11 // pred_check_branch
          %384 = sbr.rel (%p382) target = $region40
        $region39: #{forward.1} parent=11 // pred_region
          %s386 = ssub.s32 176, 176
          %387 = vsyncadd [#allocation8], %s386
          %s388 = sshll.u32 [#allocation7], 4
          %s389 = int_to_ptr.vmem [resolvable:$true] %s388
          %394 = dma.hbm_to_vmem [thread:$0]  %s10, 176, %s389, [#allocation8], 16, 16, 1
        $region40: #{forward.1} parent=11 // pred_fallthru
          _
        // Predicated region
        $region41: #{forward.1} parent=11 // pred_check
          %p395 = pneg %p293
        $region42: #{forward.1} parent=11 // pred_check_branch
          %397 = sbr.rel (%p395) target = $region44
        $region43: #{forward.1} parent=11 // pred_region
          _
        $region44: #{forward.1} parent=11 // pred_fallthru
          _
      $region12: #{forward.1} parent=5 // pred_fallthru
        _
      %p398 = scmp.lt.s32.totalorder %s21, 2
      // Predicated region
      $region45: #{forward.1} parent=5 // pred_check
        %p399 = pneg %p398
      $region46: #{forward.1} parent=5 // pred_check_branch
        %401 = sbr.rel (%p399) target = $region48
      $region47: #{forward.1} parent=5 // pred_region
        // Predicated region
        $region49: #{forward.1} parent=47 // pred_check
          %p402 = pneg %p41
        $region50: #{forward.1} parent=47 // pred_check_branch
          %404 = sbr.rel (%p402) target = $region52
        $region51: #{forward.1} parent=47 // pred_region
          %p405 = scmp.lt.s32.totalorder %s21, 1
          %s406 = scalar_select %p405, %s21, 1
          %s407 = smul.addr %s406, 8
          %s408 = scalar_lea.vmem %s0, %s407
        $region52: #{forward.1} parent=47 // pred_fallthru
          _
        // Predicated region
        $region53: #{forward.1} parent=47 // pred_check
          %p409 = pneg %p67
        $region54: #{forward.1} parent=47 // pred_check_branch
          %411 = sbr.rel (%p409) target = $region56
        $region55: #{forward.1} parent=47 // pred_region
          %p412 = scmp.lt.s32.totalorder %s21, 1
          %s413 = scalar_select %p412, %s21, 1
          %s414 = smul.addr %s413, 2
          %s415 = smul.addr %s414, 8
          %s416 = scalar_lea.vmem %s1, %s415
        $region56: #{forward.1} parent=47 // pred_fallthru
          _
        // Predicated region
        $region57: #{forward.1} parent=47 // pred_check
          %p417 = pneg %p93
        $region58: #{forward.1} parent=47 // pred_check_branch
          %419 = sbr.rel (%p417) target = $region60
        $region59: #{forward.1} parent=47 // pred_region
          %p420 = scmp.lt.s32.totalorder %s21, 1
          %s421 = scalar_select %p420, %s21, 1
          %s422 = smul.addr %s421, 8
          %s423 = scalar_lea.vmem %s2, %s422
        $region60: #{forward.1} parent=47 // pred_fallthru
          _
        // Predicated region
        $region61: #{forward.1} parent=47 // pred_check
          %p424 = pneg %p119
        $region62: #{forward.1} parent=47 // pred_check_branch
          %426 = sbr.rel (%p424) target = $region64
        $region63: #{forward.1} parent=47 // pred_region
          %p427 = scmp.lt.s32.totalorder %s21, 1
          %s428 = scalar_select %p427, %s21, 1
          %s429 = smul.addr %s428, 2
          %s430 = smul.addr %s429, 8
          %s431 = scalar_lea.vmem %s3, %s430
        $region64: #{forward.1} parent=47 // pred_fallthru
          _
      $region48: #{forward.1} parent=5 // pred_fallthru
        _
      %p432 = scmp.le.s32.totalorder 1, %s21
      %p433 = scmp.lt.s32.totalorder %s21, 3
      %p434 = pnand %p432, %p433
      %p435 = pneg %p434
      // Predicated region
      $region65: #{forward.1} parent=5 // pred_check
        _
      $region66: #{forward.1} parent=5 // pred_check_branch
        %437 = sbr.rel (%p434) target = $region68
      $region67: #{forward.1} parent=5 // pred_region
        %s438 = ssub.s32 %s21, 1
        // Predicated region
        $region69: #{forward.1} parent=67 // pred_check
          %p439 = pneg %p167
        $region70: #{forward.1} parent=67 // pred_check_branch
          %441 = sbr.rel (%p439) target = $region72
        $region71: #{forward.1} parent=67 // pred_region
          %442 = dma.done [#allocation3], 144
        $region72: #{forward.1} parent=67 // pred_fallthru
          _
        // Predicated region
        $region73: #{forward.1} parent=67 // pred_check
          %p443 = pneg %p188
        $region74: #{forward.1} parent=67 // pred_check_branch
          %445 = sbr.rel (%p443) target = $region76
        $region75: #{forward.1} parent=67 // pred_region
          %446 = dma.done [#allocation5], 1024
        $region76: #{forward.1} parent=67 // pred_fallthru
          _
        // Predicated region
        $region77: #{forward.1} parent=67 // pred_check
          %p447 = pneg %p209
        $region78: #{forward.1} parent=67 // pred_check_branch
          %449 = sbr.rel (%p447) target = $region80
        $region79: #{forward.1} parent=67 // pred_region
          %450 = dma.done [#allocation5], 256
        $region80: #{forward.1} parent=67 // pred_fallthru
          _
        // Predicated region
        $region81: #{forward.1} parent=67 // pred_check
          %p451 = pneg %p272
        $region82: #{forward.1} parent=67 // pred_check_branch
          %453 = sbr.rel (%p451) target = $region84
        $region83: #{forward.1} parent=67 // pred_region
          %454 = dma.done [#allocation8], 176
        $region84: #{forward.1} parent=67 // pred_fallthru
          _
        %p455 = scmp.lt.s32.totalorder %s26, 1
        %s456 = scalar_select %p455, %s26, 1
        %s457 = smul.addr %s456, 8
        %s458 = scalar_lea.vmem %s0, %s457
        %p459 = pneg %p47
        %p460 = pneg %p44
        %p461 = scmp.lt.s32.totalorder %s26, 1
        %s462 = scalar_select %p461, %s26, 1
        %s463 = smul.addr %s462, 2
        %s464 = smul.addr %s463, 8
        %s465 = scalar_lea.vmem %s1, %s464
        %p466 = pneg %p73
        %p467 = pneg %p70
        %p468 = scmp.lt.s32.totalorder %s26, 1
        %s469 = scalar_select %p468, %s26, 1
        %s470 = smul.addr %s469, 8
        %s471 = scalar_lea.vmem %s2, %s470
        %p472 = pneg %p99
        %p473 = pneg %p96
        %p474 = scmp.lt.s32.totalorder %s26, 1
        %s475 = scalar_select %p474, %s26, 1
        %s476 = smul.addr %s475, 2
        %s477 = smul.addr %s476, 8
        %s478 = scalar_lea.vmem %s3, %s477
        %p479 = pneg %p125
        %p480 = pneg %p122
        %p481 = pneg %p146
        %p482 = pneg %p143
        %p483 = pneg %p167
        %p484 = pneg %p164
        %p485 = pneg %p188
        %p486 = pneg %p185
        %p487 = pneg %p209
        %p488 = pneg %p206
        %p489 = pneg %p230
        %p490 = pneg %p227
        %p491 = pneg %p251
        %p492 = pneg %p248
        %p493 = pneg %p272
        %p494 = pneg %p269
        %p495 = pneg %p293
        %p496 = pneg %p290
        %p497 = pneg %p319
        %p498 = pneg %p316
        %p499 = scmp.lt.s32.totalorder %s26, 1
        %s500 = scalar_select %p499, %s26, 1
        %s501 = smul.addr %s500, 8
        %s502 = scalar_lea.vmem %s12, %s501
        %p503 = scmp.lt.s32.totalorder %s26, 1
        %s504 = scalar_select %p503, %s26, 1
        %s505 = smul.addr %s504, 8
        %s506 = scalar_lea.vmem %s0, %s505
        %p507 = scmp.lt.s32.totalorder %s26, 1
        %s508 = scalar_select %p507, %s26, 1
        %s509 = smul.addr %s508, 2
        %s510 = smul.addr %s509, 8
        %s511 = scalar_lea.vmem %s1, %s510
        %p512 = scmp.lt.s32.totalorder %s26, 1
        %s513 = scalar_select %p512, %s26, 1
        %s514 = smul.addr %s513, 8
        %s515 = scalar_lea.vmem %s2, %s514
        %p516 = scmp.lt.s32.totalorder %s26, 1
        %s517 = scalar_select %p516, %s26, 1
        %s518 = smul.addr %s517, 2
        %s519 = smul.addr %s518, 8
        %s520 = scalar_lea.vmem %s3, %s519
        %p521 = scmp.lt.s32.totalorder %s26, 1
        %s522 = scalar_select %p521, %s26, 1
        %s523 = smul.addr %s522, 8
        %s524 = scalar_lea.vmem %s12, %s523
        %v528 = vlaneseq
        %v529 = vand.u32 %v528, 127
        %v530 = vld [vmem:[%s506] sm:$0xff]
        %v531 = vld [vmem:[%s511] sm:$0xff]
        %v532 = vld [vmem:[%s511 + $0x8] sm:$0xf]
        %v533 = vld [vmem:[%s520] sm:$0xff]
        %v534 = vld [vmem:[%s520 + $0x8] sm:$0xf]
        %v535 = vadd.f32 %v531, %v533
        %v536 = vadd.f32 %v532, %v534
        %v537 = vld [vmem:[%s515] sm:$0xff]
        %v538 = vadd.f32 %v530, %v537
        %v539 = vpack.c.bf16 %v530, %v530
        %v540 = vpack.c.bf16 %v536, %v535
        %v541 = vld [vmem:[%s4] sm:$0xf]
        %v542 = vld [vmem:[%s4 + $0x4] sm:$0xf]
        %v543 = vld [vmem:[%s4 + $0x8] sm:$0xf]
        %v544 = vld [vmem:[%s4 + $0xc] sm:$0xf]
        %v545 = vld [vmem:[#allocation2] sm:$0x1]
        %v547 = vlaneseq
        %v548 = vshrl.u32 %v547, 7
        %v549 = vsub.s32 0, %v548
        %v550 = vrot.slane %v545, %v549
        %v556 = vunpack.c.l.b16 %v541
        %v557 = vunpack.c.l.b16 %v542
        %v558 = vunpack.c.l.b16 %v543
        %v559 = vunpack.c.l.b16 %v544
        %v560 = vpack.c.b16 %v557, %v556
        %v561 = vpack.c.b16 %v559, %v558
        %vm564 = vcmask 261120
        %v566 = vsel %vm564, %v539, 0
        %568 = vmatprep.subr.bf16.mxu0 0
        %569 = vmatpush1.bf16.msra.mxu0 %v560
        %570 = vmatprep.subr.bf16.mxu0 0
        %571 = vmatpush1.bf16.msra.mxu0 %v561
        %572 = vmatprep.subr.bf16.mxu0 0
        %573 = vmatpush1.bf16.msra.mxu0 0
        %574 = vmatprep.subr.bf16.mxu0 0
        %575 = vmatpush1.bf16.msra.mxu0 0
        %576 = vmatprep.subr.bf16.mxu0 0
        %577 = vmatpush1.bf16.msra.mxu0 0
        %578 = vmatprep.subr.bf16.mxu0 0
        %579 = vmatpush1.bf16.msra.mxu0 0
        %580 = vmatprep.subr.bf16.mxu0 0
        %581 = vmatpush1.bf16.msra.mxu0 0
        %582 = vmatprep.subr.bf16.mxu0 0
        %583 = vmatpush1.bf16.msra.mxu0 0
        %584 = vmatprep.subr.bf16.mxu0 0
        %585 = vmatpush1.bf16.msra.mxu0 0
        %586 = vmatprep.subr.bf16.mxu0 0
        %587 = vmatpush1.bf16.msra.mxu0 0
        %588 = vmatprep.subr.bf16.mxu0 0
        %589 = vmatpush1.bf16.msra.mxu0 0
        %590 = vmatprep.subr.bf16.mxu0 0
        %591 = vmatpush1.bf16.msra.mxu0 0
        %592 = vmatprep.subr.bf16.mxu0 0
        %593 = vmatpush1.bf16.msra.mxu0 0
        %594 = vmatprep.subr.bf16.mxu0 0
        %595 = vmatpush1.bf16.msra.mxu0 0
        %596 = vmatprep.subr.bf16.mxu0 0
        %597 = vmatpush1.bf16.msra.mxu0 0
        %598 = vmatprep.subr.bf16.mxu0 0
        %599 = vmatpush1.bf16.msra.mxu0 0
        %600 = vmatprep.mubr.bf16.mxu0 0
        %601 = vmatmul.mubr.bf16.gmra.mrb[0].mxu0 %v566
        %v602 = vpop.f32.mrb[0].mxu0
        %v603 = vadd.f32 %v550, %v602
        %v604 = vpop.f32.mrb[0].mxu0
        %v605 = vpop.f32.mrb[0].mxu0
        %v606 = vpop.f32.mrb[0].mxu0
        %607 = vdwg.mxu0
        %v608 = vpack.c.bf16 %v603, %v603
        %s609 = scalar_lea.vmem %s4, 16
        %v610 = vld [vmem:[%s609] sm:$0xf]
        %v611 = vld [vmem:[%s609 + $0x4] sm:$0xf]
        %v612 = vld [vmem:[%s609 + $0x8] sm:$0xf]
        %v613 = vld [vmem:[%s609 + $0xc] sm:$0xf]
        %s614 = scalar_lea.vmem [#allocation2], 1
        %v615 = vld [vmem:[%s614] sm:$0x1]
        %v617 = vlaneseq
        %v618 = vshrl.u32 %v617, 7
        %v619 = vsub.s32 0, %v618
        %v620 = vrot.slane %v615, %v619
        %v626 = vunpack.c.l.b16 %v610
        %v627 = vunpack.c.l.b16 %v611
        %v628 = vunpack.c.l.b16 %v612
        %v629 = vunpack.c.l.b16 %v613
        %v630 = vpack.c.b16 %v627, %v626
        %v631 = vpack.c.b16 %v629, %v628
        %v635 = vsel %vm564, %v540, 0
        %637 = vmatprep.subr.bf16.mxu0 0
        %638 = vmatpush1.bf16.msra.mxu0 %v630
        %639 = vmatprep.subr.bf16.mxu0 0
        %640 = vmatpush1.bf16.msra.mxu0 %v631
        %641 = vmatprep.subr.bf16.mxu0 0
        %642 = vmatpush1.bf16.msra.mxu0 0
        %643 = vmatprep.subr.bf16.mxu0 0
        %644 = vmatpush1.bf16.msra.mxu0 0
        %645 = vmatprep.subr.bf16.mxu0 0
        %646 = vmatpush1.bf16.msra.mxu0 0
        %647 = vmatprep.subr.bf16.mxu0 0
        %648 = vmatpush1.bf16.msra.mxu0 0
        %649 = vmatprep.subr.bf16.mxu0 0
        %650 = vmatpush1.bf16.msra.mxu0 0
        %651 = vmatprep.subr.bf16.mxu0 0
        %652 = vmatpush1.bf16.msra.mxu0 0
        %653 = vmatprep.subr.bf16.mxu0 0
        %654 = vmatpush1.bf16.msra.mxu0 0
        %655 = vmatprep.subr.bf16.mxu0 0
        %656 = vmatpush1.bf16.msra.mxu0 0
        %657 = vmatprep.subr.bf16.mxu0 0
        %658 = vmatpush1.bf16.msra.mxu0 0
        %659 = vmatprep.subr.bf16.mxu0 0
        %660 = vmatpush1.bf16.msra.mxu0 0
        %661 = vmatprep.subr.bf16.mxu0 0
        %662 = vmatpush1.bf16.msra.mxu0 0
        %663 = vmatprep.subr.bf16.mxu0 0
        %664 = vmatpush1.bf16.msra.mxu0 0
        %665 = vmatprep.subr.bf16.mxu0 0
        %666 = vmatpush1.bf16.msra.mxu0 0
        %667 = vmatprep.subr.bf16.mxu0 0
        %668 = vmatpush1.bf16.msra.mxu0 0
        %669 = vmatprep.mubr.bf16.mxu0 0
        %670 = vmatmul.mubr.bf16.gmra.mrb[0].mxu0 %v635
        %v671 = vpop.f32.mrb[0].mxu0
        %v672 = vadd.f32 %v620, %v671
        %v673 = vpop.f32.mrb[0].mxu0
        %v674 = vpop.f32.mrb[0].mxu0
        %v675 = vadd.f32 %v620, %v674
        %v676 = vpop.f32.mrb[0].mxu0
        %677 = vdwg.mxu0
        %v678 = vpack.c.bf16 %v675, %v672
        %s679 = scalar_lea.vmem %s4, 32
        %v680 = vld [vmem:[%s679] sm:$0xf]
        %v681 = vld [vmem:[%s679 + $0x4] sm:$0xf]
        %v682 = vld [vmem:[%s679 + $0x8] sm:$0xf]
        %v683 = vld [vmem:[%s679 + $0xc] sm:$0xf]
        %s684 = scalar_lea.vmem [#allocation2], 2
        %v685 = vld [vmem:[%s684] sm:$0x1]
        %v687 = vlaneseq
        %v688 = vshrl.u32 %v687, 7
        %v689 = vsub.s32 0, %v688
        %v690 = vrot.slane %v685, %v689
        %v696 = vunpack.c.l.b16 %v680
        %v697 = vunpack.c.l.b16 %v681
        %v698 = vunpack.c.l.b16 %v682
        %v699 = vunpack.c.l.b16 %v683
        %v700 = vpack.c.b16 %v697, %v696
        %v701 = vpack.c.b16 %v699, %v698
        %704 = vmatprep.subr.bf16.mxu0 0
        %705 = vmatpush1.bf16.msra.mxu0 %v700
        %706 = vmatprep.subr.bf16.mxu0 0
        %707 = vmatpush1.bf16.msra.mxu0 %v701
        %708 = vmatprep.subr.bf16.mxu0 0
        %709 = vmatpush1.bf16.msra.mxu0 0
        %710 = vmatprep.subr.bf16.mxu0 0
        %711 = vmatpush1.bf16.msra.mxu0 0
        %712 = vmatprep.subr.bf16.mxu0 0
        %713 = vmatpush1.bf16.msra.mxu0 0
        %714 = vmatprep.subr.bf16.mxu0 0
        %715 = vmatpush1.bf16.msra.mxu0 0
        %716 = vmatprep.subr.bf16.mxu0 0
        %717 = vmatpush1.bf16.msra.mxu0 0
        %718 = vmatprep.subr.bf16.mxu0 0
        %719 = vmatpush1.bf16.msra.mxu0 0
        %720 = vmatprep.subr.bf16.mxu0 0
        %721 = vmatpush1.bf16.msra.mxu0 0
        %722 = vmatprep.subr.bf16.mxu0 0
        %723 = vmatpush1.bf16.msra.mxu0 0
        %724 = vmatprep.subr.bf16.mxu0 0
        %725 = vmatpush1.bf16.msra.mxu0 0
        %726 = vmatprep.subr.bf16.mxu0 0
        %727 = vmatpush1.bf16.msra.mxu0 0
        %728 = vmatprep.subr.bf16.mxu0 0
        %729 = vmatpush1.bf16.msra.mxu0 0
        %730 = vmatprep.subr.bf16.mxu0 0
        %731 = vmatpush1.bf16.msra.mxu0 0
        %732 = vmatprep.subr.bf16.mxu0 0
        %733 = vmatpush1.bf16.msra.mxu0 0
        %734 = vmatprep.subr.bf16.mxu0 0
        %735 = vmatpush1.bf16.msra.mxu0 0
        %736 = vmatprep.mubr.bf16.mxu0 0
        %737 = vmatmul.mubr.bf16.gmra.mrb[0].mxu0 %v635
        %v738 = vpop.f32.mrb[0].mxu0
        %v739 = vadd.f32 %v690, %v738
        %v740 = vpop.f32.mrb[0].mxu0
        %v741 = vpop.f32.mrb[0].mxu0
        %v742 = vadd.f32 %v690, %v741
        %v743 = vpop.f32.mrb[0].mxu0
        %744 = vdwg.mxu0
        %v745 = vpack.c.bf16 %v742, %v739
        %vm746 = vcmp.ge.s32.totalorder %v529, 0
        %vm747 = vcmp.lt.s32.totalorder %v529, 8
        %vm748 = vmand %vm746, %vm747
        %v749 = vsel %vm748, 1, 0
        %vm750 = vcmp.eq.s32.totalorder %v749, 1
        %vm751 = vmpackc.low %vm750, %vm750
        %v752 = vsel %vm751, %v608, 0
        %v754 = vsel %vm564, %v752, 0
        %v757 = vsel %vm564, %v678, 0
        %759 = vmatprep.subr.bf16.mxu0 0
        %760 = vmatpush1.bf16.xpose.msra.mxu0 %v757
        %761 = vmatprep.subr.bf16.mxu0 0
        %762 = vmatpush1.bf16.xpose.msra.mxu0 0
        %763 = vmatprep.subr.bf16.mxu0 0
        %764 = vmatpush1.bf16.xpose.msra.mxu0 0
        %765 = vmatprep.subr.bf16.mxu0 0
        %766 = vmatpush1.bf16.xpose.msra.mxu0 0
        %767 = vmatprep.subr.bf16.mxu0 0
        %768 = vmatpush1.bf16.xpose.msra.mxu0 0
        %769 = vmatprep.subr.bf16.mxu0 0
        %770 = vmatpush1.bf16.xpose.msra.mxu0 0
        %771 = vmatprep.subr.bf16.mxu0 0
        %772 = vmatpush1.bf16.xpose.msra.mxu0 0
        %773 = vmatprep.subr.bf16.mxu0 0
        %774 = vmatpush1.bf16.xpose.msra.mxu0 0
        %775 = vmatprep.subr.bf16.mxu0 0
        %776 = vmatpush1.bf16.xpose.msra.mxu0 0
        %777 = vmatprep.subr.bf16.mxu0 0
        %778 = vmatpush1.bf16.xpose.msra.mxu0 0
        %779 = vmatprep.subr.bf16.mxu0 0
        %780 = vmatpush1.bf16.xpose.msra.mxu0 0
        %781 = vmatprep.subr.bf16.mxu0 0
        %782 = vmatpush1.bf16.xpose.msra.mxu0 0
        %783 = vmatprep.subr.bf16.mxu0 0
        %784 = vmatpush1.bf16.xpose.msra.mxu0 0
        %785 = vmatprep.subr.bf16.mxu0 0
        %786 = vmatpush1.bf16.xpose.msra.mxu0 0
        %787 = vmatprep.subr.bf16.mxu0 0
        %788 = vmatpush1.bf16.xpose.msra.mxu0 0
        %789 = vmatprep.subr.bf16.mxu0 0
        %790 = vmatpush1.bf16.xpose.msra.mxu0 0
        %791 = vmatprep.mubr.bf16.mxu0 0
        %792 = vmatmul.mubr.bf16.gmra.mrb[0].mxu0 %v754
        %v793 = vpop.f32.mrb[0].mxu0
        %v794 = vadd.f32 0.0, %v793
        %v795 = vpop.f32.mrb[0].mxu0
        %v796 = vpop.f32.mrb[0].mxu0
        %v797 = vpop.f32.mrb[0].mxu0
        %798 = vdwg.mxu0
        %v799 = vmul.f32 %v794, 0.35355338
        %vm800 = vcmask 97280
        %v801 = vsel %vm800, %v799, -inf
        %802 = vmax.xlane.f32.xlu0 %v801
        %v803 = vpop.xlane.xlu0 %802
        %v804 = vsub.f32 %v799, %v803
        %v805 = vmul.f32 %v804, 1.442695
        %v806 = vpow.pop %v805
        %v807 = vsel %vm800, %v806, 0.0
        %808 = vadd.xlane.f32.xlu0 %v807
        %v809 = vpop.xlane.xlu0 %808
        %v810 = vrcp.pop %v809
        %v811 = vmul.f32 %v806, %v810
        %v812 = vsel %vm751, 65537, 0
        %v813 = vlaneseq
        %v814 = vshrl.u32 %v813, 7
        %v815 = vsub.s32 0, %v814
        %v816 = vrot.slane %v812, %v815
        %vm817 = vcmp.ne.s16.totalorder %v816, 0
        %v818 = vsel %vm817, %v745, 0
        %v819 = vpack.c.bf16 %v811, %v811
        %vm820 = vcmp.ge.s32.totalorder %v529, 8
        %vm821 = vcmp.lt.s32.totalorder %v529, 16
        %vm822 = vmand %vm820, %vm821
        %v823 = vsel %vm822, 1, 0
        %vm824 = vcmp.eq.s32.totalorder %v823, 1
        %vm825 = vmpackc.low %vm824, %vm824
        %v826 = vsel %vm825, %v608, 0
        %v828 = vsel %vm564, %v826, 0
        %830 = vmatprep.subr.bf16.mxu0 0
        %831 = vmatpush1.bf16.xpose.msra.mxu0 %v757
        %832 = vmatprep.subr.bf16.mxu0 0
        %833 = vmatpush1.bf16.xpose.msra.mxu0 0
        %834 = vmatprep.subr.bf16.mxu0 0
        %835 = vmatpush1.bf16.xpose.msra.mxu0 0
        %836 = vmatprep.subr.bf16.mxu0 0
        %837 = vmatpush1.bf16.xpose.msra.mxu0 0
        %838 = vmatprep.subr.bf16.mxu0 0
        %839 = vmatpush1.bf16.xpose.msra.mxu0 0
        %840 = vmatprep.subr.bf16.mxu0 0
        %841 = vmatpush1.bf16.xpose.msra.mxu0 0
        %842 = vmatprep.subr.bf16.mxu0 0
        %843 = vmatpush1.bf16.xpose.msra.mxu0 0
        %844 = vmatprep.subr.bf16.mxu0 0
        %845 = vmatpush1.bf16.xpose.msra.mxu0 0
        %846 = vmatprep.subr.bf16.mxu0 0
        %847 = vmatpush1.bf16.xpose.msra.mxu0 0
        %848 = vmatprep.subr.bf16.mxu0 0
        %849 = vmatpush1.bf16.xpose.msra.mxu0 0
        %850 = vmatprep.subr.bf16.mxu0 0
        %851 = vmatpush1.bf16.xpose.msra.mxu0 0
        %852 = vmatprep.subr.bf16.mxu0 0
        %853 = vmatpush1.bf16.xpose.msra.mxu0 0
        %854 = vmatprep.subr.bf16.mxu0 0
        %855 = vmatpush1.bf16.xpose.msra.mxu0 0
        %856 = vmatprep.subr.bf16.mxu0 0
        %857 = vmatpush1.bf16.xpose.msra.mxu0 0
        %858 = vmatprep.subr.bf16.mxu0 0
        %859 = vmatpush1.bf16.xpose.msra.mxu0 0
        %860 = vmatprep.subr.bf16.mxu0 0
        %861 = vmatpush1.bf16.xpose.msra.mxu0 0
        %862 = vmatprep.mubr.bf16.mxu0 0
        %863 = vmatmul.mubr.bf16.gmra.mrb[0].mxu0 %v828
        %v864 = vpop.f32.mrb[0].mxu0
        %v865 = vadd.f32 0.0, %v864
        %v866 = vpop.f32.mrb[0].mxu0
        %v867 = vpop.f32.mrb[0].mxu0
        %v868 = vpop.f32.mrb[0].mxu0
        %869 = vdwg.mxu0
        %v870 = vmul.f32 %v865, 0.35355338
        %v871 = vsel %vm800, %v870, -inf
        %872 = vmax.xlane.f32.xlu0 %v871
        %v873 = vpop.xlane.xlu0 %872
        %v874 = vsub.f32 %v870, %v873
        %v875 = vmul.f32 %v874, 1.442695
        %v876 = vpow.pop %v875
        %v877 = vsel %vm800, %v876, 0.0
        %878 = vadd.xlane.f32.xlu0 %v877
        %v879 = vpop.xlane.xlu0 %878
        %v880 = vrcp.pop %v879
        %v881 = vmul.f32 %v876, %v880
        %v882 = vsel %vm825, 65537, 0
        %v883 = vlaneseq
        %v884 = vshrl.u32 %v883, 7
        %v885 = vsub.s32 0, %v884
        %v886 = vrot.slane %v882, %v885
        %vm887 = vcmp.ne.s16.totalorder %v886, 0
        %v888 = vsel %vm887, %v745, 0
        %v889 = vpack.c.bf16 %v881, %v881
        %v891 = vsel %vm800, %v889, 0
        %vm893 = vcmask 1045504
        %v895 = vsel %vm893, %v888, 0
        %897 = vmatprep.subr.bf16.mxu0 0
        %898 = vmatpush1.bf16.msra.mxu0 %v895
        %899 = vmatprep.subr.bf16.mxu0 0
        %900 = vmatpush1.bf16.msra.mxu0 0
        %901 = vmatprep.subr.bf16.mxu0 0
        %902 = vmatpush1.bf16.msra.mxu0 0
        %903 = vmatprep.subr.bf16.mxu0 0
        %904 = vmatpush1.bf16.msra.mxu0 0
        %905 = vmatprep.subr.bf16.mxu0 0
        %906 = vmatpush1.bf16.msra.mxu0 0
        %907 = vmatprep.subr.bf16.mxu0 0
        %908 = vmatpush1.bf16.msra.mxu0 0
        %909 = vmatprep.subr.bf16.mxu0 0
        %910 = vmatpush1.bf16.msra.mxu0 0
        %911 = vmatprep.subr.bf16.mxu0 0
        %912 = vmatpush1.bf16.msra.mxu0 0
        %913 = vmatprep.subr.bf16.mxu0 0
        %914 = vmatpush1.bf16.msra.mxu0 0
        %915 = vmatprep.subr.bf16.mxu0 0
        %916 = vmatpush1.bf16.msra.mxu0 0
        %917 = vmatprep.subr.bf16.mxu0 0
        %918 = vmatpush1.bf16.msra.mxu0 0
        %919 = vmatprep.subr.bf16.mxu0 0
        %920 = vmatpush1.bf16.msra.mxu0 0
        %921 = vmatprep.subr.bf16.mxu0 0
        %922 = vmatpush1.bf16.msra.mxu0 0
        %923 = vmatprep.subr.bf16.mxu0 0
        %924 = vmatpush1.bf16.msra.mxu0 0
        %925 = vmatprep.subr.bf16.mxu0 0
        %926 = vmatpush1.bf16.msra.mxu0 0
        %927 = vmatprep.subr.bf16.mxu0 0
        %928 = vmatpush1.bf16.msra.mxu0 0
        %929 = vmatprep.mubr.bf16.mxu0 0
        %930 = vmatmul.mubr.bf16.gmra.mrb[0].mxu0 %v891
        %v931 = vpop.f32.mrb[0].mxu0
        %v932 = vadd.f32 0.0, %v931
        %v933 = vpop.f32.mrb[0].mxu0
        %v934 = vpop.f32.mrb[0].mxu0
        %v935 = vpop.f32.mrb[0].mxu0
        %936 = vdwg.mxu0
        %v938 = vsel %vm800, %v819, 0
        %v941 = vsel %vm893, %v818, 0
        %943 = vmatprep.subr.bf16.mxu0 0
        %944 = vmatpush1.bf16.msra.mxu0 %v941
        %945 = vmatprep.subr.bf16.mxu0 0
        %946 = vmatpush1.bf16.msra.mxu0 0
        %947 = vmatprep.subr.bf16.mxu0 0
        %948 = vmatpush1.bf16.msra.mxu0 0
        %949 = vmatprep.subr.bf16.mxu0 0
        %950 = vmatpush1.bf16.msra.mxu0 0
        %951 = vmatprep.subr.bf16.mxu0 0
        %952 = vmatpush1.bf16.msra.mxu0 0
        %953 = vmatprep.subr.bf16.mxu0 0
        %954 = vmatpush1.bf16.msra.mxu0 0
        %955 = vmatprep.subr.bf16.mxu0 0
        %956 = vmatpush1.bf16.msra.mxu0 0
        %957 = vmatprep.subr.bf16.mxu0 0
        %958 = vmatpush1.bf16.msra.mxu0 0
        %959 = vmatprep.subr.bf16.mxu0 0
        %960 = vmatpush1.bf16.msra.mxu0 0
        %961 = vmatprep.subr.bf16.mxu0 0
        %962 = vmatpush1.bf16.msra.mxu0 0
        %963 = vmatprep.subr.bf16.mxu0 0
        %964 = vmatpush1.bf16.msra.mxu0 0
        %965 = vmatprep.subr.bf16.mxu0 0
        %966 = vmatpush1.bf16.msra.mxu0 0
        %967 = vmatprep.subr.bf16.mxu0 0
        %968 = vmatpush1.bf16.msra.mxu0 0
        %969 = vmatprep.subr.bf16.mxu0 0
        %970 = vmatpush1.bf16.msra.mxu0 0
        %971 = vmatprep.subr.bf16.mxu0 0
        %972 = vmatpush1.bf16.msra.mxu0 0
        %973 = vmatprep.subr.bf16.mxu0 0
        %974 = vmatpush1.bf16.msra.mxu0 0
        %975 = vmatprep.mubr.bf16.mxu0 0
        %976 = vmatmul.mubr.bf16.gmra.mrb[0].mxu0 %v938
        %v977 = vpop.f32.mrb[0].mxu0
        %v978 = vadd.f32 %v932, %v977
        %v979 = vpop.f32.mrb[0].mxu0
        %v980 = vpop.f32.mrb[0].mxu0
        %v981 = vpop.f32.mrb[0].mxu0
        %982 = vdwg.mxu0
        %vm983 = vcmp.ge.s32.totalorder %v529, 16
        %vm984 = vcmp.lt.s32.totalorder %v529, 24
        %vm985 = vmand %vm983, %vm984
        %v986 = vsel %vm985, 1, 0
        %vm987 = vcmp.eq.s32.totalorder %v986, 1
        %vm988 = vmpackc.low %vm987, %vm987
        %v989 = vsel %vm988, %v608, 0
        %v991 = vsel %vm564, %v989, 0
        %993 = vmatprep.subr.bf16.mxu0 0
        %994 = vmatpush1.bf16.xpose.msra.mxu0 %v757
        %995 = vmatprep.subr.bf16.mxu0 0
        %996 = vmatpush1.bf16.xpose.msra.mxu0 0
        %997 = vmatprep.subr.bf16.mxu0 0
        %998 = vmatpush1.bf16.xpose.msra.mxu0 0
        %999 = vmatprep.subr.bf16.mxu0 0
        %1000 = vmatpush1.bf16.xpose.msra.mxu0 0
        %1001 = vmatprep.subr.bf16.mxu0 0
        %1002 = vmatpush1.bf16.xpose.msra.mxu0 0
        %1003 = vmatprep.subr.bf16.mxu0 0
        %1004 = vmatpush1.bf16.xpose.msra.mxu0 0
        %1005 = vmatprep.subr.bf16.mxu0 0
        %1006 = vmatpush1.bf16.xpose.msra.mxu0 0
        %1007 = vmatprep.subr.bf16.mxu0 0
        %1008 = vmatpush1.bf16.xpose.msra.mxu0 0
        %1009 = vmatprep.subr.bf16.mxu0 0
        %1010 = vmatpush1.bf16.xpose.msra.mxu0 0
        %1011 = vmatprep.subr.bf16.mxu0 0
        %1012 = vmatpush1.bf16.xpose.msra.mxu0 0
        %1013 = vmatprep.subr.bf16.mxu0 0
        %1014 = vmatpush1.bf16.xpose.msra.mxu0 0
        %1015 = vmatprep.subr.bf16.mxu0 0
        %1016 = vmatpush1.bf16.xpose.msra.mxu0 0
        %1017 = vmatprep.subr.bf16.mxu0 0
        %1018 = vmatpush1.bf16.xpose.msra.mxu0 0
        %1019 = vmatprep.subr.bf16.mxu0 0
        %1020 = vmatpush1.bf16.xpose.msra.mxu0 0
        %1021 = vmatprep.subr.bf16.mxu0 0
        %1022 = vmatpush1.bf16.xpose.msra.mxu0 0
        %1023 = vmatprep.subr.bf16.mxu0 0
        %1024 = vmatpush1.bf16.xpose.msra.mxu0 0
        %1025 = vmatprep.mubr.bf16.mxu0 0
        %1026 = vmatmul.mubr.bf16.gmra.mrb[0].mxu0 %v991
        %v1027 = vpop.f32.mrb[0].mxu0
        %v1028 = vadd.f32 0.0, %v1027
        %v1029 = vpop.f32.mrb[0].mxu0
        %v1030 = vpop.f32.mrb[0].mxu0
        %v1031 = vpop.f32.mrb[0].mxu0
        %1032 = vdwg.mxu0
        %v1033 = vmul.f32 %v1028, 0.35355338
        %v1034 = vsel %vm800, %v1033, -inf
        %1035 = vmax.xlane.f32.xlu0 %v1034
        %v1036 = vpop.xlane.xlu0 %1035
        %v1037 = vsub.f32 %v1033, %v1036
        %v1038 = vmul.f32 %v1037, 1.442695
        %v1039 = vpow.pop %v1038
        %v1040 = vsel %vm800, %v1039, 0.0
        %1041 = vadd.xlane.f32.xlu0 %v1040
        %v1042 = vpop.xlane.xlu0 %1041
        %v1043 = vrcp.pop %v1042
        %v1044 = vmul.f32 %v1039, %v1043
        %v1045 = vsel %vm988, 65537, 0
        %v1046 = vlaneseq
        %v1047 = vshrl.u32 %v1046, 7
        %v1048 = vsub.s32 0, %v1047
        %v1049 = vrot.slane %v1045, %v1048
        %vm1050 = vcmp.ne.s16.totalorder %v1049, 0
        %v1051 = vsel %vm1050, %v745, 0
        %v1052 = vpack.c.bf16 %v1044, %v1044
        %v1054 = vsel %vm800, %v1052, 0
        %v1057 = vsel %vm893, %v1051, 0
        %1059 = vmatprep.subr.bf16.mxu0 0
        %1060 = vmatpush1.bf16.msra.mxu0 %v1057
        %1061 = vmatprep.subr.bf16.mxu0 0
        %1062 = vmatpush1.bf16.msra.mxu0 0
        %1063 = vmatprep.subr.bf16.mxu0 0
        %1064 = vmatpush1.bf16.msra.mxu0 0
        %1065 = vmatprep.subr.bf16.mxu0 0
        %1066 = vmatpush1.bf16.msra.mxu0 0
        %1067 = vmatprep.subr.bf16.mxu0 0
        %1068 = vmatpush1.bf16.msra.mxu0 0
        %1069 = vmatprep.subr.bf16.mxu0 0
        %1070 = vmatpush1.bf16.msra.mxu0 0
        %1071 = vmatprep.subr.bf16.mxu0 0
        %1072 = vmatpush1.bf16.msra.mxu0 0
        %1073 = vmatprep.subr.bf16.mxu0 0
        %1074 = vmatpush1.bf16.msra.mxu0 0
        %1075 = vmatprep.subr.bf16.mxu0 0
        %1076 = vmatpush1.bf16.msra.mxu0 0
        %1077 = vmatprep.subr.bf16.mxu0 0
        %1078 = vmatpush1.bf16.msra.mxu0 0
        %1079 = vmatprep.subr.bf16.mxu0 0
        %1080 = vmatpush1.bf16.msra.mxu0 0
        %1081 = vmatprep.subr.bf16.mxu0 0
        %1082 = vmatpush1.bf16.msra.mxu0 0
        %1083 = vmatprep.subr.bf16.mxu0 0
        %1084 = vmatpush1.bf16.msra.mxu0 0
        %1085 = vmatprep.subr.bf16.mxu0 0
        %1086 = vmatpush1.bf16.msra.mxu0 0
        %1087 = vmatprep.subr.bf16.mxu0 0
        %1088 = vmatpush1.bf16.msra.mxu0 0
        %1089 = vmatprep.subr.bf16.mxu0 0
        %1090 = vmatpush1.bf16.msra.mxu0 0
        %1091 = vmatprep.mubr.bf16.mxu0 0
        %1092 = vmatmul.mubr.bf16.gmra.mrb[0].mxu0 %v1054
        %v1093 = vpop.f32.mrb[0].mxu0
        %v1094 = vadd.f32 0.0, %v1093
        %v1095 = vpop.f32.mrb[0].mxu0
        %v1096 = vpop.f32.mrb[0].mxu0
        %v1097 = vpop.f32.mrb[0].mxu0
        %1098 = vdwg.mxu0
        %v1099 = vadd.f32 %v978, %v1094
        %vm1100 = vcmp.ge.s32.totalorder %v529, 24
        %vm1101 = vcmp.lt.s32.totalorder %v529, 32
        %vm1102 = vmand %vm1100, %vm1101
        %v1103 = vsel %vm1102, 1, 0
        %vm1104 = vcmp.eq.s32.totalorder %v1103, 1
        %vm1105 = vmpackc.low %vm1104, %vm1104
        %v1106 = vsel %vm1105, %v608, 0
        %v1108 = vsel %vm564, %v1106, 0
        %1110 = vmatprep.subr.bf16.mxu0 0
        %1111 = vmatpush1.bf16.xpose.msra.mxu0 %v757
        %1112 = vmatprep.subr.bf16.mxu0 0
        %1113 = vmatpush1.bf16.xpose.msra.mxu0 0
        %1114 = vmatprep.subr.bf16.mxu0 0
        %1115 = vmatpush1.bf16.xpose.msra.mxu0 0
        %1116 = vmatprep.subr.bf16.mxu0 0
        %1117 = vmatpush1.bf16.xpose.msra.mxu0 0
        %1118 = vmatprep.subr.bf16.mxu0 0
        %1119 = vmatpush1.bf16.xpose.msra.mxu0 0
        %1120 = vmatprep.subr.bf16.mxu0 0
        %1121 = vmatpush1.bf16.xpose.msra.mxu0 0
        %1122 = vmatprep.subr.bf16.mxu0 0
        %1123 = vmatpush1.bf16.xpose.msra.mxu0 0
        %1124 = vmatprep.subr.bf16.mxu0 0
        %1125 = vmatpush1.bf16.xpose.msra.mxu0 0
        %1126 = vmatprep.subr.bf16.mxu0 0
        %1127 = vmatpush1.bf16.xpose.msra.mxu0 0
        %1128 = vmatprep.subr.bf16.mxu0 0
        %1129 = vmatpush1.bf16.xpose.msra.mxu0 0
        %1130 = vmatprep.subr.bf16.mxu0 0
        %1131 = vmatpush1.bf16.xpose.msra.mxu0 0
        %1132 = vmatprep.subr.bf16.mxu0 0
        %1133 = vmatpush1.bf16.xpose.msra.mxu0 0
        %1134 = vmatprep.subr.bf16.mxu0 0
        %1135 = vmatpush1.bf16.xpose.msra.mxu0 0
        %1136 = vmatprep.subr.bf16.mxu0 0
        %1137 = vmatpush1.bf16.xpose.msra.mxu0 0
        %1138 = vmatprep.subr.bf16.mxu0 0
        %1139 = vmatpush1.bf16.xpose.msra.mxu0 0
        %1140 = vmatprep.subr.bf16.mxu0 0
        %1141 = vmatpush1.bf16.xpose.msra.mxu0 0
        %1142 = vmatprep.mubr.bf16.mxu0 0
        %1143 = vmatmul.mubr.bf16.gmra.mrb[0].mxu0 %v1108
        %v1144 = vpop.f32.mrb[0].mxu0
        %v1145 = vadd.f32 0.0, %v1144
        %v1146 = vpop.f32.mrb[0].mxu0
        %v1147 = vpop.f32.mrb[0].mxu0
        %v1148 = vpop.f32.mrb[0].mxu0
        %1149 = vdwg.mxu0
        %v1150 = vmul.f32 %v1145, 0.35355338
        %v1151 = vsel %vm800, %v1150, -inf
        %1152 = vmax.xlane.f32.xlu0 %v1151
        %v1153 = vpop.xlane.xlu0 %1152
        %v1154 = vsub.f32 %v1150, %v1153
        %v1155 = vmul.f32 %v1154, 1.442695
        %v1156 = vpow.pop %v1155
        %v1157 = vsel %vm800, %v1156, 0.0
        %1158 = vadd.xlane.f32.xlu0 %v1157
        %v1159 = vpop.xlane.xlu0 %1158
        %v1160 = vrcp.pop %v1159
        %v1161 = vmul.f32 %v1156, %v1160
        %v1162 = vsel %vm1105, 65537, 0
        %v1163 = vlaneseq
        %v1164 = vshrl.u32 %v1163, 7
        %v1165 = vsub.s32 0, %v1164
        %v1166 = vrot.slane %v1162, %v1165
        %vm1167 = vcmp.ne.s16.totalorder %v1166, 0
        %v1168 = vsel %vm1167, %v745, 0
        %v1169 = vpack.c.bf16 %v1161, %v1161
        %v1171 = vsel %vm800, %v1169, 0
        %v1174 = vsel %vm893, %v1168, 0
        %1176 = vmatprep.subr.bf16.mxu0 0
        %1177 = vmatpush1.bf16.msra.mxu0 %v1174
        %1178 = vmatprep.subr.bf16.mxu0 0
        %1179 = vmatpush1.bf16.msra.mxu0 0
        %1180 = vmatprep.subr.bf16.mxu0 0
        %1181 = vmatpush1.bf16.msra.mxu0 0
        %1182 = vmatprep.subr.bf16.mxu0 0
        %1183 = vmatpush1.bf16.msra.mxu0 0
        %1184 = vmatprep.subr.bf16.mxu0 0
        %1185 = vmatpush1.bf16.msra.mxu0 0
        %1186 = vmatprep.subr.bf16.mxu0 0
        %1187 = vmatpush1.bf16.msra.mxu0 0
        %1188 = vmatprep.subr.bf16.mxu0 0
        %1189 = vmatpush1.bf16.msra.mxu0 0
        %1190 = vmatprep.subr.bf16.mxu0 0
        %1191 = vmatpush1.bf16.msra.mxu0 0
        %1192 = vmatprep.subr.bf16.mxu0 0
        %1193 = vmatpush1.bf16.msra.mxu0 0
        %1194 = vmatprep.subr.bf16.mxu0 0
        %1195 = vmatpush1.bf16.msra.mxu0 0
        %1196 = vmatprep.subr.bf16.mxu0 0
        %1197 = vmatpush1.bf16.msra.mxu0 0
        %1198 = vmatprep.subr.bf16.mxu0 0
        %1199 = vmatpush1.bf16.msra.mxu0 0
        %1200 = vmatprep.subr.bf16.mxu0 0
        %1201 = vmatpush1.bf16.msra.mxu0 0
        %1202 = vmatprep.subr.bf16.mxu0 0
        %1203 = vmatpush1.bf16.msra.mxu0 0
        %1204 = vmatprep.subr.bf16.mxu0 0
        %1205 = vmatpush1.bf16.msra.mxu0 0
        %1206 = vmatprep.subr.bf16.mxu0 0
        %1207 = vmatpush1.bf16.msra.mxu0 0
        %1208 = vmatprep.mubr.bf16.mxu0 0
        %1209 = vmatmul.mubr.bf16.gmra.mrb[0].mxu0 %v1171
        %v1210 = vpop.f32.mrb[0].mxu0
        %v1211 = vadd.f32 0.0, %v1210
        %v1212 = vpop.f32.mrb[0].mxu0
        %v1213 = vpop.f32.mrb[0].mxu0
        %v1214 = vpop.f32.mrb[0].mxu0
        %1215 = vdwg.mxu0
        %v1216 = vadd.f32 %v1099, %v1211
        %v1217 = vpack.c.bf16 %v1216, %v1216
        %v1218 = vld [vmem:[#allocation4] sm:$0xf]
        %v1219 = vld [vmem:[#allocation4 + $0x4] sm:$0xf]
        %v1220 = vld [vmem:[#allocation4 + $0x8] sm:$0xf]
        %v1221 = vld [vmem:[#allocation4 + $0xc] sm:$0xf]
        %v1222 = vld [vmem:[#allocation7] sm:$0x1]
        %v1224 = vlaneseq
        %v1225 = vshrl.u32 %v1224, 7
        %v1226 = vsub.s32 0, %v1225
        %v1227 = vrot.slane %v1222, %v1226
        %v1233 = vunpack.c.l.b16 %v1218
        %v1234 = vunpack.c.l.b16 %v1219
        %v1235 = vunpack.c.l.b16 %v1220
        %v1236 = vunpack.c.l.b16 %v1221
        %v1237 = vpack.c.b16 %v1234, %v1233
        %v1238 = vpack.c.b16 %v1236, %v1235
        %v1242 = vsel %vm564, %v1217, 0
        %1244 = vmatprep.subr.bf16.mxu0 0
        %1245 = vmatpush1.bf16.msra.mxu0 %v1237
        %1246 = vmatprep.subr.bf16.mxu0 0
        %1247 = vmatpush1.bf16.msra.mxu0 %v1238
        %1248 = vmatprep.subr.bf16.mxu0 0
        %1249 = vmatpush1.bf16.msra.mxu0 0
        %1250 = vmatprep.subr.bf16.mxu0 0
        %1251 = vmatpush1.bf16.msra.mxu0 0
        %1252 = vmatprep.subr.bf16.mxu0 0
        %1253 = vmatpush1.bf16.msra.mxu0 0
        %1254 = vmatprep.subr.bf16.mxu0 0
        %1255 = vmatpush1.bf16.msra.mxu0 0
        %1256 = vmatprep.subr.bf16.mxu0 0
        %1257 = vmatpush1.bf16.msra.mxu0 0
        %1258 = vmatprep.subr.bf16.mxu0 0
        %1259 = vmatpush1.bf16.msra.mxu0 0
        %1260 = vmatprep.subr.bf16.mxu0 0
        %1261 = vmatpush1.bf16.msra.mxu0 0
        %1262 = vmatprep.subr.bf16.mxu0 0
        %1263 = vmatpush1.bf16.msra.mxu0 0
        %1264 = vmatprep.subr.bf16.mxu0 0
        %1265 = vmatpush1.bf16.msra.mxu0 0
        %1266 = vmatprep.subr.bf16.mxu0 0
        %1267 = vmatpush1.bf16.msra.mxu0 0
        %1268 = vmatprep.subr.bf16.mxu0 0
        %1269 = vmatpush1.bf16.msra.mxu0 0
        %1270 = vmatprep.subr.bf16.mxu0 0
        %1271 = vmatpush1.bf16.msra.mxu0 0
        %1272 = vmatprep.subr.bf16.mxu0 0
        %1273 = vmatpush1.bf16.msra.mxu0 0
        %1274 = vmatprep.subr.bf16.mxu0 0
        %1275 = vmatpush1.bf16.msra.mxu0 0
        %1276 = vmatprep.mubr.bf16.mxu0 0
        %1277 = vmatmul.mubr.bf16.gmra.mrb[0].mxu0 %v1242
        %v1278 = vpop.f32.mrb[0].mxu0
        %v1279 = vadd.f32 %v1227, %v1278
        %v1280 = vpop.f32.mrb[0].mxu0
        %v1281 = vpop.f32.mrb[0].mxu0
        %v1282 = vpop.f32.mrb[0].mxu0
        %1283 = vdwg.mxu0
        %v1284 = vpack.c.bf16 %v1279, %v1279
        %s1285 = scalar_lea.vmem [#allocation4], 48
        %v1286 = vld [vmem:[%s1285] sm:$0xf]
        %v1287 = vld [vmem:[%s1285 + $0x4] sm:$0xf]
        %v1288 = vld [vmem:[%s1285 + $0x8] sm:$0xf]
        %v1289 = vld [vmem:[%s1285 + $0xc] sm:$0xf]
        %s1290 = scalar_lea.vmem [#allocation7], 3
        %v1291 = vld [vmem:[%s1290] sm:$0x1]
        %v1293 = vlaneseq
        %v1294 = vshrl.u32 %v1293, 7
        %v1295 = vsub.s32 0, %v1294
        %v1296 = vrot.slane %v1291, %v1295
        %v1302 = vunpack.c.l.b16 %v1286
        %v1303 = vunpack.c.l.b16 %v1287
        %v1304 = vunpack.c.l.b16 %v1288
        %v1305 = vunpack.c.l.b16 %v1289
        %v1306 = vpack.c.b16 %v1303, %v1302
        %v1307 = vpack.c.b16 %v1305, %v1304
        %v1311 = vsel %vm564, %v1284, 0
        %1313 = vmatprep.subr.bf16.mxu0 0
        %1314 = vmatpush1.bf16.msra.mxu0 %v1306
        %1315 = vmatprep.subr.bf16.mxu0 0
        %1316 = vmatpush1.bf16.msra.mxu0 %v1307
        %1317 = vmatprep.subr.bf16.mxu0 0
        %1318 = vmatpush1.bf16.msra.mxu0 0
        %1319 = vmatprep.subr.bf16.mxu0 0
        %1320 = vmatpush1.bf16.msra.mxu0 0
        %1321 = vmatprep.subr.bf16.mxu0 0
        %1322 = vmatpush1.bf16.msra.mxu0 0
        %1323 = vmatprep.subr.bf16.mxu0 0
        %1324 = vmatpush1.bf16.msra.mxu0 0
        %1325 = vmatprep.subr.bf16.mxu0 0
        %1326 = vmatpush1.bf16.msra.mxu0 0
        %1327 = vmatprep.subr.bf16.mxu0 0
        %1328 = vmatpush1.bf16.msra.mxu0 0
        %1329 = vmatprep.subr.bf16.mxu0 0
        %1330 = vmatpush1.bf16.msra.mxu0 0
        %1331 = vmatprep.subr.bf16.mxu0 0
        %1332 = vmatpush1.bf16.msra.mxu0 0
        %1333 = vmatprep.subr.bf16.mxu0 0
        %1334 = vmatpush1.bf16.msra.mxu0 0
        %1335 = vmatprep.subr.bf16.mxu0 0
        %1336 = vmatpush1.bf16.msra.mxu0 0
        %1337 = vmatprep.subr.bf16.mxu0 0
        %1338 = vmatpush1.bf16.msra.mxu0 0
        %1339 = vmatprep.subr.bf16.mxu0 0
        %1340 = vmatpush1.bf16.msra.mxu0 0
        %1341 = vmatprep.subr.bf16.mxu0 0
        %1342 = vmatpush1.bf16.msra.mxu0 0
        %1343 = vmatprep.subr.bf16.mxu0 0
        %1344 = vmatpush1.bf16.msra.mxu0 0
        %1345 = vmatprep.mubr.bf16.mxu0 0
        %1346 = vmatmul.mubr.bf16.gmra.mrb[0].mxu0 %v1311
        %v1347 = vpop.f32.mrb[0].mxu0
        %v1348 = vadd.f32 %v1296, %v1347
        %v1349 = vpop.f32.mrb[0].mxu0
        %v1350 = vpop.f32.mrb[0].mxu0
        %v1351 = vpop.f32.mrb[0].mxu0
        %1352 = vdwg.mxu0
        %v1353 = vsel %vm564, %v1348, 0.0
        %1354 = vadd.xlane.f32.xlu0 %v1353
        %v1355 = vpop.xlane.xlu0 %1354
        %v1356 = vrcp.pop 32.0
        %v1357 = vmul.f32 %v1355, %v1356
        %v1358 = vsub.f32 %v1348, %v1357
        %v1359 = vmul.f32 %v1358, %v1358
        %v1360 = vsel %vm564, %v1359, 0.0
        %1361 = vadd.xlane.f32.xlu0 %v1360
        %v1362 = vpop.xlane.xlu0 %1361
        %v1363 = vmul.f32 %v1362, %v1356
        %v1364 = vadd.f32 %v1363, 1e-05
        %v1365 = vrsqrt.pop %v1364
        %v1366 = vmul.f32 %v1358, %v1365
        %s1367 = scalar_lea.vmem [#allocation7], 5
        %v1368 = vld [vmem:[%s1367] sm:$0x1]
        %v1370 = vlaneseq
        %v1371 = vshrl.u32 %v1370, 7
        %v1372 = vsub.s32 0, %v1371
        %v1373 = vrot.slane %v1368, %v1372
        %v1375 = vmul.f32 %v1366, %v1373
        %s1376 = scalar_lea.vmem [#allocation7], 6
        %v1377 = vld [vmem:[%s1376] sm:$0x1]
        %v1379 = vlaneseq
        %v1380 = vshrl.u32 %v1379, 7
        %v1381 = vsub.s32 0, %v1380
        %v1382 = vrot.slane %v1377, %v1381
        %v1384 = vadd.f32 %v1375, %v1382
        %v1385 = vpack.c.bf16 %v1384, %v1384
        %s1386 = scalar_lea.vmem %s4, 48
        %v1387 = vld [vmem:[%s1386] sm:$0xf]
        %v1388 = vld [vmem:[%s1386 + $0x4] sm:$0xf]
        %v1389 = vld [vmem:[%s1386 + $0x8] sm:$0xf]
        %v1390 = vld [vmem:[%s1386 + $0xc] sm:$0xf]
        %s1391 = scalar_lea.vmem [#allocation2], 3
        %v1392 = vld [vmem:[%s1391] sm:$0x1]
        %v1394 = vlaneseq
        %v1395 = vshrl.u32 %v1394, 7
        %v1396 = vsub.s32 0, %v1395
        %v1397 = vrot.slane %v1392, %v1396
        %v1403 = vunpack.c.l.b16 %v1387
        %v1404 = vunpack.c.l.b16 %v1388
        %v1405 = vunpack.c.l.b16 %v1389
        %v1406 = vunpack.c.l.b16 %v1390
        %v1407 = vpack.c.b16 %v1404, %v1403
        %v1408 = vpack.c.b16 %v1406, %v1405
        %v1412 = vsel %vm564, %v1385, 0
        %1414 = vmatprep.subr.bf16.mxu0 0
        %1415 = vmatpush1.bf16.msra.mxu0 %v1407
        %1416 = vmatprep.subr.bf16.mxu0 0
        %1417 = vmatpush1.bf16.msra.mxu0 %v1408
        %1418 = vmatprep.subr.bf16.mxu0 0
        %1419 = vmatpush1.bf16.msra.mxu0 0
        %1420 = vmatprep.subr.bf16.mxu0 0
        %1421 = vmatpush1.bf16.msra.mxu0 0
        %1422 = vmatprep.subr.bf16.mxu0 0
        %1423 = vmatpush1.bf16.msra.mxu0 0
        %1424 = vmatprep.subr.bf16.mxu0 0
        %1425 = vmatpush1.bf16.msra.mxu0 0
        %1426 = vmatprep.subr.bf16.mxu0 0
        %1427 = vmatpush1.bf16.msra.mxu0 0
        %1428 = vmatprep.subr.bf16.mxu0 0
        %1429 = vmatpush1.bf16.msra.mxu0 0
        %1430 = vmatprep.subr.bf16.mxu0 0
        %1431 = vmatpush1.bf16.msra.mxu0 0
        %1432 = vmatprep.subr.bf16.mxu0 0
        %1433 = vmatpush1.bf16.msra.mxu0 0
        %1434 = vmatprep.subr.bf16.mxu0 0
        %1435 = vmatpush1.bf16.msra.mxu0 0
        %1436 = vmatprep.subr.bf16.mxu0 0
        %1437 = vmatpush1.bf16.msra.mxu0 0
        %1438 = vmatprep.subr.bf16.mxu0 0
        %1439 = vmatpush1.bf16.msra.mxu0 0
        %1440 = vmatprep.subr.bf16.mxu0 0
        %1441 = vmatpush1.bf16.msra.mxu0 0
        %1442 = vmatprep.subr.bf16.mxu0 0
        %1443 = vmatpush1.bf16.msra.mxu0 0
        %1444 = vmatprep.subr.bf16.mxu0 0
        %1445 = vmatpush1.bf16.msra.mxu0 0
        %1446 = vmatprep.mubr.bf16.mxu0 0
        %1447 = vmatmul.mubr.bf16.gmra.mrb[0].mxu0 %v1412
        %v1448 = vpop.f32.mrb[0].mxu0
        %v1449 = vadd.f32 %v1397, %v1448
        %v1450 = vpop.f32.mrb[0].mxu0
        %v1451 = vpop.f32.mrb[0].mxu0
        %v1452 = vpop.f32.mrb[0].mxu0
        %1453 = vdwg.mxu0
        %v1454 = vpack.c.bf16 %v1449, %v1449
        %s1455 = scalar_lea.vmem %s4, 64
        %v1456 = vld [vmem:[%s1455] sm:$0xf]
        %v1457 = vld [vmem:[%s1455 + $0x4] sm:$0xf]
        %v1458 = vld [vmem:[%s1455 + $0x8] sm:$0xf]
        %v1459 = vld [vmem:[%s1455 + $0xc] sm:$0xf]
        %s1460 = scalar_lea.vmem [#allocation2], 4
        %v1461 = vld [vmem:[%s1460] sm:$0x1]
        %v1463 = vlaneseq
        %v1464 = vshrl.u32 %v1463, 7
        %v1465 = vsub.s32 0, %v1464
        %v1466 = vrot.slane %v1461, %v1465
        %v1472 = vunpack.c.l.b16 %v1456
        %v1473 = vunpack.c.l.b16 %v1457
        %v1474 = vunpack.c.l.b16 %v1458
        %v1475 = vunpack.c.l.b16 %v1459
        %v1476 = vpack.c.b16 %v1473, %v1472
        %v1477 = vpack.c.b16 %v1475, %v1474
        %1480 = vmatprep.subr.bf16.mxu0 0
        %1481 = vmatpush1.bf16.msra.mxu0 %v1476
        %1482 = vmatprep.subr.bf16.mxu0 0
        %1483 = vmatpush1.bf16.msra.mxu0 %v1477
        %1484 = vmatprep.subr.bf16.mxu0 0
        %1485 = vmatpush1.bf16.msra.mxu0 0
        %1486 = vmatprep.subr.bf16.mxu0 0
        %1487 = vmatpush1.bf16.msra.mxu0 0
        %1488 = vmatprep.subr.bf16.mxu0 0
        %1489 = vmatpush1.bf16.msra.mxu0 0
        %1490 = vmatprep.subr.bf16.mxu0 0
        %1491 = vmatpush1.bf16.msra.mxu0 0
        %1492 = vmatprep.subr.bf16.mxu0 0
        %1493 = vmatpush1.bf16.msra.mxu0 0
        %1494 = vmatprep.subr.bf16.mxu0 0
        %1495 = vmatpush1.bf16.msra.mxu0 0
        %1496 = vmatprep.subr.bf16.mxu0 0
        %1497 = vmatpush1.bf16.msra.mxu0 0
        %1498 = vmatprep.subr.bf16.mxu0 0
        %1499 = vmatpush1.bf16.msra.mxu0 0
        %1500 = vmatprep.subr.bf16.mxu0 0
        %1501 = vmatpush1.bf16.msra.mxu0 0
        %1502 = vmatprep.subr.bf16.mxu0 0
        %1503 = vmatpush1.bf16.msra.mxu0 0
        %1504 = vmatprep.subr.bf16.mxu0 0
        %1505 = vmatpush1.bf16.msra.mxu0 0
        %1506 = vmatprep.subr.bf16.mxu0 0
        %1507 = vmatpush1.bf16.msra.mxu0 0
        %1508 = vmatprep.subr.bf16.mxu0 0
        %1509 = vmatpush1.bf16.msra.mxu0 0
        %1510 = vmatprep.subr.bf16.mxu0 0
        %1511 = vmatpush1.bf16.msra.mxu0 0
        %1512 = vmatprep.mubr.bf16.mxu0 0
        %1513 = vmatmul.mubr.bf16.gmra.mrb[0].mxu0 %v1412
        %v1514 = vpop.f32.mrb[0].mxu0
        %v1515 = vadd.f32 %v1466, %v1514
        %v1516 = vpop.f32.mrb[0].mxu0
        %v1517 = vpop.f32.mrb[0].mxu0
        %v1518 = vpop.f32.mrb[0].mxu0
        %1519 = vdwg.mxu0
        %v1520 = vpack.c.bf16 %v1515, %v1515
        %s1521 = scalar_lea.vmem %s4, 80
        %v1522 = vld [vmem:[%s1521] sm:$0xf]
        %v1523 = vld [vmem:[%s1521 + $0x4] sm:$0xf]
        %v1524 = vld [vmem:[%s1521 + $0x8] sm:$0xf]
        %v1525 = vld [vmem:[%s1521 + $0xc] sm:$0xf]
        %s1526 = scalar_lea.vmem [#allocation2], 5
        %v1527 = vld [vmem:[%s1526] sm:$0x1]
        %v1529 = vlaneseq
        %v1530 = vshrl.u32 %v1529, 7
        %v1531 = vsub.s32 0, %v1530
        %v1532 = vrot.slane %v1527, %v1531
        %v1538 = vunpack.c.l.b16 %v1522
        %v1539 = vunpack.c.l.b16 %v1523
        %v1540 = vunpack.c.l.b16 %v1524
        %v1541 = vunpack.c.l.b16 %v1525
        %v1542 = vpack.c.b16 %v1539, %v1538
        %v1543 = vpack.c.b16 %v1541, %v1540
        %1546 = vmatprep.subr.bf16.mxu0 0
        %1547 = vmatpush1.bf16.msra.mxu0 %v1542
        %1548 = vmatprep.subr.bf16.mxu0 0
        %1549 = vmatpush1.bf16.msra.mxu0 %v1543
        %1550 = vmatprep.subr.bf16.mxu0 0
        %1551 = vmatpush1.bf16.msra.mxu0 0
        %1552 = vmatprep.subr.bf16.mxu0 0
        %1553 = vmatpush1.bf16.msra.mxu0 0
        %1554 = vmatprep.subr.bf16.mxu0 0
        %1555 = vmatpush1.bf16.msra.mxu0 0
        %1556 = vmatprep.subr.bf16.mxu0 0
        %1557 = vmatpush1.bf16.msra.mxu0 0
        %1558 = vmatprep.subr.bf16.mxu0 0
        %1559 = vmatpush1.bf16.msra.mxu0 0
        %1560 = vmatprep.subr.bf16.mxu0 0
        %1561 = vmatpush1.bf16.msra.mxu0 0
        %1562 = vmatprep.subr.bf16.mxu0 0
        %1563 = vmatpush1.bf16.msra.mxu0 0
        %1564 = vmatprep.subr.bf16.mxu0 0
        %1565 = vmatpush1.bf16.msra.mxu0 0
        %1566 = vmatprep.subr.bf16.mxu0 0
        %1567 = vmatpush1.bf16.msra.mxu0 0
        %1568 = vmatprep.subr.bf16.mxu0 0
        %1569 = vmatpush1.bf16.msra.mxu0 0
        %1570 = vmatprep.subr.bf16.mxu0 0
        %1571 = vmatpush1.bf16.msra.mxu0 0
        %1572 = vmatprep.subr.bf16.mxu0 0
        %1573 = vmatpush1.bf16.msra.mxu0 0
        %1574 = vmatprep.subr.bf16.mxu0 0
        %1575 = vmatpush1.bf16.msra.mxu0 0
        %1576 = vmatprep.subr.bf16.mxu0 0
        %1577 = vmatpush1.bf16.msra.mxu0 0
        %1578 = vmatprep.mubr.bf16.mxu0 0
        %1579 = vmatmul.mubr.bf16.gmra.mrb[0].mxu0 %v1412
        %v1580 = vpop.f32.mrb[0].mxu0
        %v1581 = vadd.f32 %v1532, %v1580
        %v1582 = vpop.f32.mrb[0].mxu0
        %v1583 = vpop.f32.mrb[0].mxu0
        %v1584 = vpop.f32.mrb[0].mxu0
        %1585 = vdwg.mxu0
        %v1586 = vpack.c.bf16 %v1581, %v1581
        %v1587 = vsel %vm751, %v1454, 0
        %v1589 = vsel %vm564, %v1587, 0
        %v1592 = vsel %vm564, %v1520, 0
        %1594 = vmatprep.subr.bf16.mxu0 0
        %1595 = vmatpush1.bf16.xpose.msra.mxu0 %v1592
        %1596 = vmatprep.subr.bf16.mxu0 0
        %1597 = vmatpush1.bf16.xpose.msra.mxu0 0
        %1598 = vmatprep.subr.bf16.mxu0 0
        %1599 = vmatpush1.bf16.xpose.msra.mxu0 0
        %1600 = vmatprep.subr.bf16.mxu0 0
        %1601 = vmatpush1.bf16.xpose.msra.mxu0 0
        %1602 = vmatprep.subr.bf16.mxu0 0
        %1603 = vmatpush1.bf16.xpose.msra.mxu0 0
        %1604 = vmatprep.subr.bf16.mxu0 0
        %1605 = vmatpush1.bf16.xpose.msra.mxu0 0
        %1606 = vmatprep.subr.bf16.mxu0 0
        %1607 = vmatpush1.bf16.xpose.msra.mxu0 0
        %1608 = vmatprep.subr.bf16.mxu0 0
        %1609 = vmatpush1.bf16.xpose.msra.mxu0 0
        %1610 = vmatprep.subr.bf16.mxu0 0
        %1611 = vmatpush1.bf16.xpose.msra.mxu0 0
        %1612 = vmatprep.subr.bf16.mxu0 0
        %1613 = vmatpush1.bf16.xpose.msra.mxu0 0
        %1614 = vmatprep.subr.bf16.mxu0 0
        %1615 = vmatpush1.bf16.xpose.msra.mxu0 0
        %1616 = vmatprep.subr.bf16.mxu0 0
        %1617 = vmatpush1.bf16.xpose.msra.mxu0 0
        %1618 = vmatprep.subr.bf16.mxu0 0
        %1619 = vmatpush1.bf16.xpose.msra.mxu0 0
        %1620 = vmatprep.subr.bf16.mxu0 0
        %1621 = vmatpush1.bf16.xpose.msra.mxu0 0
        %1622 = vmatprep.subr.bf16.mxu0 0
        %1623 = vmatpush1.bf16.xpose.msra.mxu0 0
        %1624 = vmatprep.subr.bf16.mxu0 0
        %1625 = vmatpush1.bf16.xpose.msra.mxu0 0
        %1626 = vmatprep.mubr.bf16.mxu0 0
        %1627 = vmatmul.mubr.bf16.gmra.mrb[0].mxu0 %v1589
        %v1628 = vpop.f32.mrb[0].mxu0
        %v1629 = vadd.f32 0.0, %v1628
        %v1630 = vpop.f32.mrb[0].mxu0
        %v1631 = vpop.f32.mrb[0].mxu0
        %v1632 = vpop.f32.mrb[0].mxu0
        %1633 = vdwg.mxu0
        %v1634 = vmul.f32 %v1629, 0.35355338
        %vm1635 = vcmask 64512
        %v1636 = vsel %vm1635, %v1634, -inf
        %1637 = vmax.xlane.f32.xlu0 %v1636
        %v1638 = vpop.xlane.xlu0 %1637
        %v1639 = vsub.f32 %v1634, %v1638
        %v1640 = vmul.f32 %v1639, 1.442695
        %v1641 = vpow.pop %v1640
        %v1642 = vsel %vm1635, %v1641, 0.0
        %1643 = vadd.xlane.f32.xlu0 %v1642
        %v1644 = vpop.xlane.xlu0 %1643
        %v1645 = vrcp.pop %v1644
        %v1646 = vmul.f32 %v1641, %v1645
        %v1647 = vsel %vm751, %v1586, 0
        %v1648 = vpack.c.bf16 %v1646, %v1646
        %v1649 = vsel %vm825, %v1454, 0
        %v1651 = vsel %vm564, %v1649, 0
        %1653 = vmatprep.subr.bf16.mxu0 0
        %1654 = vmatpush1.bf16.xpose.msra.mxu0 %v1592
        %1655 = vmatprep.subr.bf16.mxu0 0
        %1656 = vmatpush1.bf16.xpose.msra.mxu0 0
        %1657 = vmatprep.subr.bf16.mxu0 0
        %1658 = vmatpush1.bf16.xpose.msra.mxu0 0
        %1659 = vmatprep.subr.bf16.mxu0 0
        %1660 = vmatpush1.bf16.xpose.msra.mxu0 0
        %1661 = vmatprep.subr.bf16.mxu0 0
        %1662 = vmatpush1.bf16.xpose.msra.mxu0 0
        %1663 = vmatprep.subr.bf16.mxu0 0
        %1664 = vmatpush1.bf16.xpose.msra.mxu0 0
        %1665 = vmatprep.subr.bf16.mxu0 0
        %1666 = vmatpush1.bf16.xpose.msra.mxu0 0
        %1667 = vmatprep.subr.bf16.mxu0 0
        %1668 = vmatpush1.bf16.xpose.msra.mxu0 0
        %1669 = vmatprep.subr.bf16.mxu0 0
        %1670 = vmatpush1.bf16.xpose.msra.mxu0 0
        %1671 = vmatprep.subr.bf16.mxu0 0
        %1672 = vmatpush1.bf16.xpose.msra.mxu0 0
        %1673 = vmatprep.subr.bf16.mxu0 0
        %1674 = vmatpush1.bf16.xpose.msra.mxu0 0
        %1675 = vmatprep.subr.bf16.mxu0 0
        %1676 = vmatpush1.bf16.xpose.msra.mxu0 0
        %1677 = vmatprep.subr.bf16.mxu0 0
        %1678 = vmatpush1.bf16.xpose.msra.mxu0 0
        %1679 = vmatprep.subr.bf16.mxu0 0
        %1680 = vmatpush1.bf16.xpose.msra.mxu0 0
        %1681 = vmatprep.subr.bf16.mxu0 0
        %1682 = vmatpush1.bf16.xpose.msra.mxu0 0
        %1683 = vmatprep.subr.bf16.mxu0 0
        %1684 = vmatpush1.bf16.xpose.msra.mxu0 0
        %1685 = vmatprep.mubr.bf16.mxu0 0
        %1686 = vmatmul.mubr.bf16.gmra.mrb[0].mxu0 %v1651
        %v1687 = vpop.f32.mrb[0].mxu0
        %v1688 = vadd.f32 0.0, %v1687
        %v1689 = vpop.f32.mrb[0].mxu0
        %v1690 = vpop.f32.mrb[0].mxu0
        %v1691 = vpop.f32.mrb[0].mxu0
        %1692 = vdwg.mxu0
        %v1693 = vmul.f32 %v1688, 0.35355338
        %v1694 = vsel %vm1635, %v1693, -inf
        %1695 = vmax.xlane.f32.xlu0 %v1694
        %v1696 = vpop.xlane.xlu0 %1695
        %v1697 = vsub.f32 %v1693, %v1696
        %v1698 = vmul.f32 %v1697, 1.442695
        %v1699 = vpow.pop %v1698
        %v1700 = vsel %vm1635, %v1699, 0.0
        %1701 = vadd.xlane.f32.xlu0 %v1700
        %v1702 = vpop.xlane.xlu0 %1701
        %v1703 = vrcp.pop %v1702
        %v1704 = vmul.f32 %v1699, %v1703
        %v1705 = vsel %vm825, %v1586, 0
        %v1706 = vpack.c.bf16 %v1704, %v1704
        %v1708 = vsel %vm1635, %v1706, 0
        %vm1710 = vcmask 1043456
        %v1712 = vsel %vm1710, %v1705, 0
        %1714 = vmatprep.subr.bf16.mxu0 0
        %1715 = vmatpush1.bf16.msra.mxu0 %v1712
        %1716 = vmatprep.subr.bf16.mxu0 0
        %1717 = vmatpush1.bf16.msra.mxu0 0
        %1718 = vmatprep.subr.bf16.mxu0 0
        %1719 = vmatpush1.bf16.msra.mxu0 0
        %1720 = vmatprep.subr.bf16.mxu0 0
        %1721 = vmatpush1.bf16.msra.mxu0 0
        %1722 = vmatprep.subr.bf16.mxu0 0
        %1723 = vmatpush1.bf16.msra.mxu0 0
        %1724 = vmatprep.subr.bf16.mxu0 0
        %1725 = vmatpush1.bf16.msra.mxu0 0
        %1726 = vmatprep.subr.bf16.mxu0 0
        %1727 = vmatpush1.bf16.msra.mxu0 0
        %1728 = vmatprep.subr.bf16.mxu0 0
        %1729 = vmatpush1.bf16.msra.mxu0 0
        %1730 = vmatprep.subr.bf16.mxu0 0
        %1731 = vmatpush1.bf16.msra.mxu0 0
        %1732 = vmatprep.subr.bf16.mxu0 0
        %1733 = vmatpush1.bf16.msra.mxu0 0
        %1734 = vmatprep.subr.bf16.mxu0 0
        %1735 = vmatpush1.bf16.msra.mxu0 0
        %1736 = vmatprep.subr.bf16.mxu0 0
        %1737 = vmatpush1.bf16.msra.mxu0 0
        %1738 = vmatprep.subr.bf16.mxu0 0
        %1739 = vmatpush1.bf16.msra.mxu0 0
        %1740 = vmatprep.subr.bf16.mxu0 0
        %1741 = vmatpush1.bf16.msra.mxu0 0
        %1742 = vmatprep.subr.bf16.mxu0 0
        %1743 = vmatpush1.bf16.msra.mxu0 0
        %1744 = vmatprep.subr.bf16.mxu0 0
        %1745 = vmatpush1.bf16.msra.mxu0 0
        %1746 = vmatprep.mubr.bf16.mxu0 0
        %1747 = vmatmul.mubr.bf16.gmra.mrb[0].mxu0 %v1708
        %v1748 = vpop.f32.mrb[0].mxu0
        %v1749 = vadd.f32 0.0, %v1748
        %v1750 = vpop.f32.mrb[0].mxu0
        %v1751 = vpop.f32.mrb[0].mxu0
        %v1752 = vpop.f32.mrb[0].mxu0
        %1753 = vdwg.mxu0
        %v1755 = vsel %vm1635, %v1648, 0
        %v1758 = vsel %vm1710, %v1647, 0
        %1760 = vmatprep.subr.bf16.mxu0 0
        %1761 = vmatpush1.bf16.msra.mxu0 %v1758
        %1762 = vmatprep.subr.bf16.mxu0 0
        %1763 = vmatpush1.bf16.msra.mxu0 0
        %1764 = vmatprep.subr.bf16.mxu0 0
        %1765 = vmatpush1.bf16.msra.mxu0 0
        %1766 = vmatprep.subr.bf16.mxu0 0
        %1767 = vmatpush1.bf16.msra.mxu0 0
        %1768 = vmatprep.subr.bf16.mxu0 0
        %1769 = vmatpush1.bf16.msra.mxu0 0
        %1770 = vmatprep.subr.bf16.mxu0 0
        %1771 = vmatpush1.bf16.msra.mxu0 0
        %1772 = vmatprep.subr.bf16.mxu0 0
        %1773 = vmatpush1.bf16.msra.mxu0 0
        %1774 = vmatprep.subr.bf16.mxu0 0
        %1775 = vmatpush1.bf16.msra.mxu0 0
        %1776 = vmatprep.subr.bf16.mxu0 0
        %1777 = vmatpush1.bf16.msra.mxu0 0
        %1778 = vmatprep.subr.bf16.mxu0 0
        %1779 = vmatpush1.bf16.msra.mxu0 0
        %1780 = vmatprep.subr.bf16.mxu0 0
        %1781 = vmatpush1.bf16.msra.mxu0 0
        %1782 = vmatprep.subr.bf16.mxu0 0
        %1783 = vmatpush1.bf16.msra.mxu0 0
        %1784 = vmatprep.subr.bf16.mxu0 0
        %1785 = vmatpush1.bf16.msra.mxu0 0
        %1786 = vmatprep.subr.bf16.mxu0 0
        %1787 = vmatpush1.bf16.msra.mxu0 0
        %1788 = vmatprep.subr.bf16.mxu0 0
        %1789 = vmatpush1.bf16.msra.mxu0 0
        %1790 = vmatprep.subr.bf16.mxu0 0
        %1791 = vmatpush1.bf16.msra.mxu0 0
        %1792 = vmatprep.mubr.bf16.mxu0 0
        %1793 = vmatmul.mubr.bf16.gmra.mrb[0].mxu0 %v1755
        %v1794 = vpop.f32.mrb[0].mxu0
        %v1795 = vadd.f32 %v1749, %v1794
        %v1796 = vpop.f32.mrb[0].mxu0
        %v1797 = vpop.f32.mrb[0].mxu0
        %v1798 = vpop.f32.mrb[0].mxu0
        %1799 = vdwg.mxu0
        %v1800 = vsel %vm988, %v1454, 0
        %v1802 = vsel %vm564, %v1800, 0
        %1804 = vmatprep.subr.bf16.mxu0 0
        %1805 = vmatpush1.bf16.xpose.msra.mxu0 %v1592
        %1806 = vmatprep.subr.bf16.mxu0 0
        %1807 = vmatpush1.bf16.xpose.msra.mxu0 0
        %1808 = vmatprep.subr.bf16.mxu0 0
        %1809 = vmatpush1.bf16.xpose.msra.mxu0 0
        %1810 = vmatprep.subr.bf16.mxu0 0
        %1811 = vmatpush1.bf16.xpose.msra.mxu0 0
        %1812 = vmatprep.subr.bf16.mxu0 0
        %1813 = vmatpush1.bf16.xpose.msra.mxu0 0
        %1814 = vmatprep.subr.bf16.mxu0 0
        %1815 = vmatpush1.bf16.xpose.msra.mxu0 0
        %1816 = vmatprep.subr.bf16.mxu0 0
        %1817 = vmatpush1.bf16.xpose.msra.mxu0 0
        %1818 = vmatprep.subr.bf16.mxu0 0
        %1819 = vmatpush1.bf16.xpose.msra.mxu0 0
        %1820 = vmatprep.subr.bf16.mxu0 0
        %1821 = vmatpush1.bf16.xpose.msra.mxu0 0
        %1822 = vmatprep.subr.bf16.mxu0 0
        %1823 = vmatpush1.bf16.xpose.msra.mxu0 0
        %1824 = vmatprep.subr.bf16.mxu0 0
        %1825 = vmatpush1.bf16.xpose.msra.mxu0 0
        %1826 = vmatprep.subr.bf16.mxu0 0
        %1827 = vmatpush1.bf16.xpose.msra.mxu0 0
        %1828 = vmatprep.subr.bf16.mxu0 0
        %1829 = vmatpush1.bf16.xpose.msra.mxu0 0
        %1830 = vmatprep.subr.bf16.mxu0 0
        %1831 = vmatpush1.bf16.xpose.msra.mxu0 0
        %1832 = vmatprep.subr.bf16.mxu0 0
        %1833 = vmatpush1.bf16.xpose.msra.mxu0 0
        %1834 = vmatprep.subr.bf16.mxu0 0
        %1835 = vmatpush1.bf16.xpose.msra.mxu0 0
        %1836 = vmatprep.mubr.bf16.mxu0 0
        %1837 = vmatmul.mubr.bf16.gmra.mrb[0].mxu0 %v1802
        %v1838 = vpop.f32.mrb[0].mxu0
        %v1839 = vadd.f32 0.0, %v1838
        %v1840 = vpop.f32.mrb[0].mxu0
        %v1841 = vpop.f32.mrb[0].mxu0
        %v1842 = vpop.f32.mrb[0].mxu0
        %1843 = vdwg.mxu0
        %v1844 = vmul.f32 %v1839, 0.35355338
        %v1845 = vsel %vm1635, %v1844, -inf
        %1846 = vmax.xlane.f32.xlu0 %v1845
        %v1847 = vpop.xlane.xlu0 %1846
        %v1848 = vsub.f32 %v1844, %v1847
        %v1849 = vmul.f32 %v1848, 1.442695
        %v1850 = vpow.pop %v1849
        %v1851 = vsel %vm1635, %v1850, 0.0
        %1852 = vadd.xlane.f32.xlu0 %v1851
        %v1853 = vpop.xlane.xlu0 %1852
        %v1854 = vrcp.pop %v1853
        %v1855 = vmul.f32 %v1850, %v1854
        %v1856 = vsel %vm988, %v1586, 0
        %v1857 = vpack.c.bf16 %v1855, %v1855
        %v1859 = vsel %vm1635, %v1857, 0
        %v1862 = vsel %vm1710, %v1856, 0
        %1864 = vmatprep.subr.bf16.mxu0 0
        %1865 = vmatpush1.bf16.msra.mxu0 %v1862
        %1866 = vmatprep.subr.bf16.mxu0 0
        %1867 = vmatpush1.bf16.msra.mxu0 0
        %1868 = vmatprep.subr.bf16.mxu0 0
        %1869 = vmatpush1.bf16.msra.mxu0 0
        %1870 = vmatprep.subr.bf16.mxu0 0
        %1871 = vmatpush1.bf16.msra.mxu0 0
        %1872 = vmatprep.subr.bf16.mxu0 0
        %1873 = vmatpush1.bf16.msra.mxu0 0
        %1874 = vmatprep.subr.bf16.mxu0 0
        %1875 = vmatpush1.bf16.msra.mxu0 0
        %1876 = vmatprep.subr.bf16.mxu0 0
        %1877 = vmatpush1.bf16.msra.mxu0 0
        %1878 = vmatprep.subr.bf16.mxu0 0
        %1879 = vmatpush1.bf16.msra.mxu0 0
        %1880 = vmatprep.subr.bf16.mxu0 0
        %1881 = vmatpush1.bf16.msra.mxu0 0
        %1882 = vmatprep.subr.bf16.mxu0 0
        %1883 = vmatpush1.bf16.msra.mxu0 0
        %1884 = vmatprep.subr.bf16.mxu0 0
        %1885 = vmatpush1.bf16.msra.mxu0 0
        %1886 = vmatprep.subr.bf16.mxu0 0
        %1887 = vmatpush1.bf16.msra.mxu0 0
        %1888 = vmatprep.subr.bf16.mxu0 0
        %1889 = vmatpush1.bf16.msra.mxu0 0
        %1890 = vmatprep.subr.bf16.mxu0 0
        %1891 = vmatpush1.bf16.msra.mxu0 0
        %1892 = vmatprep.subr.bf16.mxu0 0
        %1893 = vmatpush1.bf16.msra.mxu0 0
        %1894 = vmatprep.subr.bf16.mxu0 0
        %1895 = vmatpush1.bf16.msra.mxu0 0
        %1896 = vmatprep.mubr.bf16.mxu0 0
        %1897 = vmatmul.mubr.bf16.gmra.mrb[0].mxu0 %v1859
        %v1898 = vpop.f32.mrb[0].mxu0
        %v1899 = vadd.f32 0.0, %v1898
        %v1900 = vpop.f32.mrb[0].mxu0
        %v1901 = vpop.f32.mrb[0].mxu0
        %v1902 = vpop.f32.mrb[0].mxu0
        %1903 = vdwg.mxu0
        %v1904 = vadd.f32 %v1795, %v1899
        %v1905 = vsel %vm1105, %v1454, 0
        %v1907 = vsel %vm564, %v1905, 0
        %1909 = vmatprep.subr.bf16.mxu0 0
        %1910 = vmatpush1.bf16.xpose.msra.mxu0 %v1592
        %1911 = vmatprep.subr.bf16.mxu0 0
        %1912 = vmatpush1.bf16.xpose.msra.mxu0 0
        %1913 = vmatprep.subr.bf16.mxu0 0
        %1914 = vmatpush1.bf16.xpose.msra.mxu0 0
        %1915 = vmatprep.subr.bf16.mxu0 0
        %1916 = vmatpush1.bf16.xpose.msra.mxu0 0
        %1917 = vmatprep.subr.bf16.mxu0 0
        %1918 = vmatpush1.bf16.xpose.msra.mxu0 0
        %1919 = vmatprep.subr.bf16.mxu0 0
        %1920 = vmatpush1.bf16.xpose.msra.mxu0 0
        %1921 = vmatprep.subr.bf16.mxu0 0
        %1922 = vmatpush1.bf16.xpose.msra.mxu0 0
        %1923 = vmatprep.subr.bf16.mxu0 0
        %1924 = vmatpush1.bf16.xpose.msra.mxu0 0
        %1925 = vmatprep.subr.bf16.mxu0 0
        %1926 = vmatpush1.bf16.xpose.msra.mxu0 0
        %1927 = vmatprep.subr.bf16.mxu0 0
        %1928 = vmatpush1.bf16.xpose.msra.mxu0 0
        %1929 = vmatprep.subr.bf16.mxu0 0
        %1930 = vmatpush1.bf16.xpose.msra.mxu0 0
        %1931 = vmatprep.subr.bf16.mxu0 0
        %1932 = vmatpush1.bf16.xpose.msra.mxu0 0
        %1933 = vmatprep.subr.bf16.mxu0 0
        %1934 = vmatpush1.bf16.xpose.msra.mxu0 0
        %1935 = vmatprep.subr.bf16.mxu0 0
        %1936 = vmatpush1.bf16.xpose.msra.mxu0 0
        %1937 = vmatprep.subr.bf16.mxu0 0
        %1938 = vmatpush1.bf16.xpose.msra.mxu0 0
        %1939 = vmatprep.subr.bf16.mxu0 0
        %1940 = vmatpush1.bf16.xpose.msra.mxu0 0
        %1941 = vmatprep.mubr.bf16.mxu0 0
        %1942 = vmatmul.mubr.bf16.gmra.mrb[0].mxu0 %v1907
        %v1943 = vpop.f32.mrb[0].mxu0
        %v1944 = vadd.f32 0.0, %v1943
        %v1945 = vpop.f32.mrb[0].mxu0
        %v1946 = vpop.f32.mrb[0].mxu0
        %v1947 = vpop.f32.mrb[0].mxu0
        %1948 = vdwg.mxu0
        %v1949 = vmul.f32 %v1944, 0.35355338
        %v1950 = vsel %vm1635, %v1949, -inf
        %1951 = vmax.xlane.f32.xlu0 %v1950
        %v1952 = vpop.xlane.xlu0 %1951
        %v1953 = vsub.f32 %v1949, %v1952
        %v1954 = vmul.f32 %v1953, 1.442695
        %v1955 = vpow.pop %v1954
        %v1956 = vsel %vm1635, %v1955, 0.0
        %1957 = vadd.xlane.f32.xlu0 %v1956
        %v1958 = vpop.xlane.xlu0 %1957
        %v1959 = vrcp.pop %v1958
        %v1960 = vmul.f32 %v1955, %v1959
        %v1961 = vsel %vm1105, %v1586, 0
        %v1962 = vpack.c.bf16 %v1960, %v1960
        %v1964 = vsel %vm1635, %v1962, 0
        %v1967 = vsel %vm1710, %v1961, 0
        %1969 = vmatprep.subr.bf16.mxu0 0
        %1970 = vmatpush1.bf16.msra.mxu0 %v1967
        %1971 = vmatprep.subr.bf16.mxu0 0
        %1972 = vmatpush1.bf16.msra.mxu0 0
        %1973 = vmatprep.subr.bf16.mxu0 0
        %1974 = vmatpush1.bf16.msra.mxu0 0
        %1975 = vmatprep.subr.bf16.mxu0 0
        %1976 = vmatpush1.bf16.msra.mxu0 0
        %1977 = vmatprep.subr.bf16.mxu0 0
        %1978 = vmatpush1.bf16.msra.mxu0 0
        %1979 = vmatprep.subr.bf16.mxu0 0
        %1980 = vmatpush1.bf16.msra.mxu0 0
        %1981 = vmatprep.subr.bf16.mxu0 0
        %1982 = vmatpush1.bf16.msra.mxu0 0
        %1983 = vmatprep.subr.bf16.mxu0 0
        %1984 = vmatpush1.bf16.msra.mxu0 0
        %1985 = vmatprep.subr.bf16.mxu0 0
        %1986 = vmatpush1.bf16.msra.mxu0 0
        %1987 = vmatprep.subr.bf16.mxu0 0
        %1988 = vmatpush1.bf16.msra.mxu0 0
        %1989 = vmatprep.subr.bf16.mxu0 0
        %1990 = vmatpush1.bf16.msra.mxu0 0
        %1991 = vmatprep.subr.bf16.mxu0 0
        %1992 = vmatpush1.bf16.msra.mxu0 0
        %1993 = vmatprep.subr.bf16.mxu0 0
        %1994 = vmatpush1.bf16.msra.mxu0 0
        %1995 = vmatprep.subr.bf16.mxu0 0
        %1996 = vmatpush1.bf16.msra.mxu0 0
        %1997 = vmatprep.subr.bf16.mxu0 0
        %1998 = vmatpush1.bf16.msra.mxu0 0
        %1999 = vmatprep.subr.bf16.mxu0 0
        %2000 = vmatpush1.bf16.msra.mxu0 0
        %2001 = vmatprep.mubr.bf16.mxu0 0
        %2002 = vmatmul.mubr.bf16.gmra.mrb[0].mxu0 %v1964
        %v2003 = vpop.f32.mrb[0].mxu0
        %v2004 = vadd.f32 0.0, %v2003
        %v2005 = vpop.f32.mrb[0].mxu0
        %v2006 = vpop.f32.mrb[0].mxu0
        %v2007 = vpop.f32.mrb[0].mxu0
        %2008 = vdwg.mxu0
        %v2009 = vadd.f32 %v1904, %v2004
        %v2010 = vpack.c.bf16 %v2009, %v2009
        %s2011 = scalar_lea.vmem [#allocation4], 16
        %v2012 = vld [vmem:[%s2011] sm:$0xf]
        %v2013 = vld [vmem:[%s2011 + $0x4] sm:$0xf]
        %v2014 = vld [vmem:[%s2011 + $0x8] sm:$0xf]
        %v2015 = vld [vmem:[%s2011 + $0xc] sm:$0xf]
        %s2016 = scalar_lea.vmem [#allocation7], 1
        %v2017 = vld [vmem:[%s2016] sm:$0x1]
        %v2019 = vlaneseq
        %v2020 = vshrl.u32 %v2019, 7
        %v2021 = vsub.s32 0, %v2020
        %v2022 = vrot.slane %v2017, %v2021
        %v2028 = vunpack.c.l.b16 %v2012
        %v2029 = vunpack.c.l.b16 %v2013
        %v2030 = vunpack.c.l.b16 %v2014
        %v2031 = vunpack.c.l.b16 %v2015
        %v2032 = vpack.c.b16 %v2029, %v2028
        %v2033 = vpack.c.b16 %v2031, %v2030
        %v2037 = vsel %vm564, %v2010, 0
        %2039 = vmatprep.subr.bf16.mxu0 0
        %2040 = vmatpush1.bf16.msra.mxu0 %v2032
        %2041 = vmatprep.subr.bf16.mxu0 0
        %2042 = vmatpush1.bf16.msra.mxu0 %v2033
        %2043 = vmatprep.subr.bf16.mxu0 0
        %2044 = vmatpush1.bf16.msra.mxu0 0
        %2045 = vmatprep.subr.bf16.mxu0 0
        %2046 = vmatpush1.bf16.msra.mxu0 0
        %2047 = vmatprep.subr.bf16.mxu0 0
        %2048 = vmatpush1.bf16.msra.mxu0 0
        %2049 = vmatprep.subr.bf16.mxu0 0
        %2050 = vmatpush1.bf16.msra.mxu0 0
        %2051 = vmatprep.subr.bf16.mxu0 0
        %2052 = vmatpush1.bf16.msra.mxu0 0
        %2053 = vmatprep.subr.bf16.mxu0 0
        %2054 = vmatpush1.bf16.msra.mxu0 0
        %2055 = vmatprep.subr.bf16.mxu0 0
        %2056 = vmatpush1.bf16.msra.mxu0 0
        %2057 = vmatprep.subr.bf16.mxu0 0
        %2058 = vmatpush1.bf16.msra.mxu0 0
        %2059 = vmatprep.subr.bf16.mxu0 0
        %2060 = vmatpush1.bf16.msra.mxu0 0
        %2061 = vmatprep.subr.bf16.mxu0 0
        %2062 = vmatpush1.bf16.msra.mxu0 0
        %2063 = vmatprep.subr.bf16.mxu0 0
        %2064 = vmatpush1.bf16.msra.mxu0 0
        %2065 = vmatprep.subr.bf16.mxu0 0
        %2066 = vmatpush1.bf16.msra.mxu0 0
        %2067 = vmatprep.subr.bf16.mxu0 0
        %2068 = vmatpush1.bf16.msra.mxu0 0
        %2069 = vmatprep.subr.bf16.mxu0 0
        %2070 = vmatpush1.bf16.msra.mxu0 0
        %2071 = vmatprep.mubr.bf16.mxu0 0
        %2072 = vmatmul.mubr.bf16.gmra.mrb[0].mxu0 %v2037
        %v2073 = vpop.f32.mrb[0].mxu0
        %v2074 = vadd.f32 %v2022, %v2073
        %v2075 = vpop.f32.mrb[0].mxu0
        %v2076 = vpop.f32.mrb[0].mxu0
        %v2077 = vpop.f32.mrb[0].mxu0
        %2078 = vdwg.mxu0
        %v2079 = vpack.c.bf16 %v2074, %v2074
        %v2080 = vld [vmem:[%s11] sm:$0xf]
        %v2081 = vld [vmem:[%s11 + $0x4] sm:$0xf]
        %v2082 = vld [vmem:[%s11 + $0x8] sm:$0xf]
        %v2083 = vld [vmem:[%s11 + $0xc] sm:$0xf]
        %s2084 = scalar_lea.vmem %s11, 16
        %v2085 = vld [vmem:[%s2084] sm:$0xf]
        %v2086 = vld [vmem:[%s2084 + $0x4] sm:$0xf]
        %v2087 = vld [vmem:[%s2084 + $0x8] sm:$0xf]
        %v2088 = vld [vmem:[%s2084 + $0xc] sm:$0xf]
        %v2093 = vunpack.c.l.b16 %v2085
        %v2094 = vunpack.c.l.b16 %v2086
        %v2095 = vunpack.c.l.b16 %v2087
        %v2096 = vunpack.c.l.b16 %v2088
        %v2097 = vpack.c.b16 %v2094, %v2093
        %v2098 = vpack.c.b16 %v2096, %v2095
        %v2102 = vsel %vm564, %v2079, 0
        %2104 = vmatprep.subr.bf16.mxu0 0
        %2105 = vmatpush1.bf16.msra.mxu0 %v2097
        %2106 = vmatprep.subr.bf16.mxu0 0
        %2107 = vmatpush1.bf16.msra.mxu0 %v2098
        %2108 = vmatprep.subr.bf16.mxu0 0
        %2109 = vmatpush1.bf16.msra.mxu0 0
        %2110 = vmatprep.subr.bf16.mxu0 0
        %2111 = vmatpush1.bf16.msra.mxu0 0
        %2112 = vmatprep.subr.bf16.mxu0 0
        %2113 = vmatpush1.bf16.msra.mxu0 0
        %2114 = vmatprep.subr.bf16.mxu0 0
        %2115 = vmatpush1.bf16.msra.mxu0 0
        %2116 = vmatprep.subr.bf16.mxu0 0
        %2117 = vmatpush1.bf16.msra.mxu0 0
        %2118 = vmatprep.subr.bf16.mxu0 0
        %2119 = vmatpush1.bf16.msra.mxu0 0
        %2120 = vmatprep.subr.bf16.mxu0 0
        %2121 = vmatpush1.bf16.msra.mxu0 0
        %2122 = vmatprep.subr.bf16.mxu0 0
        %2123 = vmatpush1.bf16.msra.mxu0 0
        %2124 = vmatprep.subr.bf16.mxu0 0
        %2125 = vmatpush1.bf16.msra.mxu0 0
        %2126 = vmatprep.subr.bf16.mxu0 0
        %2127 = vmatpush1.bf16.msra.mxu0 0
        %2128 = vmatprep.subr.bf16.mxu0 0
        %2129 = vmatpush1.bf16.msra.mxu0 0
        %2130 = vmatprep.subr.bf16.mxu0 0
        %2131 = vmatpush1.bf16.msra.mxu0 0
        %2132 = vmatprep.subr.bf16.mxu0 0
        %2133 = vmatpush1.bf16.msra.mxu0 0
        %2134 = vmatprep.subr.bf16.mxu0 0
        %2135 = vmatpush1.bf16.msra.mxu0 0
        %2136 = vmatprep.mubr.bf16.mxu0 0
        %2137 = vmatmul.mubr.bf16.gmra.mrb[0].mxu0 %v2102
        %v2138 = vpop.f32.mrb[0].mxu0
        %v2139 = vadd.f32 0.0, %v2138
        %v2140 = vpop.f32.mrb[0].mxu0
        %v2141 = vpop.f32.mrb[0].mxu0
        %v2142 = vpop.f32.mrb[0].mxu0
        %2143 = vdwg.mxu0
        %v2148 = vunpack.c.l.b16 %v2080
        %v2149 = vunpack.c.l.b16 %v2081
        %v2150 = vunpack.c.l.b16 %v2082
        %v2151 = vunpack.c.l.b16 %v2083
        %v2152 = vpack.c.b16 %v2149, %v2148
        %v2153 = vpack.c.b16 %v2151, %v2150
        %2156 = vmatprep.subr.bf16.mxu0 0
        %2157 = vmatpush1.bf16.msra.mxu0 %v2152
        %2158 = vmatprep.subr.bf16.mxu0 0
        %2159 = vmatpush1.bf16.msra.mxu0 %v2153
        %2160 = vmatprep.subr.bf16.mxu0 0
        %2161 = vmatpush1.bf16.msra.mxu0 0
        %2162 = vmatprep.subr.bf16.mxu0 0
        %2163 = vmatpush1.bf16.msra.mxu0 0
        %2164 = vmatprep.subr.bf16.mxu0 0
        %2165 = vmatpush1.bf16.msra.mxu0 0
        %2166 = vmatprep.subr.bf16.mxu0 0
        %2167 = vmatpush1.bf16.msra.mxu0 0
        %2168 = vmatprep.subr.bf16.mxu0 0
        %2169 = vmatpush1.bf16.msra.mxu0 0
        %2170 = vmatprep.subr.bf16.mxu0 0
        %2171 = vmatpush1.bf16.msra.mxu0 0
        %2172 = vmatprep.subr.bf16.mxu0 0
        %2173 = vmatpush1.bf16.msra.mxu0 0
        %2174 = vmatprep.subr.bf16.mxu0 0
        %2175 = vmatpush1.bf16.msra.mxu0 0
        %2176 = vmatprep.subr.bf16.mxu0 0
        %2177 = vmatpush1.bf16.msra.mxu0 0
        %2178 = vmatprep.subr.bf16.mxu0 0
        %2179 = vmatpush1.bf16.msra.mxu0 0
        %2180 = vmatprep.subr.bf16.mxu0 0
        %2181 = vmatpush1.bf16.msra.mxu0 0
        %2182 = vmatprep.subr.bf16.mxu0 0
        %2183 = vmatpush1.bf16.msra.mxu0 0
        %2184 = vmatprep.subr.bf16.mxu0 0
        %2185 = vmatpush1.bf16.msra.mxu0 0
        %2186 = vmatprep.subr.bf16.mxu0 0
        %2187 = vmatpush1.bf16.msra.mxu0 0
        %2188 = vmatprep.mubr.bf16.mxu0 0
        %2189 = vmatmul.mubr.bf16.gmra.mrb[0].mxu0 %v1412
        %v2190 = vpop.f32.mrb[0].mxu0
        %v2191 = vadd.f32 %v2139, %v2190
        %v2192 = vpop.f32.mrb[0].mxu0
        %v2193 = vpop.f32.mrb[0].mxu0
        %v2194 = vpop.f32.mrb[0].mxu0
        %2195 = vdwg.mxu0
        %s2196 = scalar_lea.vmem %s11, 32
        %v2197 = vld [vmem:[%s2196] sm:$0xf]
        %v2198 = vld [vmem:[%s2196 + $0x4] sm:$0xf]
        %v2199 = vld [vmem:[%s2196 + $0x8] sm:$0xf]
        %v2200 = vld [vmem:[%s2196 + $0xc] sm:$0xf]
        %s2201 = scalar_lea.vmem %s11, 48
        %v2202 = vld [vmem:[%s2201] sm:$0xf]
        %v2203 = vld [vmem:[%s2201 + $0x4] sm:$0xf]
        %v2204 = vld [vmem:[%s2201 + $0x8] sm:$0xf]
        %v2205 = vld [vmem:[%s2201 + $0xc] sm:$0xf]
        %v2210 = vunpack.c.l.b16 %v2202
        %v2211 = vunpack.c.l.b16 %v2203
        %v2212 = vunpack.c.l.b16 %v2204
        %v2213 = vunpack.c.l.b16 %v2205
        %v2214 = vpack.c.b16 %v2211, %v2210
        %v2215 = vpack.c.b16 %v2213, %v2212
        %2218 = vmatprep.subr.bf16.mxu0 0
        %2219 = vmatpush1.bf16.msra.mxu0 %v2214
        %2220 = vmatprep.subr.bf16.mxu0 0
        %2221 = vmatpush1.bf16.msra.mxu0 %v2215
        %2222 = vmatprep.subr.bf16.mxu0 0
        %2223 = vmatpush1.bf16.msra.mxu0 0
        %2224 = vmatprep.subr.bf16.mxu0 0
        %2225 = vmatpush1.bf16.msra.mxu0 0
        %2226 = vmatprep.subr.bf16.mxu0 0
        %2227 = vmatpush1.bf16.msra.mxu0 0
        %2228 = vmatprep.subr.bf16.mxu0 0
        %2229 = vmatpush1.bf16.msra.mxu0 0
        %2230 = vmatprep.subr.bf16.mxu0 0
        %2231 = vmatpush1.bf16.msra.mxu0 0
        %2232 = vmatprep.subr.bf16.mxu0 0
        %2233 = vmatpush1.bf16.msra.mxu0 0
        %2234 = vmatprep.subr.bf16.mxu0 0
        %2235 = vmatpush1.bf16.msra.mxu0 0
        %2236 = vmatprep.subr.bf16.mxu0 0
        %2237 = vmatpush1.bf16.msra.mxu0 0
        %2238 = vmatprep.subr.bf16.mxu0 0
        %2239 = vmatpush1.bf16.msra.mxu0 0
        %2240 = vmatprep.subr.bf16.mxu0 0
        %2241 = vmatpush1.bf16.msra.mxu0 0
        %2242 = vmatprep.subr.bf16.mxu0 0
        %2243 = vmatpush1.bf16.msra.mxu0 0
        %2244 = vmatprep.subr.bf16.mxu0 0
        %2245 = vmatpush1.bf16.msra.mxu0 0
        %2246 = vmatprep.subr.bf16.mxu0 0
        %2247 = vmatpush1.bf16.msra.mxu0 0
        %2248 = vmatprep.subr.bf16.mxu0 0
        %2249 = vmatpush1.bf16.msra.mxu0 0
        %2250 = vmatprep.mubr.bf16.mxu0 0
        %2251 = vmatmul.mubr.bf16.gmra.mrb[0].mxu0 %v2102
        %v2252 = vpop.f32.mrb[0].mxu0
        %v2253 = vadd.f32 0.0, %v2252
        %v2254 = vpop.f32.mrb[0].mxu0
        %v2255 = vpop.f32.mrb[0].mxu0
        %v2256 = vpop.f32.mrb[0].mxu0
        %2257 = vdwg.mxu0
        %v2262 = vunpack.c.l.b16 %v2197
        %v2263 = vunpack.c.l.b16 %v2198
        %v2264 = vunpack.c.l.b16 %v2199
        %v2265 = vunpack.c.l.b16 %v2200
        %v2266 = vpack.c.b16 %v2263, %v2262
        %v2267 = vpack.c.b16 %v2265, %v2264
        %2270 = vmatprep.subr.bf16.mxu0 0
        %2271 = vmatpush1.bf16.msra.mxu0 %v2266
        %2272 = vmatprep.subr.bf16.mxu0 0
        %2273 = vmatpush1.bf16.msra.mxu0 %v2267
        %2274 = vmatprep.subr.bf16.mxu0 0
        %2275 = vmatpush1.bf16.msra.mxu0 0
        %2276 = vmatprep.subr.bf16.mxu0 0
        %2277 = vmatpush1.bf16.msra.mxu0 0
        %2278 = vmatprep.subr.bf16.mxu0 0
        %2279 = vmatpush1.bf16.msra.mxu0 0
        %2280 = vmatprep.subr.bf16.mxu0 0
        %2281 = vmatpush1.bf16.msra.mxu0 0
        %2282 = vmatprep.subr.bf16.mxu0 0
        %2283 = vmatpush1.bf16.msra.mxu0 0
        %2284 = vmatprep.subr.bf16.mxu0 0
        %2285 = vmatpush1.bf16.msra.mxu0 0
        %2286 = vmatprep.subr.bf16.mxu0 0
        %2287 = vmatpush1.bf16.msra.mxu0 0
        %2288 = vmatprep.subr.bf16.mxu0 0
        %2289 = vmatpush1.bf16.msra.mxu0 0
        %2290 = vmatprep.subr.bf16.mxu0 0
        %2291 = vmatpush1.bf16.msra.mxu0 0
        %2292 = vmatprep.subr.bf16.mxu0 0
        %2293 = vmatpush1.bf16.msra.mxu0 0
        %2294 = vmatprep.subr.bf16.mxu0 0
        %2295 = vmatpush1.bf16.msra.mxu0 0
        %2296 = vmatprep.subr.bf16.mxu0 0
        %2297 = vmatpush1.bf16.msra.mxu0 0
        %2298 = vmatprep.subr.bf16.mxu0 0
        %2299 = vmatpush1.bf16.msra.mxu0 0
        %2300 = vmatprep.subr.bf16.mxu0 0
        %2301 = vmatpush1.bf16.msra.mxu0 0
        %2302 = vmatprep.mubr.bf16.mxu0 0
        %2303 = vmatmul.mubr.bf16.gmra.mrb[0].mxu0 %v1412
        %v2304 = vpop.f32.mrb[0].mxu0
        %v2305 = vadd.f32 %v2253, %v2304
        %v2306 = vpop.f32.mrb[0].mxu0
        %v2307 = vpop.f32.mrb[0].mxu0
        %v2308 = vpop.f32.mrb[0].mxu0
        %2309 = vdwg.mxu0
        %v2310 = vmax.f32 %v2191, %v2305
        %s2311 = scalar_lea.vmem %s11, 64
        %v2312 = vld [vmem:[%s2311] sm:$0xf]
        %v2313 = vld [vmem:[%s2311 + $0x4] sm:$0xf]
        %v2314 = vld [vmem:[%s2311 + $0x8] sm:$0xf]
        %v2315 = vld [vmem:[%s2311 + $0xc] sm:$0xf]
        %s2316 = scalar_lea.vmem %s11, 80
        %v2317 = vld [vmem:[%s2316] sm:$0xf]
        %v2318 = vld [vmem:[%s2316 + $0x4] sm:$0xf]
        %v2319 = vld [vmem:[%s2316 + $0x8] sm:$0xf]
        %v2320 = vld [vmem:[%s2316 + $0xc] sm:$0xf]
        %v2325 = vunpack.c.l.b16 %v2317
        %v2326 = vunpack.c.l.b16 %v2318
        %v2327 = vunpack.c.l.b16 %v2319
        %v2328 = vunpack.c.l.b16 %v2320
        %v2329 = vpack.c.b16 %v2326, %v2325
        %v2330 = vpack.c.b16 %v2328, %v2327
        %2333 = vmatprep.subr.bf16.mxu0 0
        %2334 = vmatpush1.bf16.msra.mxu0 %v2329
        %2335 = vmatprep.subr.bf16.mxu0 0
        %2336 = vmatpush1.bf16.msra.mxu0 %v2330
        %2337 = vmatprep.subr.bf16.mxu0 0
        %2338 = vmatpush1.bf16.msra.mxu0 0
        %2339 = vmatprep.subr.bf16.mxu0 0
        %2340 = vmatpush1.bf16.msra.mxu0 0
        %2341 = vmatprep.subr.bf16.mxu0 0
        %2342 = vmatpush1.bf16.msra.mxu0 0
        %2343 = vmatprep.subr.bf16.mxu0 0
        %2344 = vmatpush1.bf16.msra.mxu0 0
        %2345 = vmatprep.subr.bf16.mxu0 0
        %2346 = vmatpush1.bf16.msra.mxu0 0
        %2347 = vmatprep.subr.bf16.mxu0 0
        %2348 = vmatpush1.bf16.msra.mxu0 0
        %2349 = vmatprep.subr.bf16.mxu0 0
        %2350 = vmatpush1.bf16.msra.mxu0 0
        %2351 = vmatprep.subr.bf16.mxu0 0
        %2352 = vmatpush1.bf16.msra.mxu0 0
        %2353 = vmatprep.subr.bf16.mxu0 0
        %2354 = vmatpush1.bf16.msra.mxu0 0
        %2355 = vmatprep.subr.bf16.mxu0 0
        %2356 = vmatpush1.bf16.msra.mxu0 0
        %2357 = vmatprep.subr.bf16.mxu0 0
        %2358 = vmatpush1.bf16.msra.mxu0 0
        %2359 = vmatprep.subr.bf16.mxu0 0
        %2360 = vmatpush1.bf16.msra.mxu0 0
        %2361 = vmatprep.subr.bf16.mxu0 0
        %2362 = vmatpush1.bf16.msra.mxu0 0
        %2363 = vmatprep.subr.bf16.mxu0 0
        %2364 = vmatpush1.bf16.msra.mxu0 0
        %2365 = vmatprep.mubr.bf16.mxu0 0
        %2366 = vmatmul.mubr.bf16.gmra.mrb[0].mxu0 %v2102
        %v2367 = vpop.f32.mrb[0].mxu0
        %v2368 = vadd.f32 0.0, %v2367
        %v2369 = vpop.f32.mrb[0].mxu0
        %v2370 = vpop.f32.mrb[0].mxu0
        %v2371 = vpop.f32.mrb[0].mxu0
        %2372 = vdwg.mxu0
        %v2377 = vunpack.c.l.b16 %v2312
        %v2378 = vunpack.c.l.b16 %v2313
        %v2379 = vunpack.c.l.b16 %v2314
        %v2380 = vunpack.c.l.b16 %v2315
        %v2381 = vpack.c.b16 %v2378, %v2377
        %v2382 = vpack.c.b16 %v2380, %v2379
        %2385 = vmatprep.subr.bf16.mxu0 0
        %2386 = vmatpush1.bf16.msra.mxu0 %v2381
        %2387 = vmatprep.subr.bf16.mxu0 0
        %2388 = vmatpush1.bf16.msra.mxu0 %v2382
        %2389 = vmatprep.subr.bf16.mxu0 0
        %2390 = vmatpush1.bf16.msra.mxu0 0
        %2391 = vmatprep.subr.bf16.mxu0 0
        %2392 = vmatpush1.bf16.msra.mxu0 0
        %2393 = vmatprep.subr.bf16.mxu0 0
        %2394 = vmatpush1.bf16.msra.mxu0 0
        %2395 = vmatprep.subr.bf16.mxu0 0
        %2396 = vmatpush1.bf16.msra.mxu0 0
        %2397 = vmatprep.subr.bf16.mxu0 0
        %2398 = vmatpush1.bf16.msra.mxu0 0
        %2399 = vmatprep.subr.bf16.mxu0 0
        %2400 = vmatpush1.bf16.msra.mxu0 0
        %2401 = vmatprep.subr.bf16.mxu0 0
        %2402 = vmatpush1.bf16.msra.mxu0 0
        %2403 = vmatprep.subr.bf16.mxu0 0
        %2404 = vmatpush1.bf16.msra.mxu0 0
        %2405 = vmatprep.subr.bf16.mxu0 0
        %2406 = vmatpush1.bf16.msra.mxu0 0
        %2407 = vmatprep.subr.bf16.mxu0 0
        %2408 = vmatpush1.bf16.msra.mxu0 0
        %2409 = vmatprep.subr.bf16.mxu0 0
        %2410 = vmatpush1.bf16.msra.mxu0 0
        %2411 = vmatprep.subr.bf16.mxu0 0
        %2412 = vmatpush1.bf16.msra.mxu0 0
        %2413 = vmatprep.subr.bf16.mxu0 0
        %2414 = vmatpush1.bf16.msra.mxu0 0
        %2415 = vmatprep.subr.bf16.mxu0 0
        %2416 = vmatpush1.bf16.msra.mxu0 0
        %2417 = vmatprep.mubr.bf16.mxu0 0
        %2418 = vmatmul.mubr.bf16.gmra.mrb[0].mxu0 %v1412
        %v2419 = vpop.f32.mrb[0].mxu0
        %v2420 = vadd.f32 %v2368, %v2419
        %v2421 = vpop.f32.mrb[0].mxu0
        %v2422 = vpop.f32.mrb[0].mxu0
        %v2423 = vpop.f32.mrb[0].mxu0
        %2424 = vdwg.mxu0
        %v2425 = vmax.f32 %v2310, %v2420
        %v2426 = vsel %vm564, %v2425, 0.0
        %2427 = vadd.xlane.f32.xlu0 %v2426
        %v2428 = vpop.xlane.xlu0 %2427
        %v2429 = vmul.f32 %v2428, %v1356
        %v2430 = vsub.f32 %v2425, %v2429
        %v2431 = vmul.f32 %v2430, %v2430
        %v2432 = vsel %vm564, %v2431, 0.0
        %2433 = vadd.xlane.f32.xlu0 %v2432
        %v2434 = vpop.xlane.xlu0 %2433
        %v2435 = vmul.f32 %v2434, %v1356
        %v2436 = vadd.f32 %v2435, 1e-05
        %v2437 = vrsqrt.pop %v2436
        %v2438 = vmul.f32 %v2430, %v2437
        %s2439 = scalar_lea.vmem [#allocation7], 7
        %v2440 = vld [vmem:[%s2439] sm:$0x1]
        %v2442 = vlaneseq
        %v2443 = vshrl.u32 %v2442, 7
        %v2444 = vsub.s32 0, %v2443
        %v2445 = vrot.slane %v2440, %v2444
        %v2447 = vmul.f32 %v2438, %v2445
        %s2448 = scalar_lea.vmem [#allocation7], 8
        %v2449 = vld [vmem:[%s2448] sm:$0x1]
        %v2451 = vlaneseq
        %v2452 = vshrl.u32 %v2451, 7
        %v2453 = vsub.s32 0, %v2452
        %v2454 = vrot.slane %v2449, %v2453
        %v2456 = vadd.f32 %v2447, %v2454
        %v2457 = vpack.c.bf16 %v2456, %v2456
        %v2458 = vpack.c.bf16 %v538, %v538
        %s2459 = scalar_lea.vmem %s4, 96
        %v2460 = vld [vmem:[%s2459] sm:$0xf]
        %v2461 = vld [vmem:[%s2459 + $0x4] sm:$0xf]
        %v2462 = vld [vmem:[%s2459 + $0x8] sm:$0xf]
        %v2463 = vld [vmem:[%s2459 + $0xc] sm:$0xf]
        %s2464 = scalar_lea.vmem [#allocation2], 6
        %v2465 = vld [vmem:[%s2464] sm:$0x1]
        %v2467 = vlaneseq
        %v2468 = vshrl.u32 %v2467, 7
        %v2469 = vsub.s32 0, %v2468
        %v2470 = vrot.slane %v2465, %v2469
        %v2476 = vunpack.c.l.b16 %v2460
        %v2477 = vunpack.c.l.b16 %v2461
        %v2478 = vunpack.c.l.b16 %v2462
        %v2479 = vunpack.c.l.b16 %v2463
        %v2480 = vpack.c.b16 %v2477, %v2476
        %v2481 = vpack.c.b16 %v2479, %v2478
        %v2485 = vsel %vm564, %v2457, 0
        %2487 = vmatprep.subr.bf16.mxu0 0
        %2488 = vmatpush1.bf16.msra.mxu0 %v2480
        %2489 = vmatprep.subr.bf16.mxu0 0
        %2490 = vmatpush1.bf16.msra.mxu0 %v2481
        %2491 = vmatprep.subr.bf16.mxu0 0
        %2492 = vmatpush1.bf16.msra.mxu0 0
        %2493 = vmatprep.subr.bf16.mxu0 0
        %2494 = vmatpush1.bf16.msra.mxu0 0
        %2495 = vmatprep.subr.bf16.mxu0 0
        %2496 = vmatpush1.bf16.msra.mxu0 0
        %2497 = vmatprep.subr.bf16.mxu0 0
        %2498 = vmatpush1.bf16.msra.mxu0 0
        %2499 = vmatprep.subr.bf16.mxu0 0
        %2500 = vmatpush1.bf16.msra.mxu0 0
        %2501 = vmatprep.subr.bf16.mxu0 0
        %2502 = vmatpush1.bf16.msra.mxu0 0
        %2503 = vmatprep.subr.bf16.mxu0 0
        %2504 = vmatpush1.bf16.msra.mxu0 0
        %2505 = vmatprep.subr.bf16.mxu0 0
        %2506 = vmatpush1.bf16.msra.mxu0 0
        %2507 = vmatprep.subr.bf16.mxu0 0
        %2508 = vmatpush1.bf16.msra.mxu0 0
        %2509 = vmatprep.subr.bf16.mxu0 0
        %2510 = vmatpush1.bf16.msra.mxu0 0
        %2511 = vmatprep.subr.bf16.mxu0 0
        %2512 = vmatpush1.bf16.msra.mxu0 0
        %2513 = vmatprep.subr.bf16.mxu0 0
        %2514 = vmatpush1.bf16.msra.mxu0 0
        %2515 = vmatprep.subr.bf16.mxu0 0
        %2516 = vmatpush1.bf16.msra.mxu0 0
        %2517 = vmatprep.subr.bf16.mxu0 0
        %2518 = vmatpush1.bf16.msra.mxu0 0
        %2519 = vmatprep.mubr.bf16.mxu0 0
        %2520 = vmatmul.mubr.bf16.gmra.mrb[0].mxu0 %v2485
        %v2521 = vpop.f32.mrb[0].mxu0
        %v2522 = vadd.f32 %v2470, %v2521
        %v2523 = vpop.f32.mrb[0].mxu0
        %v2524 = vpop.f32.mrb[0].mxu0
        %v2525 = vpop.f32.mrb[0].mxu0
        %2526 = vdwg.mxu0
        %v2527 = vpack.c.bf16 %v2522, %v2522
        %s2528 = scalar_lea.vmem %s4, 112
        %v2529 = vld [vmem:[%s2528] sm:$0xf]
        %v2530 = vld [vmem:[%s2528 + $0x4] sm:$0xf]
        %v2531 = vld [vmem:[%s2528 + $0x8] sm:$0xf]
        %v2532 = vld [vmem:[%s2528 + $0xc] sm:$0xf]
        %s2533 = scalar_lea.vmem [#allocation2], 7
        %v2534 = vld [vmem:[%s2533] sm:$0x1]
        %v2536 = vlaneseq
        %v2537 = vshrl.u32 %v2536, 7
        %v2538 = vsub.s32 0, %v2537
        %v2539 = vrot.slane %v2534, %v2538
        %v2545 = vunpack.c.l.b16 %v2529
        %v2546 = vunpack.c.l.b16 %v2530
        %v2547 = vunpack.c.l.b16 %v2531
        %v2548 = vunpack.c.l.b16 %v2532
        %v2549 = vpack.c.b16 %v2546, %v2545
        %v2550 = vpack.c.b16 %v2548, %v2547
        %v2554 = vsel %vm564, %v2458, 0
        %2556 = vmatprep.subr.bf16.mxu0 0
        %2557 = vmatpush1.bf16.msra.mxu0 %v2549
        %2558 = vmatprep.subr.bf16.mxu0 0
        %2559 = vmatpush1.bf16.msra.mxu0 %v2550
        %2560 = vmatprep.subr.bf16.mxu0 0
        %2561 = vmatpush1.bf16.msra.mxu0 0
        %2562 = vmatprep.subr.bf16.mxu0 0
        %2563 = vmatpush1.bf16.msra.mxu0 0
        %2564 = vmatprep.subr.bf16.mxu0 0
        %2565 = vmatpush1.bf16.msra.mxu0 0
        %2566 = vmatprep.subr.bf16.mxu0 0
        %2567 = vmatpush1.bf16.msra.mxu0 0
        %2568 = vmatprep.subr.bf16.mxu0 0
        %2569 = vmatpush1.bf16.msra.mxu0 0
        %2570 = vmatprep.subr.bf16.mxu0 0
        %2571 = vmatpush1.bf16.msra.mxu0 0
        %2572 = vmatprep.subr.bf16.mxu0 0
        %2573 = vmatpush1.bf16.msra.mxu0 0
        %2574 = vmatprep.subr.bf16.mxu0 0
        %2575 = vmatpush1.bf16.msra.mxu0 0
        %2576 = vmatprep.subr.bf16.mxu0 0
        %2577 = vmatpush1.bf16.msra.mxu0 0
        %2578 = vmatprep.subr.bf16.mxu0 0
        %2579 = vmatpush1.bf16.msra.mxu0 0
        %2580 = vmatprep.subr.bf16.mxu0 0
        %2581 = vmatpush1.bf16.msra.mxu0 0
        %2582 = vmatprep.subr.bf16.mxu0 0
        %2583 = vmatpush1.bf16.msra.mxu0 0
        %2584 = vmatprep.subr.bf16.mxu0 0
        %2585 = vmatpush1.bf16.msra.mxu0 0
        %2586 = vmatprep.subr.bf16.mxu0 0
        %2587 = vmatpush1.bf16.msra.mxu0 0
        %2588 = vmatprep.mubr.bf16.mxu0 0
        %2589 = vmatmul.mubr.bf16.gmra.mrb[0].mxu0 %v2554
        %v2590 = vpop.f32.mrb[0].mxu0
        %v2591 = vadd.f32 %v2539, %v2590
        %v2592 = vpop.f32.mrb[0].mxu0
        %v2593 = vpop.f32.mrb[0].mxu0
        %v2594 = vpop.f32.mrb[0].mxu0
        %2595 = vdwg.mxu0
        %v2596 = vpack.c.bf16 %v2591, %v2591
        %s2597 = scalar_lea.vmem %s4, 128
        %v2598 = vld [vmem:[%s2597] sm:$0xf]
        %v2599 = vld [vmem:[%s2597 + $0x4] sm:$0xf]
        %v2600 = vld [vmem:[%s2597 + $0x8] sm:$0xf]
        %v2601 = vld [vmem:[%s2597 + $0xc] sm:$0xf]
        %s2602 = scalar_lea.vmem [#allocation2], 8
        %v2603 = vld [vmem:[%s2602] sm:$0x1]
        %v2605 = vlaneseq
        %v2606 = vshrl.u32 %v2605, 7
        %v2607 = vsub.s32 0, %v2606
        %v2608 = vrot.slane %v2603, %v2607
        %v2614 = vunpack.c.l.b16 %v2598
        %v2615 = vunpack.c.l.b16 %v2599
        %v2616 = vunpack.c.l.b16 %v2600
        %v2617 = vunpack.c.l.b16 %v2601
        %v2618 = vpack.c.b16 %v2615, %v2614
        %v2619 = vpack.c.b16 %v2617, %v2616
        %2622 = vmatprep.subr.bf16.mxu0 0
        %2623 = vmatpush1.bf16.msra.mxu0 %v2618
        %2624 = vmatprep.subr.bf16.mxu0 0
        %2625 = vmatpush1.bf16.msra.mxu0 %v2619
        %2626 = vmatprep.subr.bf16.mxu0 0
        %2627 = vmatpush1.bf16.msra.mxu0 0
        %2628 = vmatprep.subr.bf16.mxu0 0
        %2629 = vmatpush1.bf16.msra.mxu0 0
        %2630 = vmatprep.subr.bf16.mxu0 0
        %2631 = vmatpush1.bf16.msra.mxu0 0
        %2632 = vmatprep.subr.bf16.mxu0 0
        %2633 = vmatpush1.bf16.msra.mxu0 0
        %2634 = vmatprep.subr.bf16.mxu0 0
        %2635 = vmatpush1.bf16.msra.mxu0 0
        %2636 = vmatprep.subr.bf16.mxu0 0
        %2637 = vmatpush1.bf16.msra.mxu0 0
        %2638 = vmatprep.subr.bf16.mxu0 0
        %2639 = vmatpush1.bf16.msra.mxu0 0
        %2640 = vmatprep.subr.bf16.mxu0 0
        %2641 = vmatpush1.bf16.msra.mxu0 0
        %2642 = vmatprep.subr.bf16.mxu0 0
        %2643 = vmatpush1.bf16.msra.mxu0 0
        %2644 = vmatprep.subr.bf16.mxu0 0
        %2645 = vmatpush1.bf16.msra.mxu0 0
        %2646 = vmatprep.subr.bf16.mxu0 0
        %2647 = vmatpush1.bf16.msra.mxu0 0
        %2648 = vmatprep.subr.bf16.mxu0 0
        %2649 = vmatpush1.bf16.msra.mxu0 0
        %2650 = vmatprep.subr.bf16.mxu0 0
        %2651 = vmatpush1.bf16.msra.mxu0 0
        %2652 = vmatprep.subr.bf16.mxu0 0
        %2653 = vmatpush1.bf16.msra.mxu0 0
        %2654 = vmatprep.mubr.bf16.mxu0 0
        %2655 = vmatmul.mubr.bf16.gmra.mrb[0].mxu0 %v2554
        %v2656 = vpop.f32.mrb[0].mxu0
        %v2657 = vadd.f32 %v2608, %v2656
        %v2658 = vpop.f32.mrb[0].mxu0
        %v2659 = vpop.f32.mrb[0].mxu0
        %v2660 = vpop.f32.mrb[0].mxu0
        %2661 = vdwg.mxu0
        %v2662 = vpack.c.bf16 %v2657, %v2657
        %v2663 = vsel %vm751, %v2527, 0
        %v2665 = vsel %vm564, %v2663, 0
        %v2668 = vsel %vm564, %v2596, 0
        %2670 = vmatprep.subr.bf16.mxu0 0
        %2671 = vmatpush1.bf16.xpose.msra.mxu0 %v2668
        %2672 = vmatprep.subr.bf16.mxu0 0
        %2673 = vmatpush1.bf16.xpose.msra.mxu0 0
        %2674 = vmatprep.subr.bf16.mxu0 0
        %2675 = vmatpush1.bf16.xpose.msra.mxu0 0
        %2676 = vmatprep.subr.bf16.mxu0 0
        %2677 = vmatpush1.bf16.xpose.msra.mxu0 0
        %2678 = vmatprep.subr.bf16.mxu0 0
        %2679 = vmatpush1.bf16.xpose.msra.mxu0 0
        %2680 = vmatprep.subr.bf16.mxu0 0
        %2681 = vmatpush1.bf16.xpose.msra.mxu0 0
        %2682 = vmatprep.subr.bf16.mxu0 0
        %2683 = vmatpush1.bf16.xpose.msra.mxu0 0
        %2684 = vmatprep.subr.bf16.mxu0 0
        %2685 = vmatpush1.bf16.xpose.msra.mxu0 0
        %2686 = vmatprep.subr.bf16.mxu0 0
        %2687 = vmatpush1.bf16.xpose.msra.mxu0 0
        %2688 = vmatprep.subr.bf16.mxu0 0
        %2689 = vmatpush1.bf16.xpose.msra.mxu0 0
        %2690 = vmatprep.subr.bf16.mxu0 0
        %2691 = vmatpush1.bf16.xpose.msra.mxu0 0
        %2692 = vmatprep.subr.bf16.mxu0 0
        %2693 = vmatpush1.bf16.xpose.msra.mxu0 0
        %2694 = vmatprep.subr.bf16.mxu0 0
        %2695 = vmatpush1.bf16.xpose.msra.mxu0 0
        %2696 = vmatprep.subr.bf16.mxu0 0
        %2697 = vmatpush1.bf16.xpose.msra.mxu0 0
        %2698 = vmatprep.subr.bf16.mxu0 0
        %2699 = vmatpush1.bf16.xpose.msra.mxu0 0
        %2700 = vmatprep.subr.bf16.mxu0 0
        %2701 = vmatpush1.bf16.xpose.msra.mxu0 0
        %2702 = vmatprep.mubr.bf16.mxu0 0
        %2703 = vmatmul.mubr.bf16.gmra.mrb[0].mxu0 %v2665
        %v2704 = vpop.f32.mrb[0].mxu0
        %v2705 = vadd.f32 0.0, %v2704
        %v2706 = vpop.f32.mrb[0].mxu0
        %v2707 = vpop.f32.mrb[0].mxu0
        %v2708 = vpop.f32.mrb[0].mxu0
        %2709 = vdwg.mxu0
        %v2710 = vmul.f32 %v2705, 0.35355338
        %v2711 = vsel %vm1635, %v2710, -inf
        %2712 = vmax.xlane.f32.xlu0 %v2711
        %v2713 = vpop.xlane.xlu0 %2712
        %v2714 = vsub.f32 %v2710, %v2713
        %v2715 = vmul.f32 %v2714, 1.442695
        %v2716 = vpow.pop %v2715
        %v2717 = vsel %vm1635, %v2716, 0.0
        %2718 = vadd.xlane.f32.xlu0 %v2717
        %v2719 = vpop.xlane.xlu0 %2718
        %v2720 = vrcp.pop %v2719
        %v2721 = vmul.f32 %v2716, %v2720
        %v2722 = vsel %vm751, %v2662, 0
        %v2723 = vpack.c.bf16 %v2721, %v2721
        %v2724 = vsel %vm825, %v2527, 0
        %v2726 = vsel %vm564, %v2724, 0
        %2728 = vmatprep.subr.bf16.mxu0 0
        %2729 = vmatpush1.bf16.xpose.msra.mxu0 %v2668
        %2730 = vmatprep.subr.bf16.mxu0 0
        %2731 = vmatpush1.bf16.xpose.msra.mxu0 0
        %2732 = vmatprep.subr.bf16.mxu0 0
        %2733 = vmatpush1.bf16.xpose.msra.mxu0 0
        %2734 = vmatprep.subr.bf16.mxu0 0
        %2735 = vmatpush1.bf16.xpose.msra.mxu0 0
        %2736 = vmatprep.subr.bf16.mxu0 0
        %2737 = vmatpush1.bf16.xpose.msra.mxu0 0
        %2738 = vmatprep.subr.bf16.mxu0 0
        %2739 = vmatpush1.bf16.xpose.msra.mxu0 0
        %2740 = vmatprep.subr.bf16.mxu0 0
        %2741 = vmatpush1.bf16.xpose.msra.mxu0 0
        %2742 = vmatprep.subr.bf16.mxu0 0
        %2743 = vmatpush1.bf16.xpose.msra.mxu0 0
        %2744 = vmatprep.subr.bf16.mxu0 0
        %2745 = vmatpush1.bf16.xpose.msra.mxu0 0
        %2746 = vmatprep.subr.bf16.mxu0 0
        %2747 = vmatpush1.bf16.xpose.msra.mxu0 0
        %2748 = vmatprep.subr.bf16.mxu0 0
        %2749 = vmatpush1.bf16.xpose.msra.mxu0 0
        %2750 = vmatprep.subr.bf16.mxu0 0
        %2751 = vmatpush1.bf16.xpose.msra.mxu0 0
        %2752 = vmatprep.subr.bf16.mxu0 0
        %2753 = vmatpush1.bf16.xpose.msra.mxu0 0
        %2754 = vmatprep.subr.bf16.mxu0 0
        %2755 = vmatpush1.bf16.xpose.msra.mxu0 0
        %2756 = vmatprep.subr.bf16.mxu0 0
        %2757 = vmatpush1.bf16.xpose.msra.mxu0 0
        %2758 = vmatprep.subr.bf16.mxu0 0
        %2759 = vmatpush1.bf16.xpose.msra.mxu0 0
        %2760 = vmatprep.mubr.bf16.mxu0 0
        %2761 = vmatmul.mubr.bf16.gmra.mrb[0].mxu0 %v2726
        %v2762 = vpop.f32.mrb[0].mxu0
        %v2763 = vadd.f32 0.0, %v2762
        %v2764 = vpop.f32.mrb[0].mxu0
        %v2765 = vpop.f32.mrb[0].mxu0
        %v2766 = vpop.f32.mrb[0].mxu0
        %2767 = vdwg.mxu0
        %v2768 = vmul.f32 %v2763, 0.35355338
        %v2769 = vsel %vm1635, %v2768, -inf
        %2770 = vmax.xlane.f32.xlu0 %v2769
        %v2771 = vpop.xlane.xlu0 %2770
        %v2772 = vsub.f32 %v2768, %v2771
        %v2773 = vmul.f32 %v2772, 1.442695
        %v2774 = vpow.pop %v2773
        %v2775 = vsel %vm1635, %v2774, 0.0
        %2776 = vadd.xlane.f32.xlu0 %v2775
        %v2777 = vpop.xlane.xlu0 %2776
        %v2778 = vrcp.pop %v2777
        %v2779 = vmul.f32 %v2774, %v2778
        %v2780 = vsel %vm825, %v2662, 0
        %v2781 = vpack.c.bf16 %v2779, %v2779
        %v2783 = vsel %vm1635, %v2781, 0
        %v2786 = vsel %vm1710, %v2780, 0
        %2788 = vmatprep.subr.bf16.mxu0 0
        %2789 = vmatpush1.bf16.msra.mxu0 %v2786
        %2790 = vmatprep.subr.bf16.mxu0 0
        %2791 = vmatpush1.bf16.msra.mxu0 0
        %2792 = vmatprep.subr.bf16.mxu0 0
        %2793 = vmatpush1.bf16.msra.mxu0 0
        %2794 = vmatprep.subr.bf16.mxu0 0
        %2795 = vmatpush1.bf16.msra.mxu0 0
        %2796 = vmatprep.subr.bf16.mxu0 0
        %2797 = vmatpush1.bf16.msra.mxu0 0
        %2798 = vmatprep.subr.bf16.mxu0 0
        %2799 = vmatpush1.bf16.msra.mxu0 0
        %2800 = vmatprep.subr.bf16.mxu0 0
        %2801 = vmatpush1.bf16.msra.mxu0 0
        %2802 = vmatprep.subr.bf16.mxu0 0
        %2803 = vmatpush1.bf16.msra.mxu0 0
        %2804 = vmatprep.subr.bf16.mxu0 0
        %2805 = vmatpush1.bf16.msra.mxu0 0
        %2806 = vmatprep.subr.bf16.mxu0 0
        %2807 = vmatpush1.bf16.msra.mxu0 0
        %2808 = vmatprep.subr.bf16.mxu0 0
        %2809 = vmatpush1.bf16.msra.mxu0 0
        %2810 = vmatprep.subr.bf16.mxu0 0
        %2811 = vmatpush1.bf16.msra.mxu0 0
        %2812 = vmatprep.subr.bf16.mxu0 0
        %2813 = vmatpush1.bf16.msra.mxu0 0
        %2814 = vmatprep.subr.bf16.mxu0 0
        %2815 = vmatpush1.bf16.msra.mxu0 0
        %2816 = vmatprep.subr.bf16.mxu0 0
        %2817 = vmatpush1.bf16.msra.mxu0 0
        %2818 = vmatprep.subr.bf16.mxu0 0
        %2819 = vmatpush1.bf16.msra.mxu0 0
        %2820 = vmatprep.mubr.bf16.mxu0 0
        %2821 = vmatmul.mubr.bf16.gmra.mrb[0].mxu0 %v2783
        %v2822 = vpop.f32.mrb[0].mxu0
        %v2823 = vadd.f32 0.0, %v2822
        %v2824 = vpop.f32.mrb[0].mxu0
        %v2825 = vpop.f32.mrb[0].mxu0
        %v2826 = vpop.f32.mrb[0].mxu0
        %2827 = vdwg.mxu0
        %v2829 = vsel %vm1635, %v2723, 0
        %v2832 = vsel %vm1710, %v2722, 0
        %2834 = vmatprep.subr.bf16.mxu0 0
        %2835 = vmatpush1.bf16.msra.mxu0 %v2832
        %2836 = vmatprep.subr.bf16.mxu0 0
        %2837 = vmatpush1.bf16.msra.mxu0 0
        %2838 = vmatprep.subr.bf16.mxu0 0
        %2839 = vmatpush1.bf16.msra.mxu0 0
        %2840 = vmatprep.subr.bf16.mxu0 0
        %2841 = vmatpush1.bf16.msra.mxu0 0
        %2842 = vmatprep.subr.bf16.mxu0 0
        %2843 = vmatpush1.bf16.msra.mxu0 0
        %2844 = vmatprep.subr.bf16.mxu0 0
        %2845 = vmatpush1.bf16.msra.mxu0 0
        %2846 = vmatprep.subr.bf16.mxu0 0
        %2847 = vmatpush1.bf16.msra.mxu0 0
        %2848 = vmatprep.subr.bf16.mxu0 0
        %2849 = vmatpush1.bf16.msra.mxu0 0
        %2850 = vmatprep.subr.bf16.mxu0 0
        %2851 = vmatpush1.bf16.msra.mxu0 0
        %2852 = vmatprep.subr.bf16.mxu0 0
        %2853 = vmatpush1.bf16.msra.mxu0 0
        %2854 = vmatprep.subr.bf16.mxu0 0
        %2855 = vmatpush1.bf16.msra.mxu0 0
        %2856 = vmatprep.subr.bf16.mxu0 0
        %2857 = vmatpush1.bf16.msra.mxu0 0
        %2858 = vmatprep.subr.bf16.mxu0 0
        %2859 = vmatpush1.bf16.msra.mxu0 0
        %2860 = vmatprep.subr.bf16.mxu0 0
        %2861 = vmatpush1.bf16.msra.mxu0 0
        %2862 = vmatprep.subr.bf16.mxu0 0
        %2863 = vmatpush1.bf16.msra.mxu0 0
        %2864 = vmatprep.subr.bf16.mxu0 0
        %2865 = vmatpush1.bf16.msra.mxu0 0
        %2866 = vmatprep.mubr.bf16.mxu0 0
        %2867 = vmatmul.mubr.bf16.gmra.mrb[0].mxu0 %v2829
        %v2868 = vpop.f32.mrb[0].mxu0
        %v2869 = vadd.f32 %v2823, %v2868
        %v2870 = vpop.f32.mrb[0].mxu0
        %v2871 = vpop.f32.mrb[0].mxu0
        %v2872 = vpop.f32.mrb[0].mxu0
        %2873 = vdwg.mxu0
        %v2874 = vsel %vm988, %v2527, 0
        %v2876 = vsel %vm564, %v2874, 0
        %2878 = vmatprep.subr.bf16.mxu0 0
        %2879 = vmatpush1.bf16.xpose.msra.mxu0 %v2668
        %2880 = vmatprep.subr.bf16.mxu0 0
        %2881 = vmatpush1.bf16.xpose.msra.mxu0 0
        %2882 = vmatprep.subr.bf16.mxu0 0
        %2883 = vmatpush1.bf16.xpose.msra.mxu0 0
        %2884 = vmatprep.subr.bf16.mxu0 0
        %2885 = vmatpush1.bf16.xpose.msra.mxu0 0
        %2886 = vmatprep.subr.bf16.mxu0 0
        %2887 = vmatpush1.bf16.xpose.msra.mxu0 0
        %2888 = vmatprep.subr.bf16.mxu0 0
        %2889 = vmatpush1.bf16.xpose.msra.mxu0 0
        %2890 = vmatprep.subr.bf16.mxu0 0
        %2891 = vmatpush1.bf16.xpose.msra.mxu0 0
        %2892 = vmatprep.subr.bf16.mxu0 0
        %2893 = vmatpush1.bf16.xpose.msra.mxu0 0
        %2894 = vmatprep.subr.bf16.mxu0 0
        %2895 = vmatpush1.bf16.xpose.msra.mxu0 0
        %2896 = vmatprep.subr.bf16.mxu0 0
        %2897 = vmatpush1.bf16.xpose.msra.mxu0 0
        %2898 = vmatprep.subr.bf16.mxu0 0
        %2899 = vmatpush1.bf16.xpose.msra.mxu0 0
        %2900 = vmatprep.subr.bf16.mxu0 0
        %2901 = vmatpush1.bf16.xpose.msra.mxu0 0
        %2902 = vmatprep.subr.bf16.mxu0 0
        %2903 = vmatpush1.bf16.xpose.msra.mxu0 0
        %2904 = vmatprep.subr.bf16.mxu0 0
        %2905 = vmatpush1.bf16.xpose.msra.mxu0 0
        %2906 = vmatprep.subr.bf16.mxu0 0
        %2907 = vmatpush1.bf16.xpose.msra.mxu0 0
        %2908 = vmatprep.subr.bf16.mxu0 0
        %2909 = vmatpush1.bf16.xpose.msra.mxu0 0
        %2910 = vmatprep.mubr.bf16.mxu0 0
        %2911 = vmatmul.mubr.bf16.gmra.mrb[0].mxu0 %v2876
        %v2912 = vpop.f32.mrb[0].mxu0
        %v2913 = vadd.f32 0.0, %v2912
        %v2914 = vpop.f32.mrb[0].mxu0
        %v2915 = vpop.f32.mrb[0].mxu0
        %v2916 = vpop.f32.mrb[0].mxu0
        %2917 = vdwg.mxu0
        %v2918 = vmul.f32 %v2913, 0.35355338
        %v2919 = vsel %vm1635, %v2918, -inf
        %2920 = vmax.xlane.f32.xlu0 %v2919
        %v2921 = vpop.xlane.xlu0 %2920
        %v2922 = vsub.f32 %v2918, %v2921
        %v2923 = vmul.f32 %v2922, 1.442695
        %v2924 = vpow.pop %v2923
        %v2925 = vsel %vm1635, %v2924, 0.0
        %2926 = vadd.xlane.f32.xlu0 %v2925
        %v2927 = vpop.xlane.xlu0 %2926
        %v2928 = vrcp.pop %v2927
        %v2929 = vmul.f32 %v2924, %v2928
        %v2930 = vsel %vm988, %v2662, 0
        %v2931 = vpack.c.bf16 %v2929, %v2929
        %v2933 = vsel %vm1635, %v2931, 0
        %v2936 = vsel %vm1710, %v2930, 0
        %2938 = vmatprep.subr.bf16.mxu0 0
        %2939 = vmatpush1.bf16.msra.mxu0 %v2936
        %2940 = vmatprep.subr.bf16.mxu0 0
        %2941 = vmatpush1.bf16.msra.mxu0 0
        %2942 = vmatprep.subr.bf16.mxu0 0
        %2943 = vmatpush1.bf16.msra.mxu0 0
        %2944 = vmatprep.subr.bf16.mxu0 0
        %2945 = vmatpush1.bf16.msra.mxu0 0
        %2946 = vmatprep.subr.bf16.mxu0 0
        %2947 = vmatpush1.bf16.msra.mxu0 0
        %2948 = vmatprep.subr.bf16.mxu0 0
        %2949 = vmatpush1.bf16.msra.mxu0 0
        %2950 = vmatprep.subr.bf16.mxu0 0
        %2951 = vmatpush1.bf16.msra.mxu0 0
        %2952 = vmatprep.subr.bf16.mxu0 0
        %2953 = vmatpush1.bf16.msra.mxu0 0
        %2954 = vmatprep.subr.bf16.mxu0 0
        %2955 = vmatpush1.bf16.msra.mxu0 0
        %2956 = vmatprep.subr.bf16.mxu0 0
        %2957 = vmatpush1.bf16.msra.mxu0 0
        %2958 = vmatprep.subr.bf16.mxu0 0
        %2959 = vmatpush1.bf16.msra.mxu0 0
        %2960 = vmatprep.subr.bf16.mxu0 0
        %2961 = vmatpush1.bf16.msra.mxu0 0
        %2962 = vmatprep.subr.bf16.mxu0 0
        %2963 = vmatpush1.bf16.msra.mxu0 0
        %2964 = vmatprep.subr.bf16.mxu0 0
        %2965 = vmatpush1.bf16.msra.mxu0 0
        %2966 = vmatprep.subr.bf16.mxu0 0
        %2967 = vmatpush1.bf16.msra.mxu0 0
        %2968 = vmatprep.subr.bf16.mxu0 0
        %2969 = vmatpush1.bf16.msra.mxu0 0
        %2970 = vmatprep.mubr.bf16.mxu0 0
        %2971 = vmatmul.mubr.bf16.gmra.mrb[0].mxu0 %v2933
        %v2972 = vpop.f32.mrb[0].mxu0
        %v2973 = vadd.f32 0.0, %v2972
        %v2974 = vpop.f32.mrb[0].mxu0
        %v2975 = vpop.f32.mrb[0].mxu0
        %v2976 = vpop.f32.mrb[0].mxu0
        %2977 = vdwg.mxu0
        %v2978 = vadd.f32 %v2869, %v2973
        %v2979 = vsel %vm1105, %v2527, 0
        %v2981 = vsel %vm564, %v2979, 0
        %2983 = vmatprep.subr.bf16.mxu0 0
        %2984 = vmatpush1.bf16.xpose.msra.mxu0 %v2668
        %2985 = vmatprep.subr.bf16.mxu0 0
        %2986 = vmatpush1.bf16.xpose.msra.mxu0 0
        %2987 = vmatprep.subr.bf16.mxu0 0
        %2988 = vmatpush1.bf16.xpose.msra.mxu0 0
        %2989 = vmatprep.subr.bf16.mxu0 0
        %2990 = vmatpush1.bf16.xpose.msra.mxu0 0
        %2991 = vmatprep.subr.bf16.mxu0 0
        %2992 = vmatpush1.bf16.xpose.msra.mxu0 0
        %2993 = vmatprep.subr.bf16.mxu0 0
        %2994 = vmatpush1.bf16.xpose.msra.mxu0 0
        %2995 = vmatprep.subr.bf16.mxu0 0
        %2996 = vmatpush1.bf16.xpose.msra.mxu0 0
        %2997 = vmatprep.subr.bf16.mxu0 0
        %2998 = vmatpush1.bf16.xpose.msra.mxu0 0
        %2999 = vmatprep.subr.bf16.mxu0 0
        %3000 = vmatpush1.bf16.xpose.msra.mxu0 0
        %3001 = vmatprep.subr.bf16.mxu0 0
        %3002 = vmatpush1.bf16.xpose.msra.mxu0 0
        %3003 = vmatprep.subr.bf16.mxu0 0
        %3004 = vmatpush1.bf16.xpose.msra.mxu0 0
        %3005 = vmatprep.subr.bf16.mxu0 0
        %3006 = vmatpush1.bf16.xpose.msra.mxu0 0
        %3007 = vmatprep.subr.bf16.mxu0 0
        %3008 = vmatpush1.bf16.xpose.msra.mxu0 0
        %3009 = vmatprep.subr.bf16.mxu0 0
        %3010 = vmatpush1.bf16.xpose.msra.mxu0 0
        %3011 = vmatprep.subr.bf16.mxu0 0
        %3012 = vmatpush1.bf16.xpose.msra.mxu0 0
        %3013 = vmatprep.subr.bf16.mxu0 0
        %3014 = vmatpush1.bf16.xpose.msra.mxu0 0
        %3015 = vmatprep.mubr.bf16.mxu0 0
        %3016 = vmatmul.mubr.bf16.gmra.mrb[0].mxu0 %v2981
        %v3017 = vpop.f32.mrb[0].mxu0
        %v3018 = vadd.f32 0.0, %v3017
        %v3019 = vpop.f32.mrb[0].mxu0
        %v3020 = vpop.f32.mrb[0].mxu0
        %v3021 = vpop.f32.mrb[0].mxu0
        %3022 = vdwg.mxu0
        %v3023 = vmul.f32 %v3018, 0.35355338
        %v3024 = vsel %vm1635, %v3023, -inf
        %3025 = vmax.xlane.f32.xlu0 %v3024
        %v3026 = vpop.xlane.xlu0 %3025
        %v3027 = vsub.f32 %v3023, %v3026
        %v3028 = vmul.f32 %v3027, 1.442695
        %v3029 = vpow.pop %v3028
        %v3030 = vsel %vm1635, %v3029, 0.0
        %3031 = vadd.xlane.f32.xlu0 %v3030
        %v3032 = vpop.xlane.xlu0 %3031
        %v3033 = vrcp.pop %v3032
        %v3034 = vmul.f32 %v3029, %v3033
        %v3035 = vsel %vm1105, %v2662, 0
        %v3036 = vpack.c.bf16 %v3034, %v3034
        %v3038 = vsel %vm1635, %v3036, 0
        %v3041 = vsel %vm1710, %v3035, 0
        %3043 = vmatprep.subr.bf16.mxu0 0
        %3044 = vmatpush1.bf16.msra.mxu0 %v3041
        %3045 = vmatprep.subr.bf16.mxu0 0
        %3046 = vmatpush1.bf16.msra.mxu0 0
        %3047 = vmatprep.subr.bf16.mxu0 0
        %3048 = vmatpush1.bf16.msra.mxu0 0
        %3049 = vmatprep.subr.bf16.mxu0 0
        %3050 = vmatpush1.bf16.msra.mxu0 0
        %3051 = vmatprep.subr.bf16.mxu0 0
        %3052 = vmatpush1.bf16.msra.mxu0 0
        %3053 = vmatprep.subr.bf16.mxu0 0
        %3054 = vmatpush1.bf16.msra.mxu0 0
        %3055 = vmatprep.subr.bf16.mxu0 0
        %3056 = vmatpush1.bf16.msra.mxu0 0
        %3057 = vmatprep.subr.bf16.mxu0 0
        %3058 = vmatpush1.bf16.msra.mxu0 0
        %3059 = vmatprep.subr.bf16.mxu0 0
        %3060 = vmatpush1.bf16.msra.mxu0 0
        %3061 = vmatprep.subr.bf16.mxu0 0
        %3062 = vmatpush1.bf16.msra.mxu0 0
        %3063 = vmatprep.subr.bf16.mxu0 0
        %3064 = vmatpush1.bf16.msra.mxu0 0
        %3065 = vmatprep.subr.bf16.mxu0 0
        %3066 = vmatpush1.bf16.msra.mxu0 0
        %3067 = vmatprep.subr.bf16.mxu0 0
        %3068 = vmatpush1.bf16.msra.mxu0 0
        %3069 = vmatprep.subr.bf16.mxu0 0
        %3070 = vmatpush1.bf16.msra.mxu0 0
        %3071 = vmatprep.subr.bf16.mxu0 0
        %3072 = vmatpush1.bf16.msra.mxu0 0
        %3073 = vmatprep.subr.bf16.mxu0 0
        %3074 = vmatpush1.bf16.msra.mxu0 0
        %3075 = vmatprep.mubr.bf16.mxu0 0
        %3076 = vmatmul.mubr.bf16.gmra.mrb[0].mxu0 %v3038
        %v3077 = vpop.f32.mrb[0].mxu0
        %v3078 = vadd.f32 0.0, %v3077
        %v3079 = vpop.f32.mrb[0].mxu0
        %v3080 = vpop.f32.mrb[0].mxu0
        %v3081 = vpop.f32.mrb[0].mxu0
        %3082 = vdwg.mxu0
        %v3083 = vadd.f32 %v2978, %v3078
        %v3084 = vpack.c.bf16 %v3083, %v3083
        %s3085 = scalar_lea.vmem [#allocation4], 32
        %v3086 = vld [vmem:[%s3085] sm:$0xf]
        %v3087 = vld [vmem:[%s3085 + $0x4] sm:$0xf]
        %v3088 = vld [vmem:[%s3085 + $0x8] sm:$0xf]
        %v3089 = vld [vmem:[%s3085 + $0xc] sm:$0xf]
        %s3090 = scalar_lea.vmem [#allocation7], 2
        %v3091 = vld [vmem:[%s3090] sm:$0x1]
        %v3093 = vlaneseq
        %v3094 = vshrl.u32 %v3093, 7
        %v3095 = vsub.s32 0, %v3094
        %v3096 = vrot.slane %v3091, %v3095
        %v3102 = vunpack.c.l.b16 %v3086
        %v3103 = vunpack.c.l.b16 %v3087
        %v3104 = vunpack.c.l.b16 %v3088
        %v3105 = vunpack.c.l.b16 %v3089
        %v3106 = vpack.c.b16 %v3103, %v3102
        %v3107 = vpack.c.b16 %v3105, %v3104
        %v3111 = vsel %vm564, %v3084, 0
        %3113 = vmatprep.subr.bf16.mxu0 0
        %3114 = vmatpush1.bf16.msra.mxu0 %v3106
        %3115 = vmatprep.subr.bf16.mxu0 0
        %3116 = vmatpush1.bf16.msra.mxu0 %v3107
        %3117 = vmatprep.subr.bf16.mxu0 0
        %3118 = vmatpush1.bf16.msra.mxu0 0
        %3119 = vmatprep.subr.bf16.mxu0 0
        %3120 = vmatpush1.bf16.msra.mxu0 0
        %3121 = vmatprep.subr.bf16.mxu0 0
        %3122 = vmatpush1.bf16.msra.mxu0 0
        %3123 = vmatprep.subr.bf16.mxu0 0
        %3124 = vmatpush1.bf16.msra.mxu0 0
        %3125 = vmatprep.subr.bf16.mxu0 0
        %3126 = vmatpush1.bf16.msra.mxu0 0
        %3127 = vmatprep.subr.bf16.mxu0 0
        %3128 = vmatpush1.bf16.msra.mxu0 0
        %3129 = vmatprep.subr.bf16.mxu0 0
        %3130 = vmatpush1.bf16.msra.mxu0 0
        %3131 = vmatprep.subr.bf16.mxu0 0
        %3132 = vmatpush1.bf16.msra.mxu0 0
        %3133 = vmatprep.subr.bf16.mxu0 0
        %3134 = vmatpush1.bf16.msra.mxu0 0
        %3135 = vmatprep.subr.bf16.mxu0 0
        %3136 = vmatpush1.bf16.msra.mxu0 0
        %3137 = vmatprep.subr.bf16.mxu0 0
        %3138 = vmatpush1.bf16.msra.mxu0 0
        %3139 = vmatprep.subr.bf16.mxu0 0
        %3140 = vmatpush1.bf16.msra.mxu0 0
        %3141 = vmatprep.subr.bf16.mxu0 0
        %3142 = vmatpush1.bf16.msra.mxu0 0
        %3143 = vmatprep.subr.bf16.mxu0 0
        %3144 = vmatpush1.bf16.msra.mxu0 0
        %3145 = vmatprep.mubr.bf16.mxu0 0
        %3146 = vmatmul.mubr.bf16.gmra.mrb[0].mxu0 %v3111
        %v3147 = vpop.f32.mrb[0].mxu0
        %v3148 = vadd.f32 %v3096, %v3147
        %v3149 = vpop.f32.mrb[0].mxu0
        %v3150 = vpop.f32.mrb[0].mxu0
        %v3151 = vpop.f32.mrb[0].mxu0
        %3152 = vdwg.mxu0
        %v3153 = vpack.c.bf16 %v3148, %v3148
        %v3154 = vld [vmem:[#allocation6] sm:$0xf]
        %v3155 = vld [vmem:[#allocation6 + $0x4] sm:$0xf]
        %v3156 = vld [vmem:[#allocation6 + $0x8] sm:$0xf]
        %v3157 = vld [vmem:[#allocation6 + $0xc] sm:$0xf]
        %v3158 = vld [vmem:[%s9] sm:$0x1]
        %v3160 = vlaneseq
        %v3161 = vshrl.u32 %v3160, 7
        %v3162 = vsub.s32 0, %v3161
        %v3163 = vrot.slane %v3158, %v3162
        %v3169 = vunpack.c.l.b16 %v3154
        %v3170 = vunpack.c.l.b16 %v3155
        %v3171 = vunpack.c.l.b16 %v3156
        %v3172 = vunpack.c.l.b16 %v3157
        %v3173 = vpack.c.b16 %v3170, %v3169
        %v3174 = vpack.c.b16 %v3172, %v3171
        %v3178 = vsel %vm564, %v3153, 0
        %3180 = vmatprep.subr.bf16.mxu0 0
        %3181 = vmatpush1.bf16.msra.mxu0 %v3173
        %3182 = vmatprep.subr.bf16.mxu0 0
        %3183 = vmatpush1.bf16.msra.mxu0 %v3174
        %3184 = vmatprep.subr.bf16.mxu0 0
        %3185 = vmatpush1.bf16.msra.mxu0 0
        %3186 = vmatprep.subr.bf16.mxu0 0
        %3187 = vmatpush1.bf16.msra.mxu0 0
        %3188 = vmatprep.subr.bf16.mxu0 0
        %3189 = vmatpush1.bf16.msra.mxu0 0
        %3190 = vmatprep.subr.bf16.mxu0 0
        %3191 = vmatpush1.bf16.msra.mxu0 0
        %3192 = vmatprep.subr.bf16.mxu0 0
        %3193 = vmatpush1.bf16.msra.mxu0 0
        %3194 = vmatprep.subr.bf16.mxu0 0
        %3195 = vmatpush1.bf16.msra.mxu0 0
        %3196 = vmatprep.subr.bf16.mxu0 0
        %3197 = vmatpush1.bf16.msra.mxu0 0
        %3198 = vmatprep.subr.bf16.mxu0 0
        %3199 = vmatpush1.bf16.msra.mxu0 0
        %3200 = vmatprep.subr.bf16.mxu0 0
        %3201 = vmatpush1.bf16.msra.mxu0 0
        %3202 = vmatprep.subr.bf16.mxu0 0
        %3203 = vmatpush1.bf16.msra.mxu0 0
        %3204 = vmatprep.subr.bf16.mxu0 0
        %3205 = vmatpush1.bf16.msra.mxu0 0
        %3206 = vmatprep.subr.bf16.mxu0 0
        %3207 = vmatpush1.bf16.msra.mxu0 0
        %3208 = vmatprep.subr.bf16.mxu0 0
        %3209 = vmatpush1.bf16.msra.mxu0 0
        %3210 = vmatprep.subr.bf16.mxu0 0
        %3211 = vmatpush1.bf16.msra.mxu0 0
        %3212 = vmatprep.mubr.bf16.mxu0 0
        %3213 = vmatmul.mubr.bf16.gmra.mrb[0].mxu0 %v3178
        %v3214 = vpop.f32.mrb[0].mxu0
        %v3215 = vadd.f32 %v3163, %v3214
        %v3216 = vpop.f32.mrb[0].mxu0
        %v3217 = vpop.f32.mrb[0].mxu0
        %v3218 = vpop.f32.mrb[0].mxu0
        %3219 = vdwg.mxu0
        %v3220 = vmax.f32 %v3215, 0.0
        %v3221 = vpack.c.bf16 %v3220, %v3220
        %v3222 = vld [vmem:[%s8] sm:$0xf]
        %v3223 = vld [vmem:[%s8 + $0x4] sm:$0xf]
        %v3224 = vld [vmem:[%s8 + $0x8] sm:$0xf]
        %v3225 = vld [vmem:[%s8 + $0xc] sm:$0xf]
        %v3226 = vld [vmem:[%s8 + $0x10] sm:$0xf]
        %v3227 = vld [vmem:[%s8 + $0x14] sm:$0xf]
        %v3228 = vld [vmem:[%s8 + $0x18] sm:$0xf]
        %v3229 = vld [vmem:[%s8 + $0x1c] sm:$0xf]
        %s3230 = scalar_lea.vmem [#allocation7], 4
        %v3231 = vld [vmem:[%s3230] sm:$0x1]
        %v3233 = vlaneseq
        %v3234 = vshrl.u32 %v3233, 7
        %v3235 = vsub.s32 0, %v3234
        %v3236 = vrot.slane %v3231, %v3235
        %v3246 = vunpack.c.l.b16 %v3222
        %v3247 = vunpack.c.l.b16 %v3223
        %v3248 = vunpack.c.l.b16 %v3224
        %v3249 = vunpack.c.l.b16 %v3225
        %v3250 = vunpack.c.l.b16 %v3226
        %v3251 = vunpack.c.l.b16 %v3227
        %v3252 = vunpack.c.l.b16 %v3228
        %v3253 = vunpack.c.l.b16 %v3229
        %v3254 = vpack.c.b16 %v3247, %v3246
        %v3255 = vpack.c.b16 %v3249, %v3248
        %v3256 = vpack.c.b16 %v3251, %v3250
        %v3257 = vpack.c.b16 %v3253, %v3252
        %vm3262 = vcmask 523264
        %v3264 = vsel %vm3262, %v3221, 0
        %3266 = vmatprep.subr.bf16.mxu0 0
        %3267 = vmatpush1.bf16.msra.mxu0 %v3254
        %3268 = vmatprep.subr.bf16.mxu0 0
        %3269 = vmatpush1.bf16.msra.mxu0 %v3255
        %3270 = vmatprep.subr.bf16.mxu0 0
        %3271 = vmatpush1.bf16.msra.mxu0 %v3256
        %3272 = vmatprep.subr.bf16.mxu0 0
        %3273 = vmatpush1.bf16.msra.mxu0 %v3257
        %3274 = vmatprep.subr.bf16.mxu0 0
        %3275 = vmatpush1.bf16.msra.mxu0 0
        %3276 = vmatprep.subr.bf16.mxu0 0
        %3277 = vmatpush1.bf16.msra.mxu0 0
        %3278 = vmatprep.subr.bf16.mxu0 0
        %3279 = vmatpush1.bf16.msra.mxu0 0
        %3280 = vmatprep.subr.bf16.mxu0 0
        %3281 = vmatpush1.bf16.msra.mxu0 0
        %3282 = vmatprep.subr.bf16.mxu0 0
        %3283 = vmatpush1.bf16.msra.mxu0 0
        %3284 = vmatprep.subr.bf16.mxu0 0
        %3285 = vmatpush1.bf16.msra.mxu0 0
        %3286 = vmatprep.subr.bf16.mxu0 0
        %3287 = vmatpush1.bf16.msra.mxu0 0
        %3288 = vmatprep.subr.bf16.mxu0 0
        %3289 = vmatpush1.bf16.msra.mxu0 0
        %3290 = vmatprep.subr.bf16.mxu0 0
        %3291 = vmatpush1.bf16.msra.mxu0 0
        %3292 = vmatprep.subr.bf16.mxu0 0
        %3293 = vmatpush1.bf16.msra.mxu0 0
        %3294 = vmatprep.subr.bf16.mxu0 0
        %3295 = vmatpush1.bf16.msra.mxu0 0
        %3296 = vmatprep.subr.bf16.mxu0 0
        %3297 = vmatpush1.bf16.msra.mxu0 0
        %3298 = vmatprep.mubr.bf16.mxu0 0
        %3299 = vmatmul.mubr.bf16.gmra.mrb[0].mxu0 %v3264
        %v3300 = vpop.f32.mrb[0].mxu0
        %v3301 = vadd.f32 %v3236, %v3300
        %v3302 = vpop.f32.mrb[0].mxu0
        %v3303 = vpop.f32.mrb[0].mxu0
        %v3304 = vpop.f32.mrb[0].mxu0
        %3305 = vdwg.mxu0
        %v3306 = vadd.f32 %v3148, %v3301
        %v3307 = vsel %vm564, %v3306, 0.0
        %3308 = vadd.xlane.f32.xlu0 %v3307
        %v3309 = vpop.xlane.xlu0 %3308
        %v3310 = vmul.f32 %v3309, %v1356
        %v3311 = vsub.f32 %v3306, %v3310
        %v3312 = vmul.f32 %v3311, %v3311
        %v3313 = vsel %vm564, %v3312, 0.0
        %3314 = vadd.xlane.f32.xlu0 %v3313
        %v3315 = vpop.xlane.xlu0 %3314
        %v3316 = vmul.f32 %v3315, %v1356
        %v3317 = vadd.f32 %v3316, 1e-05
        %v3318 = vrsqrt.pop %v3317
        %v3319 = vmul.f32 %v3311, %v3318
        %s3320 = scalar_lea.vmem [#allocation7], 9
        %v3321 = vld [vmem:[%s3320] sm:$0x1]
        %v3323 = vlaneseq
        %v3324 = vshrl.u32 %v3323, 7
        %v3325 = vsub.s32 0, %v3324
        %v3326 = vrot.slane %v3321, %v3325
        %v3328 = vmul.f32 %v3319, %v3326
        %s3329 = scalar_lea.vmem [#allocation7], 10
        %v3330 = vld [vmem:[%s3329] sm:$0x1]
        %v3332 = vlaneseq
        %v3333 = vshrl.u32 %v3332, 7
        %v3334 = vsub.s32 0, %v3333
        %v3335 = vrot.slane %v3330, %v3334
        %v3337 = vadd.f32 %v3328, %v3335
        %3338 = vst.msk [vmem:[%s524] sm:$0xff] %vm564, %v3337
        %p3339 = scmp.lt.s32.totalorder %s26, 1
        %s3340 = scalar_select %p3339, %s26, 1
        %s3341 = smul.addr %s3340, 8
        %s3342 = scalar_lea.vmem %s12, %s3341
        // Predicated region
        $region85: #{forward.1} parent=67 // pred_check
          %p3343 = pneg %p316
        $region86: #{forward.1} parent=67 // pred_check_branch
          %3345 = sbr.rel (%p3343) target = $region88
        $region87: #{forward.1} parent=67 // pred_region
          _
        $region88: #{forward.1} parent=67 // pred_fallthru
          _
      $region68: #{forward.1} parent=5 // pred_fallthru
        _
      %p3346 = scmp.le.s32.totalorder 2, %s21
      // Predicated region
      $region89: #{forward.1} parent=5 // pred_check
        %p3347 = pneg %p3346
      $region90: #{forward.1} parent=5 // pred_check_branch
        %3349 = sbr.rel (%p3347) target = $region92
      $region91: #{forward.1} parent=5 // pred_region
        %s3350 = ssub.s32 %s21, 2
        // Predicated region
        $region93: #{forward.1} parent=91 // pred_check
          %p3351 = pneg %p322
        $region94: #{forward.1} parent=91 // pred_check_branch
          %3353 = sbr.rel (%p3351) target = $region96
        $region95: #{forward.1} parent=91 // pred_region
          %p3354 = scmp.lt.s32.totalorder %s27, 1
          %s3355 = scalar_select %p3354, %s27, 1
          %s3356 = smul.addr %s3355, 8
          %s3357 = scalar_lea.vmem %s12, %s3356
        $region96: #{forward.1} parent=91 // pred_fallthru
          _
      $region92: #{forward.1} parent=5 // pred_fallthru
        _
    $region6: #{forward.1} parent=1 // loop_footer
      %s25 = sadd.s32 1, %s21
    $region7: #{forward.1} parent=1 // loop_footer_branch
      %20 = sbr.rel target = $region3
    $region8: #{forward.1} parent=1 // loop_exit
      _
    %3358 = vsyncpa [#allocation3], 1
    %s3359 = scalar_lea.sflag [#allocation3], 1
    %3360 = vsyncpa %s3359, 1
    %3361 = vsyncpa [#allocation5], 1
    %3362 = vsyncpa [#allocation8], 1

</llo_original>
